<compile_context>
chip_gen: v6e
topology: v6e:2x2x1
jax: 0.10.0
libtpu: 0.0.40
codegen_flags: <defaults>
</compile_context>

<pallas_src>
import functools

import jax
import jax.numpy as jnp
from jax.experimental import pallas as pl
from jax.experimental.pallas import tpu as pltpu

INPUT_SIZE = 32 * 32 * 3   # 3072
HIDDEN1 = 512
HIDDEN2 = 256
OUT_PAD = 128              # lane-dense padded output width (>= num_classes)


def _mlp_kernel(x_ref, w1_ref, b1_ref, w2_ref, b2_ref, w3_ref, b3_ref, o_ref):
    # One batch tile of x per grid step; weights/biases are VMEM-resident
    # (constant block index across the grid). Three back-to-back MXU matmuls;
    # bias + ReLU in f32 on the VPU are hidden under MXU cycles.
    x = x_ref[...]                                                     # (TM, 3072) bf16
    h1 = jnp.dot(x, w1_ref[...], preferred_element_type=jnp.float32) + b1_ref[...]
    h1 = jnp.maximum(h1, 0.0).astype(jnp.bfloat16)                     # (TM, 512)
    h2 = jnp.dot(h1, w2_ref[...], preferred_element_type=jnp.float32) + b2_ref[...]
    h2 = jnp.maximum(h2, 0.0).astype(jnp.bfloat16)                     # (TM, 256)
    o_ref[...] = (
        jnp.dot(h2, w3_ref[...], preferred_element_type=jnp.float32) + b3_ref[...]
    )                                                                  # (TM, 128) f32


@functools.partial(jax.jit, static_argnames=("num_classes",))
def mlp_forward(x_nchw, w1, b1, w2, b2, w3, b3, *, num_classes=10):
    n = x_nchw.shape[0]
    # Flatten exactly like torch .view(-1, 3072) (row-major).
    x = x_nchw.reshape(-1, INPUT_SIZE)

    # Batch tile: big tiles amortize per-grid-step overhead and keep the MXU
    # full at large batch; tiny (latency-bound) batches just pad to a sublane
    # multiple of 8.
    if n >= 512:
        tm = 512
    elif n >= 256:
        tm = 256
    else:
        tm = max(8, ((n + 7) // 8) * 8)
    m_pad = ((n + tm - 1) // tm) * tm
    grid = (m_pad // tm,)

    # bf16 streaming for x and weights; f32 biases (accumulation is f32).
    x = jnp.pad(x.astype(jnp.bfloat16), ((0, m_pad - n), (0, 0)))
    w1b = w1.astype(jnp.bfloat16)
    w2b = w2.astype(jnp.bfloat16)
    # Lane-dense last layer: pad fc3 to OUT_PAD (=128) zero columns.
    w3b = jnp.pad(w3, ((0, 0), (0, OUT_PAD - num_classes))).astype(jnp.bfloat16)
    b1_2d = b1.reshape(1, -1).astype(jnp.float32)
    b2_2d = b2.reshape(1, -1).astype(jnp.float32)
    b3_2d = jnp.pad(
        b3.reshape(1, -1).astype(jnp.float32), ((0, 0), (0, OUT_PAD - num_classes))
    )

    def resident(shape):
        # Same block for every grid step -> fetched once, stays in VMEM.
        return pl.BlockSpec(shape, lambda i: (0, 0))

    # Advisory cost estimate: three dense matmuls per row.
    flops = 2 * m_pad * (INPUT_SIZE * HIDDEN1 + HIDDEN1 * HIDDEN2 + HIDDEN2 * OUT_PAD)
    bytes_accessed = (
        x.size * 2
        + w1b.size * 2 + w2b.size * 2 + w3b.size * 2
        + (b1_2d.size + b2_2d.size + b3_2d.size) * 4
        + m_pad * OUT_PAD * 4
    )

    out = pl.pallas_call(
        _mlp_kernel,
        out_shape=jax.ShapeDtypeStruct((m_pad, OUT_PAD), jnp.float32),
        grid=grid,
        in_specs=[
            pl.BlockSpec((tm, INPUT_SIZE), lambda i: (i, 0)),   # x: tiled on batch
            resident(w1b.shape),
            resident(b1_2d.shape),
            resident(w2b.shape),
            resident(b2_2d.shape),
            resident(w3b.shape),
            resident(b3_2d.shape),
        ],
        out_specs=pl.BlockSpec((tm, OUT_PAD), lambda i: (i, 0)),
        compiler_params=pltpu.CompilerParams(
            dimension_semantics=("parallel",),   # shard batch tiles across TCs (v7x)
        ),
        cost_estimate=pl.CostEstimate(
            flops=flops, transcendentals=0, bytes_accessed=bytes_accessed
        ),
    )(x, w1b, b1_2d, w2b, b2_2d, w3b, b3_2d)

    return out[:n, :num_classes]


def init_params(key, input_size=INPUT_SIZE, num_classes=10):
    # Deterministic synthetic init (Kaiming-ish uniform like torch defaults).
    k1, k2, k3, k4, k5, k6 = jax.random.split(key, 6)

    def lin(kw, kb, fan_in, fan_out):
        bound = 1.0 / jnp.sqrt(fan_in)
        w = jax.random.uniform(kw, (fan_in, fan_out), jnp.float32, -bound, bound)
        b = jax.random.uniform(kb, (fan_out,), jnp.float32, -bound, bound)
        return w, b

    w1, b1 = lin(k1, k2, input_size, HIDDEN1)
    w2, b2 = lin(k3, k4, HIDDEN1, HIDDEN2)
    w3, b3 = lin(k5, k6, HIDDEN2, num_classes)
    return w1, b1, w2, b2, w3, b3


if __name__ == "__main__":
    key = jax.random.PRNGKey(0)
    k_params, k_x = jax.random.split(key)

    num_classes = 10
    params = init_params(k_params, input_size=INPUT_SIZE, num_classes=num_classes)

    # Small batch of CIFAR-10-shaped inputs, NCHW.
    x = jax.random.normal(k_x, (2, 3, 32, 32), jnp.float32)

    out = mlp_forward(x, *params, num_classes=num_classes)
    out = jax.block_until_ready(out)

    # Reference with the same bf16-input / f32-accumulate math (pure JAX).
    w1, b1, w2, b2, w3, b3 = params
    xf = x.reshape(-1, INPUT_SIZE).astype(jnp.bfloat16)
    ref = jnp.dot(xf, w1.astype(jnp.bfloat16), preferred_element_type=jnp.float32) + b1
    ref = jnp.maximum(ref, 0.0).astype(jnp.bfloat16)
    ref = jnp.dot(ref, w2.astype(jnp.bfloat16), preferred_element_type=jnp.float32) + b2
    ref = jnp.maximum(ref, 0.0).astype(jnp.bfloat16)
    ref = jnp.dot(ref, w3.astype(jnp.bfloat16), preferred_element_type=jnp.float32) + b3

    assert out.shape == (2, num_classes), out.shape
    assert jnp.allclose(out, ref, atol=1e-2, rtol=1e-2), "mismatch vs reference"

    # Also sanity-check against the full-f32 torch-equivalent math (loose tol
    # to absorb bf16 weight/activation quantization).
    xf32 = x.reshape(-1, INPUT_SIZE)
    ref32 = jnp.maximum(xf32 @ w1 + b1, 0.0)
    ref32 = jnp.maximum(ref32 @ w2 + b2, 0.0)
    ref32 = ref32 @ w3 + b3
    assert jnp.allclose(out, ref32, atol=5e-2, rtol=5e-2), "drift vs f32 reference"

    print("KERNEL_OK")
</pallas_src>

<mosaic_0001>
module attributes {stable_mosaic.version = 11 : i64} {
  func.func @_mlp_kernel(%arg0: i32, %arg1: memref<8x3072xbf16, #tpu.memory_space<vmem>>, %arg2: memref<3072x512xbf16, #tpu.memory_space<vmem>>, %arg3: memref<1x512xf32, #tpu.memory_space<vmem>>, %arg4: memref<512x256xbf16, #tpu.memory_space<vmem>>, %arg5: memref<1x256xf32, #tpu.memory_space<vmem>>, %arg6: memref<256x128xbf16, #tpu.memory_space<vmem>>, %arg7: memref<1x128xf32, #tpu.memory_space<vmem>>, %arg8: memref<8x128xf32, #tpu.memory_space<vmem>>) attributes {dimension_semantics = [#tpu.dimension_semantics<parallel>], iteration_bounds = array<i64: 1>, scalar_prefetch = 0 : i64, scratch_operands = 0 : i64, tpu.core_type = #tpu.core_type<tc>, window_params = [{transform_indices = @transform_0, window_bounds = array<i64: 8, 3072>}, {pipeline_mode = #tpu.pipeline_mode<synchronous>, transform_indices = @transform_1, window_bounds = array<i64: 3072, 512>}, {pipeline_mode = #tpu.pipeline_mode<synchronous>, transform_indices = @transform_2, window_bounds = array<i64: 1, 512>}, {pipeline_mode = #tpu.pipeline_mode<synchronous>, transform_indices = @transform_3, window_bounds = array<i64: 512, 256>}, {pipeline_mode = #tpu.pipeline_mode<synchronous>, transform_indices = @transform_4, window_bounds = array<i64: 1, 256>}, {pipeline_mode = #tpu.pipeline_mode<synchronous>, transform_indices = @transform_5, window_bounds = array<i64: 256, 128>}, {pipeline_mode = #tpu.pipeline_mode<synchronous>, transform_indices = @transform_6, window_bounds = array<i64: 1, 128>}, {transform_indices = @transform_7, window_bounds = array<i64: 8, 128>}]} {
    %c0 = arith.constant 0 : index
    %c0_0 = arith.constant 0 : index
    %0 = vector.load %arg1[%c0, %c0_0] : memref<8x3072xbf16, #tpu.memory_space<vmem>>, vector<8x3072xbf16>
    %c0_1 = arith.constant 0 : index
    %c0_2 = arith.constant 0 : index
    %1 = vector.load %arg2[%c0_1, %c0_2] : memref<3072x512xbf16, #tpu.memory_space<vmem>>, vector<3072x512xbf16>
    %cst = arith.constant dense<0.000000e+00> : vector<8x512xf32>
    %2 = tpu.matmul %0, %1, %cst {dimension_numbers = #tpu.dot_dimension_numbers<[1], [0], [0], [1], [0, 0, 1, 1], [], []>} : vector<8x3072xbf16>, vector<3072x512xbf16>, vector<8x512xf32> -> vector<8x512xf32>
    %c0_3 = arith.constant 0 : index
    %c0_4 = arith.constant 0 : index
    %3 = vector.load %arg3[%c0_3, %c0_4] : memref<1x512xf32, #tpu.memory_space<vmem>>, vector<1x512xf32>
    %4 = vector.broadcast %3 : vector<1x512xf32> to vector<8x512xf32>
    %5 = arith.addf %2, %4 : vector<8x512xf32>
    %cst_5 = arith.constant 0.000000e+00 : f32
    %6 = vector.broadcast %cst_5 : f32 to vector<8x512xf32>
    %7 = arith.maximumf %5, %6 : vector<8x512xf32>
    %8 = arith.truncf %7 : vector<8x512xf32> to vector<8x512xbf16>
    %c0_6 = arith.constant 0 : index
    %c0_7 = arith.constant 0 : index
    %9 = vector.load %arg4[%c0_6, %c0_7] : memref<512x256xbf16, #tpu.memory_space<vmem>>, vector<512x256xbf16>
    %cst_8 = arith.constant dense<0.000000e+00> : vector<8x256xf32>
    %10 = tpu.matmul %8, %9, %cst_8 {dimension_numbers = #tpu.dot_dimension_numbers<[1], [0], [0], [1], [0, 0, 1, 1], [], []>} : vector<8x512xbf16>, vector<512x256xbf16>, vector<8x256xf32> -> vector<8x256xf32>
    %c0_9 = arith.constant 0 : index
    %c0_10 = arith.constant 0 : index
    %11 = vector.load %arg5[%c0_9, %c0_10] : memref<1x256xf32, #tpu.memory_space<vmem>>, vector<1x256xf32>
    %12 = vector.broadcast %11 : vector<1x256xf32> to vector<8x256xf32>
    %13 = arith.addf %10, %12 : vector<8x256xf32>
    %cst_11 = arith.constant 0.000000e+00 : f32
    %14 = vector.broadcast %cst_11 : f32 to vector<8x256xf32>
    %15 = arith.maximumf %13, %14 : vector<8x256xf32>
    %16 = arith.truncf %15 : vector<8x256xf32> to vector<8x256xbf16>
    %c0_12 = arith.constant 0 : index
    %c0_13 = arith.constant 0 : index
    %17 = vector.load %arg6[%c0_12, %c0_13] : memref<256x128xbf16, #tpu.memory_space<vmem>>, vector<256x128xbf16>
    %cst_14 = arith.constant dense<0.000000e+00> : vector<8x128xf32>
    %18 = tpu.matmul %16, %17, %cst_14 {dimension_numbers = #tpu.dot_dimension_numbers<[1], [0], [0], [1], [0, 0, 1, 1], [], []>} : vector<8x256xbf16>, vector<256x128xbf16>, vector<8x128xf32> -> vector<8x128xf32>
    %c0_15 = arith.constant 0 : index
    %c0_16 = arith.constant 0 : index
    %19 = vector.load %arg7[%c0_15, %c0_16] : memref<1x128xf32, #tpu.memory_space<vmem>>, vector<1x128xf32>
    %20 = vector.broadcast %19 : vector<1x128xf32> to vector<8x128xf32>
    %21 = arith.addf %18, %20 : vector<8x128xf32>
    %c0_17 = arith.constant 0 : index
    %c0_18 = arith.constant 0 : index
    %22 = vector.load %arg8[%c0_17, %c0_18] : memref<8x128xf32, #tpu.memory_space<vmem>>, vector<8x128xf32>
    tpu.vector_store %arg8[%c0_17, %c0_18], %21 {strides = array<i32>} : memref<8x128xf32, #tpu.memory_space<vmem>>, vector<8x128xf32>,
    return
  }
  func.func @transform_0(%arg0: i32) -> (i32, i32) {
    %c0_i32 = arith.constant 0 : i32
    %c0_i32_0 = arith.constant 0 : i32
    return %arg0, %c0_i32 : i32, i32
  }
  func.func @transform_1(%arg0: i32) -> (i32, i32) {
    %c0_i32 = arith.constant 0 : i32
    %c0_i32_0 = arith.constant 0 : i32
    %c0_i32_1 = arith.constant 0 : i32
    return %c0_i32, %c0_i32_0 : i32, i32
  }
  func.func @transform_2(%arg0: i32) -> (i32, i32) {
    %c0_i32 = arith.constant 0 : i32
    %c0_i32_0 = arith.constant 0 : i32
    %c0_i32_1 = arith.constant 0 : i32
    return %c0_i32, %c0_i32_0 : i32, i32
  }
  func.func @transform_3(%arg0: i32) -> (i32, i32) {
    %c0_i32 = arith.constant 0 : i32
    %c0_i32_0 = arith.constant 0 : i32
    %c0_i32_1 = arith.constant 0 : i32
    return %c0_i32, %c0_i32_0 : i32, i32
  }
  func.func @transform_4(%arg0: i32) -> (i32, i32) {
    %c0_i32 = arith.constant 0 : i32
    %c0_i32_0 = arith.constant 0 : i32
    %c0_i32_1 = arith.constant 0 : i32
    return %c0_i32, %c0_i32_0 : i32, i32
  }
  func.func @transform_5(%arg0: i32) -> (i32, i32) {
    %c0_i32 = arith.constant 0 : i32
    %c0_i32_0 = arith.constant 0 : i32
    %c0_i32_1 = arith.constant 0 : i32
    return %c0_i32, %c0_i32_0 : i32, i32
  }
  func.func @transform_6(%arg0: i32) -> (i32, i32) {
    %c0_i32 = arith.constant 0 : i32
    %c0_i32_0 = arith.constant 0 : i32
    %c0_i32_1 = arith.constant 0 : i32
    return %c0_i32, %c0_i32_0 : i32, i32
  }
  func.func @transform_7(%arg0: i32) -> (i32, i32) {
    %c0_i32 = arith.constant 0 : i32
    %c0_i32_0 = arith.constant 0 : i32
    return %arg0, %c0_i32 : i32, i32
  }
}

</mosaic_0001>

<llo_original>
// kernel: mlp_forward.1
$region0: #{mlp_forward.1}
  #allocation0 [shape = 'u32[]', space=smem, size = 0x4, offset = 0x4, fixed_abs, tag = 'smem constant byte address 0x4 - core index']
  #allocation1 [shape = 'u32[144,128]{1,0:T(1,128)}', space=vmem, size = 0x12000, scoped, tag = 'internal scratch']
  %s0 = inlined_call_operand.vmem [shape: bf16[8,3072], index: 0, kind: input, shape index: {}]
  %s1 = inlined_call_operand.vmem [shape: bf16[3072,512], index: 1, kind: input, shape index: {}]
  %s2 = inlined_call_operand.vmem [shape: f32[1,512], index: 2, kind: input, shape index: {}]
  %s3 = inlined_call_operand.vmem [shape: bf16[512,256], index: 3, kind: input, shape index: {}]
  %s4 = inlined_call_operand.vmem [shape: f32[1,256], index: 4, kind: input, shape index: {}]
  %s5 = inlined_call_operand.vmem [shape: bf16[256,128], index: 5, kind: input, shape index: {}]
  %s6 = inlined_call_operand.vmem [shape: f32[1,128], index: 6, kind: input, shape index: {}]
  %s7 = inlined_call_operand.vmem [shape: f32[8,128], index: 7, kind: output, shape index: {}]
  %s8 = sld [smem:[#allocation0]]
  $region38: #{mlp_forward.1} parent=0
    _
  %s10 = ssub.s32 1, %s8
  %s11 = scalar_select 0, %s10, %s8
  // Predicated region
  $region2: #{mlp_forward.1} parent=0 // pred_check
    _
  $region3: #{mlp_forward.1} parent=0 // pred_check_branch
    %13 = sbr.rel (0) target = $region5
  $region4: #{mlp_forward.1} parent=0 // pred_region
    _
  $region5: #{mlp_forward.1} parent=0 // pred_fallthru
    _
  // Predicated region
  $region6: #{mlp_forward.1} parent=0 // pred_check
    _
  $region7: #{mlp_forward.1} parent=0 // pred_check_branch
    %15 = sbr.rel (0) target = $region9
  $region8: #{mlp_forward.1} parent=0 // pred_region
    _
  $region9: #{mlp_forward.1} parent=0 // pred_fallthru
    _
  // Predicated region
  $region10: #{mlp_forward.1} parent=0 // pred_check
    _
  $region11: #{mlp_forward.1} parent=0 // pred_check_branch
    %17 = sbr.rel (0) target = $region13
  $region12: #{mlp_forward.1} parent=0 // pred_region
    _
  $region13: #{mlp_forward.1} parent=0 // pred_fallthru
    _
  // Predicated region
  $region14: #{mlp_forward.1} parent=0 // pred_check
    _
  $region15: #{mlp_forward.1} parent=0 // pred_check_branch
    %19 = sbr.rel (0) target = $region17
  $region16: #{mlp_forward.1} parent=0 // pred_region
    _
  $region17: #{mlp_forward.1} parent=0 // pred_fallthru
    _
  // Predicated region
  $region18: #{mlp_forward.1} parent=0 // pred_check
    _
  $region19: #{mlp_forward.1} parent=0 // pred_check_branch
    %21 = sbr.rel (0) target = $region21
  $region20: #{mlp_forward.1} parent=0 // pred_region
    _
  $region21: #{mlp_forward.1} parent=0 // pred_fallthru
    _
  // Predicated region
  $region22: #{mlp_forward.1} parent=0 // pred_check
    _
  $region23: #{mlp_forward.1} parent=0 // pred_check_branch
    %23 = sbr.rel (0) target = $region25
  $region24: #{mlp_forward.1} parent=0 // pred_region
    _
  $region25: #{mlp_forward.1} parent=0 // pred_fallthru
    _
  // Predicated region
  $region26: #{mlp_forward.1} parent=0 // pred_check
    _
  $region27: #{mlp_forward.1} parent=0 // pred_check_branch
    %25 = sbr.rel (0) target = $region29
  $region28: #{mlp_forward.1} parent=0 // pred_region
    _
  $region29: #{mlp_forward.1} parent=0 // pred_fallthru
    _
  %v27 = vld [vmem:[%s0] sm:$0xff]
  %v28 = vld [vmem:[%s0 + $0x8] sm:$0xff]
  %v29 = vld [vmem:[%s0 + $0x10] sm:$0xff]
  %v30 = vld [vmem:[%s0 + $0x18] sm:$0xff]
  %v31 = vld [vmem:[%s0 + $0x20] sm:$0xff]
  %v32 = vld [vmem:[%s0 + $0x28] sm:$0xff]
  %v33 = vld [vmem:[%s0 + $0x30] sm:$0xff]
  %v34 = vld [vmem:[%s0 + $0x38] sm:$0xff]
  %v35 = vld [vmem:[%s0 + $0x40] sm:$0xff]
  %v36 = vld [vmem:[%s0 + $0x48] sm:$0xff]
  %v37 = vld [vmem:[%s0 + $0x50] sm:$0xff]
  %v38 = vld [vmem:[%s0 + $0x58] sm:$0xff]
  %v39 = vld [vmem:[%s1] sm:$0xff]
  %v40 = vld [vmem:[%s1 + $0x8] sm:$0xff]
  %v41 = vld [vmem:[%s1 + $0x10] sm:$0xff]
  %v42 = vld [vmem:[%s1 + $0x18] sm:$0xff]
  %v43 = vld [vmem:[%s1 + $0x20] sm:$0xff]
  %v44 = vld [vmem:[%s1 + $0x28] sm:$0xff]
  %v45 = vld [vmem:[%s1 + $0x30] sm:$0xff]
  %v46 = vld [vmem:[%s1 + $0x38] sm:$0xff]
  %v47 = vld [vmem:[%s1 + $0x40] sm:$0xff]
  %v48 = vld [vmem:[%s1 + $0x48] sm:$0xff]
  %v49 = vld [vmem:[%s1 + $0x50] sm:$0xff]
  %v50 = vld [vmem:[%s1 + $0x58] sm:$0xff]
  %v51 = vld [vmem:[%s1 + $0x60] sm:$0xff]
  %v52 = vld [vmem:[%s1 + $0x68] sm:$0xff]
  %v53 = vld [vmem:[%s1 + $0x70] sm:$0xff]
  %v54 = vld [vmem:[%s1 + $0x78] sm:$0xff]
  %v55 = vld [vmem:[%s1 + $0x80] sm:$0xff]
  %v56 = vld [vmem:[%s1 + $0x88] sm:$0xff]
  %v57 = vld [vmem:[%s1 + $0x90] sm:$0xff]
  %v58 = vld [vmem:[%s1 + $0x98] sm:$0xff]
  %v59 = vld [vmem:[%s1 + $0xa0] sm:$0xff]
  %v60 = vld [vmem:[%s1 + $0xa8] sm:$0xff]
  %v61 = vld [vmem:[%s1 + $0xb0] sm:$0xff]
  %v62 = vld [vmem:[%s1 + $0xb8] sm:$0xff]
  %v63 = vld [vmem:[%s1 + $0xc0] sm:$0xff]
  %v64 = vld [vmem:[%s1 + $0xc8] sm:$0xff]
  %v65 = vld [vmem:[%s1 + $0xd0] sm:$0xff]
  %v66 = vld [vmem:[%s1 + $0xd8] sm:$0xff]
  %v67 = vld [vmem:[%s1 + $0xe0] sm:$0xff]
  %v68 = vld [vmem:[%s1 + $0xe8] sm:$0xff]
  %v69 = vld [vmem:[%s1 + $0xf0] sm:$0xff]
  %v70 = vld [vmem:[%s1 + $0xf8] sm:$0xff]
  %v71 = vld [vmem:[%s1 + $0x100] sm:$0xff]
  %v72 = vld [vmem:[%s1 + $0x108] sm:$0xff]
  %v73 = vld [vmem:[%s1 + $0x110] sm:$0xff]
  %v74 = vld [vmem:[%s1 + $0x118] sm:$0xff]
  %v75 = vld [vmem:[%s1 + $0x120] sm:$0xff]
  %v76 = vld [vmem:[%s1 + $0x128] sm:$0xff]
  %v77 = vld [vmem:[%s1 + $0x130] sm:$0xff]
  %v78 = vld [vmem:[%s1 + $0x138] sm:$0xff]
  %v79 = vld [vmem:[%s1 + $0x140] sm:$0xff]
  %v80 = vld [vmem:[%s1 + $0x148] sm:$0xff]
  %v81 = vld [vmem:[%s1 + $0x150] sm:$0xff]
  %v82 = vld [vmem:[%s1 + $0x158] sm:$0xff]
  %v83 = vld [vmem:[%s1 + $0x160] sm:$0xff]
  %v84 = vld [vmem:[%s1 + $0x168] sm:$0xff]
  %v85 = vld [vmem:[%s1 + $0x170] sm:$0xff]
  %v86 = vld [vmem:[%s1 + $0x178] sm:$0xff]
  %v87 = vld [vmem:[%s1 + $0x180] sm:$0xff]
  %v88 = vld [vmem:[%s1 + $0x188] sm:$0xff]
  %v89 = vld [vmem:[%s1 + $0x190] sm:$0xff]
  %v90 = vld [vmem:[%s1 + $0x198] sm:$0xff]
  %v91 = vld [vmem:[%s1 + $0x1a0] sm:$0xff]
  %v92 = vld [vmem:[%s1 + $0x1a8] sm:$0xff]
  %v93 = vld [vmem:[%s1 + $0x1b0] sm:$0xff]
  %v94 = vld [vmem:[%s1 + $0x1b8] sm:$0xff]
  %v95 = vld [vmem:[%s1 + $0x1c0] sm:$0xff]
  %v96 = vld [vmem:[%s1 + $0x1c8] sm:$0xff]
  %v97 = vld [vmem:[%s1 + $0x1d0] sm:$0xff]
  %v98 = vld [vmem:[%s1 + $0x1d8] sm:$0xff]
  %v99 = vld [vmem:[%s1 + $0x1e0] sm:$0xff]
  %v100 = vld [vmem:[%s1 + $0x1e8] sm:$0xff]
  %v101 = vld [vmem:[%s1 + $0x1f0] sm:$0xff]
  %v102 = vld [vmem:[%s1 + $0x1f8] sm:$0xff]
  %v103 = vld [vmem:[%s1 + $0x200] sm:$0xff]
  %v104 = vld [vmem:[%s1 + $0x208] sm:$0xff]
  %v105 = vld [vmem:[%s1 + $0x210] sm:$0xff]
  %v106 = vld [vmem:[%s1 + $0x218] sm:$0xff]
  %v107 = vld [vmem:[%s1 + $0x220] sm:$0xff]
  %v108 = vld [vmem:[%s1 + $0x228] sm:$0xff]
  %v109 = vld [vmem:[%s1 + $0x230] sm:$0xff]
  %v110 = vld [vmem:[%s1 + $0x238] sm:$0xff]
  %v111 = vld [vmem:[%s1 + $0x240] sm:$0xff]
  %v112 = vld [vmem:[%s1 + $0x248] sm:$0xff]
  %v113 = vld [vmem:[%s1 + $0x250] sm:$0xff]
  %v114 = vld [vmem:[%s1 + $0x258] sm:$0xff]
  %v115 = vld [vmem:[%s1 + $0x260] sm:$0xff]
  %v116 = vld [vmem:[%s1 + $0x268] sm:$0xff]
  %v117 = vld [vmem:[%s1 + $0x270] sm:$0xff]
  %v118 = vld [vmem:[%s1 + $0x278] sm:$0xff]
  %v119 = vld [vmem:[%s1 + $0x280] sm:$0xff]
  %v120 = vld [vmem:[%s1 + $0x288] sm:$0xff]
  %v121 = vld [vmem:[%s1 + $0x290] sm:$0xff]
  %v122 = vld [vmem:[%s1 + $0x298] sm:$0xff]
  %v123 = vld [vmem:[%s1 + $0x2a0] sm:$0xff]
  %v124 = vld [vmem:[%s1 + $0x2a8] sm:$0xff]
  %v125 = vld [vmem:[%s1 + $0x2b0] sm:$0xff]
  %v126 = vld [vmem:[%s1 + $0x2b8] sm:$0xff]
  %v127 = vld [vmem:[%s1 + $0x2c0] sm:$0xff]
  %v128 = vld [vmem:[%s1 + $0x2c8] sm:$0xff]
  %v129 = vld [vmem:[%s1 + $0x2d0] sm:$0xff]
  %v130 = vld [vmem:[%s1 + $0x2d8] sm:$0xff]
  %v131 = vld [vmem:[%s1 + $0x2e0] sm:$0xff]
  %v132 = vld [vmem:[%s1 + $0x2e8] sm:$0xff]
  %v133 = vld [vmem:[%s1 + $0x2f0] sm:$0xff]
  %v134 = vld [vmem:[%s1 + $0x2f8] sm:$0xff]
  %v135 = vld [vmem:[%s1 + $0x300] sm:$0xff]
  %v136 = vld [vmem:[%s1 + $0x308] sm:$0xff]
  %v137 = vld [vmem:[%s1 + $0x310] sm:$0xff]
  %v138 = vld [vmem:[%s1 + $0x318] sm:$0xff]
  %v139 = vld [vmem:[%s1 + $0x320] sm:$0xff]
  %v140 = vld [vmem:[%s1 + $0x328] sm:$0xff]
  %v141 = vld [vmem:[%s1 + $0x330] sm:$0xff]
  %v142 = vld [vmem:[%s1 + $0x338] sm:$0xff]
  %v143 = vld [vmem:[%s1 + $0x340] sm:$0xff]
  %v144 = vld [vmem:[%s1 + $0x348] sm:$0xff]
  %v145 = vld [vmem:[%s1 + $0x350] sm:$0xff]
  %v146 = vld [vmem:[%s1 + $0x358] sm:$0xff]
  %v147 = vld [vmem:[%s1 + $0x360] sm:$0xff]
  %v148 = vld [vmem:[%s1 + $0x368] sm:$0xff]
  %v149 = vld [vmem:[%s1 + $0x370] sm:$0xff]
  %v150 = vld [vmem:[%s1 + $0x378] sm:$0xff]
  %v151 = vld [vmem:[%s1 + $0x380] sm:$0xff]
  %v152 = vld [vmem:[%s1 + $0x388] sm:$0xff]
  %v153 = vld [vmem:[%s1 + $0x390] sm:$0xff]
  %v154 = vld [vmem:[%s1 + $0x398] sm:$0xff]
  %v155 = vld [vmem:[%s1 + $0x3a0] sm:$0xff]
  %v156 = vld [vmem:[%s1 + $0x3a8] sm:$0xff]
  %v157 = vld [vmem:[%s1 + $0x3b0] sm:$0xff]
  %v158 = vld [vmem:[%s1 + $0x3b8] sm:$0xff]
  %v159 = vld [vmem:[%s1 + $0x3c0] sm:$0xff]
  %v160 = vld [vmem:[%s1 + $0x3c8] sm:$0xff]
  %v161 = vld [vmem:[%s1 + $0x3d0] sm:$0xff]
  %v162 = vld [vmem:[%s1 + $0x3d8] sm:$0xff]
  %v163 = vld [vmem:[%s1 + $0x3e0] sm:$0xff]
  %v164 = vld [vmem:[%s1 + $0x3e8] sm:$0xff]
  %v165 = vld [vmem:[%s1 + $0x3f0] sm:$0xff]
  %v166 = vld [vmem:[%s1 + $0x3f8] sm:$0xff]
  %v167 = vld [vmem:[%s1 + $0x400] sm:$0xff]
  %v168 = vld [vmem:[%s1 + $0x408] sm:$0xff]
  %v169 = vld [vmem:[%s1 + $0x410] sm:$0xff]
  %v170 = vld [vmem:[%s1 + $0x418] sm:$0xff]
  %v171 = vld [vmem:[%s1 + $0x420] sm:$0xff]
  %v172 = vld [vmem:[%s1 + $0x428] sm:$0xff]
  %v173 = vld [vmem:[%s1 + $0x430] sm:$0xff]
  %v174 = vld [vmem:[%s1 + $0x438] sm:$0xff]
  %v175 = vld [vmem:[%s1 + $0x440] sm:$0xff]
  %v176 = vld [vmem:[%s1 + $0x448] sm:$0xff]
  %v177 = vld [vmem:[%s1 + $0x450] sm:$0xff]
  %v178 = vld [vmem:[%s1 + $0x458] sm:$0xff]
  %v179 = vld [vmem:[%s1 + $0x460] sm:$0xff]
  %v180 = vld [vmem:[%s1 + $0x468] sm:$0xff]
  %v181 = vld [vmem:[%s1 + $0x470] sm:$0xff]
  %v182 = vld [vmem:[%s1 + $0x478] sm:$0xff]
  %v183 = vld [vmem:[%s1 + $0x480] sm:$0xff]
  %v184 = vld [vmem:[%s1 + $0x488] sm:$0xff]
  %v185 = vld [vmem:[%s1 + $0x490] sm:$0xff]
  %v186 = vld [vmem:[%s1 + $0x498] sm:$0xff]
  %v187 = vld [vmem:[%s1 + $0x4a0] sm:$0xff]
  %v188 = vld [vmem:[%s1 + $0x4a8] sm:$0xff]
  %v189 = vld [vmem:[%s1 + $0x4b0] sm:$0xff]
  %v190 = vld [vmem:[%s1 + $0x4b8] sm:$0xff]
  %v191 = vld [vmem:[%s1 + $0x4c0] sm:$0xff]
  %v192 = vld [vmem:[%s1 + $0x4c8] sm:$0xff]
  %v193 = vld [vmem:[%s1 + $0x4d0] sm:$0xff]
  %v194 = vld [vmem:[%s1 + $0x4d8] sm:$0xff]
  %v195 = vld [vmem:[%s1 + $0x4e0] sm:$0xff]
  %v196 = vld [vmem:[%s1 + $0x4e8] sm:$0xff]
  %v197 = vld [vmem:[%s1 + $0x4f0] sm:$0xff]
  %v198 = vld [vmem:[%s1 + $0x4f8] sm:$0xff]
  %v199 = vld [vmem:[%s1 + $0x500] sm:$0xff]
  %v200 = vld [vmem:[%s1 + $0x508] sm:$0xff]
  %v201 = vld [vmem:[%s1 + $0x510] sm:$0xff]
  %v202 = vld [vmem:[%s1 + $0x518] sm:$0xff]
  %v203 = vld [vmem:[%s1 + $0x520] sm:$0xff]
  %v204 = vld [vmem:[%s1 + $0x528] sm:$0xff]
  %v205 = vld [vmem:[%s1 + $0x530] sm:$0xff]
  %v206 = vld [vmem:[%s1 + $0x538] sm:$0xff]
  %v207 = vld [vmem:[%s1 + $0x540] sm:$0xff]
  %v208 = vld [vmem:[%s1 + $0x548] sm:$0xff]
  %v209 = vld [vmem:[%s1 + $0x550] sm:$0xff]
  %v210 = vld [vmem:[%s1 + $0x558] sm:$0xff]
  %v211 = vld [vmem:[%s1 + $0x560] sm:$0xff]
  %v212 = vld [vmem:[%s1 + $0x568] sm:$0xff]
  %v213 = vld [vmem:[%s1 + $0x570] sm:$0xff]
  %v214 = vld [vmem:[%s1 + $0x578] sm:$0xff]
  %v215 = vld [vmem:[%s1 + $0x580] sm:$0xff]
  %v216 = vld [vmem:[%s1 + $0x588] sm:$0xff]
  %v217 = vld [vmem:[%s1 + $0x590] sm:$0xff]
  %v218 = vld [vmem:[%s1 + $0x598] sm:$0xff]
  %v219 = vld [vmem:[%s1 + $0x5a0] sm:$0xff]
  %v220 = vld [vmem:[%s1 + $0x5a8] sm:$0xff]
  %v221 = vld [vmem:[%s1 + $0x5b0] sm:$0xff]
  %v222 = vld [vmem:[%s1 + $0x5b8] sm:$0xff]
  %v223 = vld [vmem:[%s1 + $0x5c0] sm:$0xff]
  %v224 = vld [vmem:[%s1 + $0x5c8] sm:$0xff]
  %v225 = vld [vmem:[%s1 + $0x5d0] sm:$0xff]
  %v226 = vld [vmem:[%s1 + $0x5d8] sm:$0xff]
  %v227 = vld [vmem:[%s1 + $0x5e0] sm:$0xff]
  %v228 = vld [vmem:[%s1 + $0x5e8] sm:$0xff]
  %v229 = vld [vmem:[%s1 + $0x5f0] sm:$0xff]
  %v230 = vld [vmem:[%s1 + $0x5f8] sm:$0xff]
  %v231 = vld [vmem:[%s1 + $0x600] sm:$0xff]
  %v232 = vld [vmem:[%s1 + $0x608] sm:$0xff]
  %v233 = vld [vmem:[%s1 + $0x610] sm:$0xff]
  %v234 = vld [vmem:[%s1 + $0x618] sm:$0xff]
  %v235 = vld [vmem:[%s1 + $0x620] sm:$0xff]
  %v236 = vld [vmem:[%s1 + $0x628] sm:$0xff]
  %v237 = vld [vmem:[%s1 + $0x630] sm:$0xff]
  %v238 = vld [vmem:[%s1 + $0x638] sm:$0xff]
  %v239 = vld [vmem:[%s1 + $0x640] sm:$0xff]
  %v240 = vld [vmem:[%s1 + $0x648] sm:$0xff]
  %v241 = vld [vmem:[%s1 + $0x650] sm:$0xff]
  %v242 = vld [vmem:[%s1 + $0x658] sm:$0xff]
  %v243 = vld [vmem:[%s1 + $0x660] sm:$0xff]
  %v244 = vld [vmem:[%s1 + $0x668] sm:$0xff]
  %v245 = vld [vmem:[%s1 + $0x670] sm:$0xff]
  %v246 = vld [vmem:[%s1 + $0x678] sm:$0xff]
  %v247 = vld [vmem:[%s1 + $0x680] sm:$0xff]
  %v248 = vld [vmem:[%s1 + $0x688] sm:$0xff]
  %v249 = vld [vmem:[%s1 + $0x690] sm:$0xff]
  %v250 = vld [vmem:[%s1 + $0x698] sm:$0xff]
  %v251 = vld [vmem:[%s1 + $0x6a0] sm:$0xff]
  %v252 = vld [vmem:[%s1 + $0x6a8] sm:$0xff]
  %v253 = vld [vmem:[%s1 + $0x6b0] sm:$0xff]
  %v254 = vld [vmem:[%s1 + $0x6b8] sm:$0xff]
  %v255 = vld [vmem:[%s1 + $0x6c0] sm:$0xff]
  %v256 = vld [vmem:[%s1 + $0x6c8] sm:$0xff]
  %v257 = vld [vmem:[%s1 + $0x6d0] sm:$0xff]
  %v258 = vld [vmem:[%s1 + $0x6d8] sm:$0xff]
  %v259 = vld [vmem:[%s1 + $0x6e0] sm:$0xff]
  %v260 = vld [vmem:[%s1 + $0x6e8] sm:$0xff]
  %v261 = vld [vmem:[%s1 + $0x6f0] sm:$0xff]
  %v262 = vld [vmem:[%s1 + $0x6f8] sm:$0xff]
  %v263 = vld [vmem:[%s1 + $0x700] sm:$0xff]
  %v264 = vld [vmem:[%s1 + $0x708] sm:$0xff]
  %v265 = vld [vmem:[%s1 + $0x710] sm:$0xff]
  %v266 = vld [vmem:[%s1 + $0x718] sm:$0xff]
  %v267 = vld [vmem:[%s1 + $0x720] sm:$0xff]
  %v268 = vld [vmem:[%s1 + $0x728] sm:$0xff]
  %v269 = vld [vmem:[%s1 + $0x730] sm:$0xff]
  %v270 = vld [vmem:[%s1 + $0x738] sm:$0xff]
  %v271 = vld [vmem:[%s1 + $0x740] sm:$0xff]
  %v272 = vld [vmem:[%s1 + $0x748] sm:$0xff]
  %v273 = vld [vmem:[%s1 + $0x750] sm:$0xff]
  %v274 = vld [vmem:[%s1 + $0x758] sm:$0xff]
  %v275 = vld [vmem:[%s1 + $0x760] sm:$0xff]
  %v276 = vld [vmem:[%s1 + $0x768] sm:$0xff]
  %v277 = vld [vmem:[%s1 + $0x770] sm:$0xff]
  %v278 = vld [vmem:[%s1 + $0x778] sm:$0xff]
  %v279 = vld [vmem:[%s1 + $0x780] sm:$0xff]
  %v280 = vld [vmem:[%s1 + $0x788] sm:$0xff]
  %v281 = vld [vmem:[%s1 + $0x790] sm:$0xff]
  %v282 = vld [vmem:[%s1 + $0x798] sm:$0xff]
  %v283 = vld [vmem:[%s1 + $0x7a0] sm:$0xff]
  %v284 = vld [vmem:[%s1 + $0x7a8] sm:$0xff]
  %v285 = vld [vmem:[%s1 + $0x7b0] sm:$0xff]
  %v286 = vld [vmem:[%s1 + $0x7b8] sm:$0xff]
  %v287 = vld [vmem:[%s1 + $0x7c0] sm:$0xff]
  %v288 = vld [vmem:[%s1 + $0x7c8] sm:$0xff]
  %v289 = vld [vmem:[%s1 + $0x7d0] sm:$0xff]
  %v290 = vld [vmem:[%s1 + $0x7d8] sm:$0xff]
  %v291 = vld [vmem:[%s1 + $0x7e0] sm:$0xff]
  %v292 = vld [vmem:[%s1 + $0x7e8] sm:$0xff]
  %v293 = vld [vmem:[%s1 + $0x7f0] sm:$0xff]
  %v294 = vld [vmem:[%s1 + $0x7f8] sm:$0xff]
  %v295 = vld [vmem:[%s1 + $0x800] sm:$0xff]
  %v296 = vld [vmem:[%s1 + $0x808] sm:$0xff]
  %v297 = vld [vmem:[%s1 + $0x810] sm:$0xff]
  %v298 = vld [vmem:[%s1 + $0x818] sm:$0xff]
  %v299 = vld [vmem:[%s1 + $0x820] sm:$0xff]
  %v300 = vld [vmem:[%s1 + $0x828] sm:$0xff]
  %v301 = vld [vmem:[%s1 + $0x830] sm:$0xff]
  %v302 = vld [vmem:[%s1 + $0x838] sm:$0xff]
  %v303 = vld [vmem:[%s1 + $0x840] sm:$0xff]
  %v304 = vld [vmem:[%s1 + $0x848] sm:$0xff]
  %v305 = vld [vmem:[%s1 + $0x850] sm:$0xff]
  %v306 = vld [vmem:[%s1 + $0x858] sm:$0xff]
  %v307 = vld [vmem:[%s1 + $0x860] sm:$0xff]
  %v308 = vld [vmem:[%s1 + $0x868] sm:$0xff]
  %v309 = vld [vmem:[%s1 + $0x870] sm:$0xff]
  %v310 = vld [vmem:[%s1 + $0x878] sm:$0xff]
  %v311 = vld [vmem:[%s1 + $0x880] sm:$0xff]
  %v312 = vld [vmem:[%s1 + $0x888] sm:$0xff]
  %v313 = vld [vmem:[%s1 + $0x890] sm:$0xff]
  %v314 = vld [vmem:[%s1 + $0x898] sm:$0xff]
  %v315 = vld [vmem:[%s1 + $0x8a0] sm:$0xff]
  %v316 = vld [vmem:[%s1 + $0x8a8] sm:$0xff]
  %v317 = vld [vmem:[%s1 + $0x8b0] sm:$0xff]
  %v318 = vld [vmem:[%s1 + $0x8b8] sm:$0xff]
  %v319 = vld [vmem:[%s1 + $0x8c0] sm:$0xff]
  %v320 = vld [vmem:[%s1 + $0x8c8] sm:$0xff]
  %v321 = vld [vmem:[%s1 + $0x8d0] sm:$0xff]
  %v322 = vld [vmem:[%s1 + $0x8d8] sm:$0xff]
  %v323 = vld [vmem:[%s1 + $0x8e0] sm:$0xff]
  %v324 = vld [vmem:[%s1 + $0x8e8] sm:$0xff]
  %v325 = vld [vmem:[%s1 + $0x8f0] sm:$0xff]
  %v326 = vld [vmem:[%s1 + $0x8f8] sm:$0xff]
  %v327 = vld [vmem:[%s1 + $0x900] sm:$0xff]
  %v328 = vld [vmem:[%s1 + $0x908] sm:$0xff]
  %v329 = vld [vmem:[%s1 + $0x910] sm:$0xff]
  %v330 = vld [vmem:[%s1 + $0x918] sm:$0xff]
  %v331 = vld [vmem:[%s1 + $0x920] sm:$0xff]
  %v332 = vld [vmem:[%s1 + $0x928] sm:$0xff]
  %v333 = vld [vmem:[%s1 + $0x930] sm:$0xff]
  %v334 = vld [vmem:[%s1 + $0x938] sm:$0xff]
  %v335 = vld [vmem:[%s1 + $0x940] sm:$0xff]
  %v336 = vld [vmem:[%s1 + $0x948] sm:$0xff]
  %v337 = vld [vmem:[%s1 + $0x950] sm:$0xff]
  %v338 = vld [vmem:[%s1 + $0x958] sm:$0xff]
  %v339 = vld [vmem:[%s1 + $0x960] sm:$0xff]
  %v340 = vld [vmem:[%s1 + $0x968] sm:$0xff]
  %v341 = vld [vmem:[%s1 + $0x970] sm:$0xff]
  %v342 = vld [vmem:[%s1 + $0x978] sm:$0xff]
  %v343 = vld [vmem:[%s1 + $0x980] sm:$0xff]
  %v344 = vld [vmem:[%s1 + $0x988] sm:$0xff]
  %v345 = vld [vmem:[%s1 + $0x990] sm:$0xff]
  %v346 = vld [vmem:[%s1 + $0x998] sm:$0xff]
  %v347 = vld [vmem:[%s1 + $0x9a0] sm:$0xff]
  %v348 = vld [vmem:[%s1 + $0x9a8] sm:$0xff]
  %v349 = vld [vmem:[%s1 + $0x9b0] sm:$0xff]
  %v350 = vld [vmem:[%s1 + $0x9b8] sm:$0xff]
  %v351 = vld [vmem:[%s1 + $0x9c0] sm:$0xff]
  %v352 = vld [vmem:[%s1 + $0x9c8] sm:$0xff]
  %v353 = vld [vmem:[%s1 + $0x9d0] sm:$0xff]
  %v354 = vld [vmem:[%s1 + $0x9d8] sm:$0xff]
  %v355 = vld [vmem:[%s1 + $0x9e0] sm:$0xff]
  %v356 = vld [vmem:[%s1 + $0x9e8] sm:$0xff]
  %v357 = vld [vmem:[%s1 + $0x9f0] sm:$0xff]
  %v358 = vld [vmem:[%s1 + $0x9f8] sm:$0xff]
  %v359 = vld [vmem:[%s1 + $0xa00] sm:$0xff]
  %v360 = vld [vmem:[%s1 + $0xa08] sm:$0xff]
  %v361 = vld [vmem:[%s1 + $0xa10] sm:$0xff]
  %v362 = vld [vmem:[%s1 + $0xa18] sm:$0xff]
  %v363 = vld [vmem:[%s1 + $0xa20] sm:$0xff]
  %v364 = vld [vmem:[%s1 + $0xa28] sm:$0xff]
  %v365 = vld [vmem:[%s1 + $0xa30] sm:$0xff]
  %v366 = vld [vmem:[%s1 + $0xa38] sm:$0xff]
  %v367 = vld [vmem:[%s1 + $0xa40] sm:$0xff]
  %v368 = vld [vmem:[%s1 + $0xa48] sm:$0xff]
  %v369 = vld [vmem:[%s1 + $0xa50] sm:$0xff]
  %v370 = vld [vmem:[%s1 + $0xa58] sm:$0xff]
  %v371 = vld [vmem:[%s1 + $0xa60] sm:$0xff]
  %v372 = vld [vmem:[%s1 + $0xa68] sm:$0xff]
  %v373 = vld [vmem:[%s1 + $0xa70] sm:$0xff]
  %v374 = vld [vmem:[%s1 + $0xa78] sm:$0xff]
  %v375 = vld [vmem:[%s1 + $0xa80] sm:$0xff]
  %v376 = vld [vmem:[%s1 + $0xa88] sm:$0xff]
  %v377 = vld [vmem:[%s1 + $0xa90] sm:$0xff]
  %v378 = vld [vmem:[%s1 + $0xa98] sm:$0xff]
  %v379 = vld [vmem:[%s1 + $0xaa0] sm:$0xff]
  %v380 = vld [vmem:[%s1 + $0xaa8] sm:$0xff]
  %v381 = vld [vmem:[%s1 + $0xab0] sm:$0xff]
  %v382 = vld [vmem:[%s1 + $0xab8] sm:$0xff]
  %v383 = vld [vmem:[%s1 + $0xac0] sm:$0xff]
  %v384 = vld [vmem:[%s1 + $0xac8] sm:$0xff]
  %v385 = vld [vmem:[%s1 + $0xad0] sm:$0xff]
  %v386 = vld [vmem:[%s1 + $0xad8] sm:$0xff]
  %v387 = vld [vmem:[%s1 + $0xae0] sm:$0xff]
  %v388 = vld [vmem:[%s1 + $0xae8] sm:$0xff]
  %v389 = vld [vmem:[%s1 + $0xaf0] sm:$0xff]
  %v390 = vld [vmem:[%s1 + $0xaf8] sm:$0xff]
  %v391 = vld [vmem:[%s1 + $0xb00] sm:$0xff]
  %v392 = vld [vmem:[%s1 + $0xb08] sm:$0xff]
  %v393 = vld [vmem:[%s1 + $0xb10] sm:$0xff]
  %v394 = vld [vmem:[%s1 + $0xb18] sm:$0xff]
  %v395 = vld [vmem:[%s1 + $0xb20] sm:$0xff]
  %v396 = vld [vmem:[%s1 + $0xb28] sm:$0xff]
  %v397 = vld [vmem:[%s1 + $0xb30] sm:$0xff]
  %v398 = vld [vmem:[%s1 + $0xb38] sm:$0xff]
  %v399 = vld [vmem:[%s1 + $0xb40] sm:$0xff]
  %v400 = vld [vmem:[%s1 + $0xb48] sm:$0xff]
  %v401 = vld [vmem:[%s1 + $0xb50] sm:$0xff]
  %v402 = vld [vmem:[%s1 + $0xb58] sm:$0xff]
  %v403 = vld [vmem:[%s1 + $0xb60] sm:$0xff]
  %v404 = vld [vmem:[%s1 + $0xb68] sm:$0xff]
  %v405 = vld [vmem:[%s1 + $0xb70] sm:$0xff]
  %v406 = vld [vmem:[%s1 + $0xb78] sm:$0xff]
  %v407 = vld [vmem:[%s1 + $0xb80] sm:$0xff]
  %v408 = vld [vmem:[%s1 + $0xb88] sm:$0xff]
  %v409 = vld [vmem:[%s1 + $0xb90] sm:$0xff]
  %v410 = vld [vmem:[%s1 + $0xb98] sm:$0xff]
  %v411 = vld [vmem:[%s1 + $0xba0] sm:$0xff]
  %v412 = vld [vmem:[%s1 + $0xba8] sm:$0xff]
  %v413 = vld [vmem:[%s1 + $0xbb0] sm:$0xff]
  %v414 = vld [vmem:[%s1 + $0xbb8] sm:$0xff]
  %v415 = vld [vmem:[%s1 + $0xbc0] sm:$0xff]
  %v416 = vld [vmem:[%s1 + $0xbc8] sm:$0xff]
  %v417 = vld [vmem:[%s1 + $0xbd0] sm:$0xff]
  %v418 = vld [vmem:[%s1 + $0xbd8] sm:$0xff]
  %v419 = vld [vmem:[%s1 + $0xbe0] sm:$0xff]
  %v420 = vld [vmem:[%s1 + $0xbe8] sm:$0xff]
  %v421 = vld [vmem:[%s1 + $0xbf0] sm:$0xff]
  %v422 = vld [vmem:[%s1 + $0xbf8] sm:$0xff]
  %v423 = vld [vmem:[%s1 + $0xc00] sm:$0xff]
  %v424 = vld [vmem:[%s1 + $0xc08] sm:$0xff]
  %v425 = vld [vmem:[%s1 + $0xc10] sm:$0xff]
  %v426 = vld [vmem:[%s1 + $0xc18] sm:$0xff]
  %v427 = vld [vmem:[%s1 + $0xc20] sm:$0xff]
  %v428 = vld [vmem:[%s1 + $0xc28] sm:$0xff]
  %v429 = vld [vmem:[%s1 + $0xc30] sm:$0xff]
  %v430 = vld [vmem:[%s1 + $0xc38] sm:$0xff]
  %v431 = vld [vmem:[%s1 + $0xc40] sm:$0xff]
  %v432 = vld [vmem:[%s1 + $0xc48] sm:$0xff]
  %v433 = vld [vmem:[%s1 + $0xc50] sm:$0xff]
  %v434 = vld [vmem:[%s1 + $0xc58] sm:$0xff]
  %v435 = vld [vmem:[%s1 + $0xc60] sm:$0xff]
  %v436 = vld [vmem:[%s1 + $0xc68] sm:$0xff]
  %v437 = vld [vmem:[%s1 + $0xc70] sm:$0xff]
  %v438 = vld [vmem:[%s1 + $0xc78] sm:$0xff]
  %v439 = vld [vmem:[%s1 + $0xc80] sm:$0xff]
  %v440 = vld [vmem:[%s1 + $0xc88] sm:$0xff]
  %v441 = vld [vmem:[%s1 + $0xc90] sm:$0xff]
  %v442 = vld [vmem:[%s1 + $0xc98] sm:$0xff]
  %v443 = vld [vmem:[%s1 + $0xca0] sm:$0xff]
  %v444 = vld [vmem:[%s1 + $0xca8] sm:$0xff]
  %v445 = vld [vmem:[%s1 + $0xcb0] sm:$0xff]
  %v446 = vld [vmem:[%s1 + $0xcb8] sm:$0xff]
  %v447 = vld [vmem:[%s1 + $0xcc0] sm:$0xff]
  %v448 = vld [vmem:[%s1 + $0xcc8] sm:$0xff]
  %v449 = vld [vmem:[%s1 + $0xcd0] sm:$0xff]
  %v450 = vld [vmem:[%s1 + $0xcd8] sm:$0xff]
  %v451 = vld [vmem:[%s1 + $0xce0] sm:$0xff]
  %v452 = vld [vmem:[%s1 + $0xce8] sm:$0xff]
  %v453 = vld [vmem:[%s1 + $0xcf0] sm:$0xff]
  %v454 = vld [vmem:[%s1 + $0xcf8] sm:$0xff]
  %v455 = vld [vmem:[%s1 + $0xd00] sm:$0xff]
  %v456 = vld [vmem:[%s1 + $0xd08] sm:$0xff]
  %v457 = vld [vmem:[%s1 + $0xd10] sm:$0xff]
  %v458 = vld [vmem:[%s1 + $0xd18] sm:$0xff]
  %v459 = vld [vmem:[%s1 + $0xd20] sm:$0xff]
  %v460 = vld [vmem:[%s1 + $0xd28] sm:$0xff]
  %v461 = vld [vmem:[%s1 + $0xd30] sm:$0xff]
  %v462 = vld [vmem:[%s1 + $0xd38] sm:$0xff]
  %v463 = vld [vmem:[%s1 + $0xd40] sm:$0xff]
  %v464 = vld [vmem:[%s1 + $0xd48] sm:$0xff]
  %v465 = vld [vmem:[%s1 + $0xd50] sm:$0xff]
  %v466 = vld [vmem:[%s1 + $0xd58] sm:$0xff]
  %v467 = vld [vmem:[%s1 + $0xd60] sm:$0xff]
  %v468 = vld [vmem:[%s1 + $0xd68] sm:$0xff]
  %v469 = vld [vmem:[%s1 + $0xd70] sm:$0xff]
  %v470 = vld [vmem:[%s1 + $0xd78] sm:$0xff]
  %v471 = vld [vmem:[%s1 + $0xd80] sm:$0xff]
  %v472 = vld [vmem:[%s1 + $0xd88] sm:$0xff]
  %v473 = vld [vmem:[%s1 + $0xd90] sm:$0xff]
  %v474 = vld [vmem:[%s1 + $0xd98] sm:$0xff]
  %v475 = vld [vmem:[%s1 + $0xda0] sm:$0xff]
  %v476 = vld [vmem:[%s1 + $0xda8] sm:$0xff]
  %v477 = vld [vmem:[%s1 + $0xdb0] sm:$0xff]
  %v478 = vld [vmem:[%s1 + $0xdb8] sm:$0xff]
  %v479 = vld [vmem:[%s1 + $0xdc0] sm:$0xff]
  %v480 = vld [vmem:[%s1 + $0xdc8] sm:$0xff]
  %v481 = vld [vmem:[%s1 + $0xdd0] sm:$0xff]
  %v482 = vld [vmem:[%s1 + $0xdd8] sm:$0xff]
  %v483 = vld [vmem:[%s1 + $0xde0] sm:$0xff]
  %v484 = vld [vmem:[%s1 + $0xde8] sm:$0xff]
  %v485 = vld [vmem:[%s1 + $0xdf0] sm:$0xff]
  %v486 = vld [vmem:[%s1 + $0xdf8] sm:$0xff]
  %v487 = vld [vmem:[%s1 + $0xe00] sm:$0xff]
  %v488 = vld [vmem:[%s1 + $0xe08] sm:$0xff]
  %v489 = vld [vmem:[%s1 + $0xe10] sm:$0xff]
  %v490 = vld [vmem:[%s1 + $0xe18] sm:$0xff]
  %v491 = vld [vmem:[%s1 + $0xe20] sm:$0xff]
  %v492 = vld [vmem:[%s1 + $0xe28] sm:$0xff]
  %v493 = vld [vmem:[%s1 + $0xe30] sm:$0xff]
  %v494 = vld [vmem:[%s1 + $0xe38] sm:$0xff]
  %v495 = vld [vmem:[%s1 + $0xe40] sm:$0xff]
  %v496 = vld [vmem:[%s1 + $0xe48] sm:$0xff]
  %v497 = vld [vmem:[%s1 + $0xe50] sm:$0xff]
  %v498 = vld [vmem:[%s1 + $0xe58] sm:$0xff]
  %v499 = vld [vmem:[%s1 + $0xe60] sm:$0xff]
  %v500 = vld [vmem:[%s1 + $0xe68] sm:$0xff]
  %v501 = vld [vmem:[%s1 + $0xe70] sm:$0xff]
  %v502 = vld [vmem:[%s1 + $0xe78] sm:$0xff]
  %v503 = vld [vmem:[%s1 + $0xe80] sm:$0xff]
  %v504 = vld [vmem:[%s1 + $0xe88] sm:$0xff]
  %v505 = vld [vmem:[%s1 + $0xe90] sm:$0xff]
  %v506 = vld [vmem:[%s1 + $0xe98] sm:$0xff]
  %v507 = vld [vmem:[%s1 + $0xea0] sm:$0xff]
  %v508 = vld [vmem:[%s1 + $0xea8] sm:$0xff]
  %v509 = vld [vmem:[%s1 + $0xeb0] sm:$0xff]
  %v510 = vld [vmem:[%s1 + $0xeb8] sm:$0xff]
  %v511 = vld [vmem:[%s1 + $0xec0] sm:$0xff]
  %v512 = vld [vmem:[%s1 + $0xec8] sm:$0xff]
  %v513 = vld [vmem:[%s1 + $0xed0] sm:$0xff]
  %v514 = vld [vmem:[%s1 + $0xed8] sm:$0xff]
  %v515 = vld [vmem:[%s1 + $0xee0] sm:$0xff]
  %v516 = vld [vmem:[%s1 + $0xee8] sm:$0xff]
  %v517 = vld [vmem:[%s1 + $0xef0] sm:$0xff]
  %v518 = vld [vmem:[%s1 + $0xef8] sm:$0xff]
  %v519 = vld [vmem:[%s1 + $0xf00] sm:$0xff]
  %v520 = vld [vmem:[%s1 + $0xf08] sm:$0xff]
  %v521 = vld [vmem:[%s1 + $0xf10] sm:$0xff]
  %v522 = vld [vmem:[%s1 + $0xf18] sm:$0xff]
  %v523 = vld [vmem:[%s1 + $0xf20] sm:$0xff]
  %v524 = vld [vmem:[%s1 + $0xf28] sm:$0xff]
  %v525 = vld [vmem:[%s1 + $0xf30] sm:$0xff]
  %v526 = vld [vmem:[%s1 + $0xf38] sm:$0xff]
  %v527 = vld [vmem:[%s1 + $0xf40] sm:$0xff]
  %v528 = vld [vmem:[%s1 + $0xf48] sm:$0xff]
  %v529 = vld [vmem:[%s1 + $0xf50] sm:$0xff]
  %v530 = vld [vmem:[%s1 + $0xf58] sm:$0xff]
  %v531 = vld [vmem:[%s1 + $0xf60] sm:$0xff]
  %v532 = vld [vmem:[%s1 + $0xf68] sm:$0xff]
  %v533 = vld [vmem:[%s1 + $0xf70] sm:$0xff]
  %v534 = vld [vmem:[%s1 + $0xf78] sm:$0xff]
  %v535 = vld [vmem:[%s1 + $0xf80] sm:$0xff]
  %v536 = vld [vmem:[%s1 + $0xf88] sm:$0xff]
  %v537 = vld [vmem:[%s1 + $0xf90] sm:$0xff]
  %v538 = vld [vmem:[%s1 + $0xf98] sm:$0xff]
  %v539 = vld [vmem:[%s1 + $0xfa0] sm:$0xff]
  %v540 = vld [vmem:[%s1 + $0xfa8] sm:$0xff]
  %v541 = vld [vmem:[%s1 + $0xfb0] sm:$0xff]
  %v542 = vld [vmem:[%s1 + $0xfb8] sm:$0xff]
  %v543 = vld [vmem:[%s1 + $0xfc0] sm:$0xff]
  %v544 = vld [vmem:[%s1 + $0xfc8] sm:$0xff]
  %v545 = vld [vmem:[%s1 + $0xfd0] sm:$0xff]
  %v546 = vld [vmem:[%s1 + $0xfd8] sm:$0xff]
  %v547 = vld [vmem:[%s1 + $0xfe0] sm:$0xff]
  %v548 = vld [vmem:[%s1 + $0xfe8] sm:$0xff]
  %v549 = vld [vmem:[%s1 + $0xff0] sm:$0xff]
  %v550 = vld [vmem:[%s1 + $0xff8] sm:$0xff]
  %v551 = vld [vmem:[%s1 + $0x1000] sm:$0xff]
  %v552 = vld [vmem:[%s1 + $0x1008] sm:$0xff]
  %v553 = vld [vmem:[%s1 + $0x1010] sm:$0xff]
  %v554 = vld [vmem:[%s1 + $0x1018] sm:$0xff]
  %v555 = vld [vmem:[%s1 + $0x1020] sm:$0xff]
  %v556 = vld [vmem:[%s1 + $0x1028] sm:$0xff]
  %v557 = vld [vmem:[%s1 + $0x1030] sm:$0xff]
  %v558 = vld [vmem:[%s1 + $0x1038] sm:$0xff]
  %v559 = vld [vmem:[%s1 + $0x1040] sm:$0xff]
  %v560 = vld [vmem:[%s1 + $0x1048] sm:$0xff]
  %v561 = vld [vmem:[%s1 + $0x1050] sm:$0xff]
  %v562 = vld [vmem:[%s1 + $0x1058] sm:$0xff]
  %v563 = vld [vmem:[%s1 + $0x1060] sm:$0xff]
  %v564 = vld [vmem:[%s1 + $0x1068] sm:$0xff]
  %v565 = vld [vmem:[%s1 + $0x1070] sm:$0xff]
  %v566 = vld [vmem:[%s1 + $0x1078] sm:$0xff]
  %v567 = vld [vmem:[%s1 + $0x1080] sm:$0xff]
  %v568 = vld [vmem:[%s1 + $0x1088] sm:$0xff]
  %v569 = vld [vmem:[%s1 + $0x1090] sm:$0xff]
  %v570 = vld [vmem:[%s1 + $0x1098] sm:$0xff]
  %v571 = vld [vmem:[%s1 + $0x10a0] sm:$0xff]
  %v572 = vld [vmem:[%s1 + $0x10a8] sm:$0xff]
  %v573 = vld [vmem:[%s1 + $0x10b0] sm:$0xff]
  %v574 = vld [vmem:[%s1 + $0x10b8] sm:$0xff]
  %v575 = vld [vmem:[%s1 + $0x10c0] sm:$0xff]
  %v576 = vld [vmem:[%s1 + $0x10c8] sm:$0xff]
  %v577 = vld [vmem:[%s1 + $0x10d0] sm:$0xff]
  %v578 = vld [vmem:[%s1 + $0x10d8] sm:$0xff]
  %v579 = vld [vmem:[%s1 + $0x10e0] sm:$0xff]
  %v580 = vld [vmem:[%s1 + $0x10e8] sm:$0xff]
  %v581 = vld [vmem:[%s1 + $0x10f0] sm:$0xff]
  %v582 = vld [vmem:[%s1 + $0x10f8] sm:$0xff]
  %v583 = vld [vmem:[%s1 + $0x1100] sm:$0xff]
  %v584 = vld [vmem:[%s1 + $0x1108] sm:$0xff]
  %v585 = vld [vmem:[%s1 + $0x1110] sm:$0xff]
  %v586 = vld [vmem:[%s1 + $0x1118] sm:$0xff]
  %v587 = vld [vmem:[%s1 + $0x1120] sm:$0xff]
  %v588 = vld [vmem:[%s1 + $0x1128] sm:$0xff]
  %v589 = vld [vmem:[%s1 + $0x1130] sm:$0xff]
  %v590 = vld [vmem:[%s1 + $0x1138] sm:$0xff]
  %v591 = vld [vmem:[%s1 + $0x1140] sm:$0xff]
  %v592 = vld [vmem:[%s1 + $0x1148] sm:$0xff]
  %v593 = vld [vmem:[%s1 + $0x1150] sm:$0xff]
  %v594 = vld [vmem:[%s1 + $0x1158] sm:$0xff]
  %v595 = vld [vmem:[%s1 + $0x1160] sm:$0xff]
  %v596 = vld [vmem:[%s1 + $0x1168] sm:$0xff]
  %v597 = vld [vmem:[%s1 + $0x1170] sm:$0xff]
  %v598 = vld [vmem:[%s1 + $0x1178] sm:$0xff]
  %v599 = vld [vmem:[%s1 + $0x1180] sm:$0xff]
  %v600 = vld [vmem:[%s1 + $0x1188] sm:$0xff]
  %v601 = vld [vmem:[%s1 + $0x1190] sm:$0xff]
  %v602 = vld [vmem:[%s1 + $0x1198] sm:$0xff]
  %v603 = vld [vmem:[%s1 + $0x11a0] sm:$0xff]
  %v604 = vld [vmem:[%s1 + $0x11a8] sm:$0xff]
  %v605 = vld [vmem:[%s1 + $0x11b0] sm:$0xff]
  %v606 = vld [vmem:[%s1 + $0x11b8] sm:$0xff]
  %v607 = vld [vmem:[%s1 + $0x11c0] sm:$0xff]
  %v608 = vld [vmem:[%s1 + $0x11c8] sm:$0xff]
  %v609 = vld [vmem:[%s1 + $0x11d0] sm:$0xff]
  %v610 = vld [vmem:[%s1 + $0x11d8] sm:$0xff]
  %v611 = vld [vmem:[%s1 + $0x11e0] sm:$0xff]
  %v612 = vld [vmem:[%s1 + $0x11e8] sm:$0xff]
  %v613 = vld [vmem:[%s1 + $0x11f0] sm:$0xff]
  %v614 = vld [vmem:[%s1 + $0x11f8] sm:$0xff]
  %v615 = vld [vmem:[%s1 + $0x1200] sm:$0xff]
  %v616 = vld [vmem:[%s1 + $0x1208] sm:$0xff]
  %v617 = vld [vmem:[%s1 + $0x1210] sm:$0xff]
  %v618 = vld [vmem:[%s1 + $0x1218] sm:$0xff]
  %v619 = vld [vmem:[%s1 + $0x1220] sm:$0xff]
  %v620 = vld [vmem:[%s1 + $0x1228] sm:$0xff]
  %v621 = vld [vmem:[%s1 + $0x1230] sm:$0xff]
  %v622 = vld [vmem:[%s1 + $0x1238] sm:$0xff]
  %v623 = vld [vmem:[%s1 + $0x1240] sm:$0xff]
  %v624 = vld [vmem:[%s1 + $0x1248] sm:$0xff]
  %v625 = vld [vmem:[%s1 + $0x1250] sm:$0xff]
  %v626 = vld [vmem:[%s1 + $0x1258] sm:$0xff]
  %v627 = vld [vmem:[%s1 + $0x1260] sm:$0xff]
  %v628 = vld [vmem:[%s1 + $0x1268] sm:$0xff]
  %v629 = vld [vmem:[%s1 + $0x1270] sm:$0xff]
  %v630 = vld [vmem:[%s1 + $0x1278] sm:$0xff]
  %v631 = vld [vmem:[%s1 + $0x1280] sm:$0xff]
  %v632 = vld [vmem:[%s1 + $0x1288] sm:$0xff]
  %v633 = vld [vmem:[%s1 + $0x1290] sm:$0xff]
  %v634 = vld [vmem:[%s1 + $0x1298] sm:$0xff]
  %v635 = vld [vmem:[%s1 + $0x12a0] sm:$0xff]
  %v636 = vld [vmem:[%s1 + $0x12a8] sm:$0xff]
  %v637 = vld [vmem:[%s1 + $0x12b0] sm:$0xff]
  %v638 = vld [vmem:[%s1 + $0x12b8] sm:$0xff]
  %v639 = vld [vmem:[%s1 + $0x12c0] sm:$0xff]
  %v640 = vld [vmem:[%s1 + $0x12c8] sm:$0xff]
  %v641 = vld [vmem:[%s1 + $0x12d0] sm:$0xff]
  %v642 = vld [vmem:[%s1 + $0x12d8] sm:$0xff]
  %v643 = vld [vmem:[%s1 + $0x12e0] sm:$0xff]
  %v644 = vld [vmem:[%s1 + $0x12e8] sm:$0xff]
  %v645 = vld [vmem:[%s1 + $0x12f0] sm:$0xff]
  %v646 = vld [vmem:[%s1 + $0x12f8] sm:$0xff]
  %v647 = vld [vmem:[%s1 + $0x1300] sm:$0xff]
  %v648 = vld [vmem:[%s1 + $0x1308] sm:$0xff]
  %v649 = vld [vmem:[%s1 + $0x1310] sm:$0xff]
  %v650 = vld [vmem:[%s1 + $0x1318] sm:$0xff]
  %v651 = vld [vmem:[%s1 + $0x1320] sm:$0xff]
  %v652 = vld [vmem:[%s1 + $0x1328] sm:$0xff]
  %v653 = vld [vmem:[%s1 + $0x1330] sm:$0xff]
  %v654 = vld [vmem:[%s1 + $0x1338] sm:$0xff]
  %v655 = vld [vmem:[%s1 + $0x1340] sm:$0xff]
  %v656 = vld [vmem:[%s1 + $0x1348] sm:$0xff]
  %v657 = vld [vmem:[%s1 + $0x1350] sm:$0xff]
  %v658 = vld [vmem:[%s1 + $0x1358] sm:$0xff]
  %v659 = vld [vmem:[%s1 + $0x1360] sm:$0xff]
  %v660 = vld [vmem:[%s1 + $0x1368] sm:$0xff]
  %v661 = vld [vmem:[%s1 + $0x1370] sm:$0xff]
  %v662 = vld [vmem:[%s1 + $0x1378] sm:$0xff]
  %v663 = vld [vmem:[%s1 + $0x1380] sm:$0xff]
  %v664 = vld [vmem:[%s1 + $0x1388] sm:$0xff]
  %v665 = vld [vmem:[%s1 + $0x1390] sm:$0xff]
  %v666 = vld [vmem:[%s1 + $0x1398] sm:$0xff]
  %v667 = vld [vmem:[%s1 + $0x13a0] sm:$0xff]
  %v668 = vld [vmem:[%s1 + $0x13a8] sm:$0xff]
  %v669 = vld [vmem:[%s1 + $0x13b0] sm:$0xff]
  %v670 = vld [vmem:[%s1 + $0x13b8] sm:$0xff]
  %v671 = vld [vmem:[%s1 + $0x13c0] sm:$0xff]
  %v672 = vld [vmem:[%s1 + $0x13c8] sm:$0xff]
  %v673 = vld [vmem:[%s1 + $0x13d0] sm:$0xff]
  %v674 = vld [vmem:[%s1 + $0x13d8] sm:$0xff]
  %v675 = vld [vmem:[%s1 + $0x13e0] sm:$0xff]
  %v676 = vld [vmem:[%s1 + $0x13e8] sm:$0xff]
  %v677 = vld [vmem:[%s1 + $0x13f0] sm:$0xff]
  %v678 = vld [vmem:[%s1 + $0x13f8] sm:$0xff]
  %v679 = vld [vmem:[%s1 + $0x1400] sm:$0xff]
  %v680 = vld [vmem:[%s1 + $0x1408] sm:$0xff]
  %v681 = vld [vmem:[%s1 + $0x1410] sm:$0xff]
  %v682 = vld [vmem:[%s1 + $0x1418] sm:$0xff]
  %v683 = vld [vmem:[%s1 + $0x1420] sm:$0xff]
  %v684 = vld [vmem:[%s1 + $0x1428] sm:$0xff]
  %v685 = vld [vmem:[%s1 + $0x1430] sm:$0xff]
  %v686 = vld [vmem:[%s1 + $0x1438] sm:$0xff]
  %v687 = vld [vmem:[%s1 + $0x1440] sm:$0xff]
  %v688 = vld [vmem:[%s1 + $0x1448] sm:$0xff]
  %v689 = vld [vmem:[%s1 + $0x1450] sm:$0xff]
  %v690 = vld [vmem:[%s1 + $0x1458] sm:$0xff]
  %v691 = vld [vmem:[%s1 + $0x1460] sm:$0xff]
  %v692 = vld [vmem:[%s1 + $0x1468] sm:$0xff]
  %v693 = vld [vmem:[%s1 + $0x1470] sm:$0xff]
  %v694 = vld [vmem:[%s1 + $0x1478] sm:$0xff]
  %v695 = vld [vmem:[%s1 + $0x1480] sm:$0xff]
  %v696 = vld [vmem:[%s1 + $0x1488] sm:$0xff]
  %v697 = vld [vmem:[%s1 + $0x1490] sm:$0xff]
  %v698 = vld [vmem:[%s1 + $0x1498] sm:$0xff]
  %v699 = vld [vmem:[%s1 + $0x14a0] sm:$0xff]
  %v700 = vld [vmem:[%s1 + $0x14a8] sm:$0xff]
  %v701 = vld [vmem:[%s1 + $0x14b0] sm:$0xff]
  %v702 = vld [vmem:[%s1 + $0x14b8] sm:$0xff]
  %v703 = vld [vmem:[%s1 + $0x14c0] sm:$0xff]
  %v704 = vld [vmem:[%s1 + $0x14c8] sm:$0xff]
  %v705 = vld [vmem:[%s1 + $0x14d0] sm:$0xff]
  %v706 = vld [vmem:[%s1 + $0x14d8] sm:$0xff]
  %v707 = vld [vmem:[%s1 + $0x14e0] sm:$0xff]
  %v708 = vld [vmem:[%s1 + $0x14e8] sm:$0xff]
  %v709 = vld [vmem:[%s1 + $0x14f0] sm:$0xff]
  %v710 = vld [vmem:[%s1 + $0x14f8] sm:$0xff]
  %v711 = vld [vmem:[%s1 + $0x1500] sm:$0xff]
  %v712 = vld [vmem:[%s1 + $0x1508] sm:$0xff]
  %v713 = vld [vmem:[%s1 + $0x1510] sm:$0xff]
  %v714 = vld [vmem:[%s1 + $0x1518] sm:$0xff]
  %v715 = vld [vmem:[%s1 + $0x1520] sm:$0xff]
  %v716 = vld [vmem:[%s1 + $0x1528] sm:$0xff]
  %v717 = vld [vmem:[%s1 + $0x1530] sm:$0xff]
  %v718 = vld [vmem:[%s1 + $0x1538] sm:$0xff]
  %v719 = vld [vmem:[%s1 + $0x1540] sm:$0xff]
  %v720 = vld [vmem:[%s1 + $0x1548] sm:$0xff]
  %v721 = vld [vmem:[%s1 + $0x1550] sm:$0xff]
  %v722 = vld [vmem:[%s1 + $0x1558] sm:$0xff]
  %v723 = vld [vmem:[%s1 + $0x1560] sm:$0xff]
  %v724 = vld [vmem:[%s1 + $0x1568] sm:$0xff]
  %v725 = vld [vmem:[%s1 + $0x1570] sm:$0xff]
  %v726 = vld [vmem:[%s1 + $0x1578] sm:$0xff]
  %v727 = vld [vmem:[%s1 + $0x1580] sm:$0xff]
  %v728 = vld [vmem:[%s1 + $0x1588] sm:$0xff]
  %v729 = vld [vmem:[%s1 + $0x1590] sm:$0xff]
  %v730 = vld [vmem:[%s1 + $0x1598] sm:$0xff]
  %v731 = vld [vmem:[%s1 + $0x15a0] sm:$0xff]
  %v732 = vld [vmem:[%s1 + $0x15a8] sm:$0xff]
  %v733 = vld [vmem:[%s1 + $0x15b0] sm:$0xff]
  %v734 = vld [vmem:[%s1 + $0x15b8] sm:$0xff]
  %v735 = vld [vmem:[%s1 + $0x15c0] sm:$0xff]
  %v736 = vld [vmem:[%s1 + $0x15c8] sm:$0xff]
  %v737 = vld [vmem:[%s1 + $0x15d0] sm:$0xff]
  %v738 = vld [vmem:[%s1 + $0x15d8] sm:$0xff]
  %v739 = vld [vmem:[%s1 + $0x15e0] sm:$0xff]
  %v740 = vld [vmem:[%s1 + $0x15e8] sm:$0xff]
  %v741 = vld [vmem:[%s1 + $0x15f0] sm:$0xff]
  %v742 = vld [vmem:[%s1 + $0x15f8] sm:$0xff]
  %v743 = vld [vmem:[%s1 + $0x1600] sm:$0xff]
  %v744 = vld [vmem:[%s1 + $0x1608] sm:$0xff]
  %v745 = vld [vmem:[%s1 + $0x1610] sm:$0xff]
  %v746 = vld [vmem:[%s1 + $0x1618] sm:$0xff]
  %v747 = vld [vmem:[%s1 + $0x1620] sm:$0xff]
  %v748 = vld [vmem:[%s1 + $0x1628] sm:$0xff]
  %v749 = vld [vmem:[%s1 + $0x1630] sm:$0xff]
  %v750 = vld [vmem:[%s1 + $0x1638] sm:$0xff]
  %v751 = vld [vmem:[%s1 + $0x1640] sm:$0xff]
  %v752 = vld [vmem:[%s1 + $0x1648] sm:$0xff]
  %v753 = vld [vmem:[%s1 + $0x1650] sm:$0xff]
  %v754 = vld [vmem:[%s1 + $0x1658] sm:$0xff]
  %v755 = vld [vmem:[%s1 + $0x1660] sm:$0xff]
  %v756 = vld [vmem:[%s1 + $0x1668] sm:$0xff]
  %v757 = vld [vmem:[%s1 + $0x1670] sm:$0xff]
  %v758 = vld [vmem:[%s1 + $0x1678] sm:$0xff]
  %v759 = vld [vmem:[%s1 + $0x1680] sm:$0xff]
  %v760 = vld [vmem:[%s1 + $0x1688] sm:$0xff]
  %v761 = vld [vmem:[%s1 + $0x1690] sm:$0xff]
  %v762 = vld [vmem:[%s1 + $0x1698] sm:$0xff]
  %v763 = vld [vmem:[%s1 + $0x16a0] sm:$0xff]
  %v764 = vld [vmem:[%s1 + $0x16a8] sm:$0xff]
  %v765 = vld [vmem:[%s1 + $0x16b0] sm:$0xff]
  %v766 = vld [vmem:[%s1 + $0x16b8] sm:$0xff]
  %v767 = vld [vmem:[%s1 + $0x16c0] sm:$0xff]
  %v768 = vld [vmem:[%s1 + $0x16c8] sm:$0xff]
  %v769 = vld [vmem:[%s1 + $0x16d0] sm:$0xff]
  %v770 = vld [vmem:[%s1 + $0x16d8] sm:$0xff]
  %v771 = vld [vmem:[%s1 + $0x16e0] sm:$0xff]
  %v772 = vld [vmem:[%s1 + $0x16e8] sm:$0xff]
  %v773 = vld [vmem:[%s1 + $0x16f0] sm:$0xff]
  %v774 = vld [vmem:[%s1 + $0x16f8] sm:$0xff]
  %v775 = vld [vmem:[%s1 + $0x1700] sm:$0xff]
  %v776 = vld [vmem:[%s1 + $0x1708] sm:$0xff]
  %v777 = vld [vmem:[%s1 + $0x1710] sm:$0xff]
  %v778 = vld [vmem:[%s1 + $0x1718] sm:$0xff]
  %v779 = vld [vmem:[%s1 + $0x1720] sm:$0xff]
  %v780 = vld [vmem:[%s1 + $0x1728] sm:$0xff]
  %v781 = vld [vmem:[%s1 + $0x1730] sm:$0xff]
  %v782 = vld [vmem:[%s1 + $0x1738] sm:$0xff]
  %v783 = vld [vmem:[%s1 + $0x1740] sm:$0xff]
  %v784 = vld [vmem:[%s1 + $0x1748] sm:$0xff]
  %v785 = vld [vmem:[%s1 + $0x1750] sm:$0xff]
  %v786 = vld [vmem:[%s1 + $0x1758] sm:$0xff]
  %v787 = vld [vmem:[%s1 + $0x1760] sm:$0xff]
  %v788 = vld [vmem:[%s1 + $0x1768] sm:$0xff]
  %v789 = vld [vmem:[%s1 + $0x1770] sm:$0xff]
  %v790 = vld [vmem:[%s1 + $0x1778] sm:$0xff]
  %v791 = vld [vmem:[%s1 + $0x1780] sm:$0xff]
  %v792 = vld [vmem:[%s1 + $0x1788] sm:$0xff]
  %v793 = vld [vmem:[%s1 + $0x1790] sm:$0xff]
  %v794 = vld [vmem:[%s1 + $0x1798] sm:$0xff]
  %v795 = vld [vmem:[%s1 + $0x17a0] sm:$0xff]
  %v796 = vld [vmem:[%s1 + $0x17a8] sm:$0xff]
  %v797 = vld [vmem:[%s1 + $0x17b0] sm:$0xff]
  %v798 = vld [vmem:[%s1 + $0x17b8] sm:$0xff]
  %v799 = vld [vmem:[%s1 + $0x17c0] sm:$0xff]
  %v800 = vld [vmem:[%s1 + $0x17c8] sm:$0xff]
  %v801 = vld [vmem:[%s1 + $0x17d0] sm:$0xff]
  %v802 = vld [vmem:[%s1 + $0x17d8] sm:$0xff]
  %v803 = vld [vmem:[%s1 + $0x17e0] sm:$0xff]
  %v804 = vld [vmem:[%s1 + $0x17e8] sm:$0xff]
  %v805 = vld [vmem:[%s1 + $0x17f0] sm:$0xff]
  %v806 = vld [vmem:[%s1 + $0x17f8] sm:$0xff]
  %v807 = vld [vmem:[%s2] sm:$0xf]
  %v809 = vlaneseq
  %v810 = vshrl.u32 %v809, 7
  %v811 = vsub.s32 0, %v810
  %v812 = vrot.slane %v807, %v811
  %v813 = vlaneseq
  %v814 = vshrl.u32 %v813, 7
  %v815 = vsub.s32 1, %v814
  %v816 = vrot.slane %v807, %v815
  %v817 = vlaneseq
  %v818 = vshrl.u32 %v817, 7
  %v819 = vsub.s32 2, %v818
  %v820 = vrot.slane %v807, %v819
  %v821 = vlaneseq
  %v822 = vshrl.u32 %v821, 7
  %v823 = vsub.s32 3, %v822
  %v824 = vrot.slane %v807, %v823
  %v841 = vunpack.c.l.b16 %v27
  %v842 = vunpack.c.h.b16 %v27
  %v843 = vunpack.c.l.b16 %v28
  %v844 = vunpack.c.h.b16 %v28
  %v845 = vunpack.c.l.b16 %v29
  %v846 = vunpack.c.h.b16 %v29
  %v847 = vunpack.c.l.b16 %v30
  %v848 = vunpack.c.h.b16 %v30
  %v849 = vunpack.c.l.b16 %v31
  %v850 = vunpack.c.h.b16 %v31
  %v851 = vunpack.c.l.b16 %v32
  %v852 = vunpack.c.h.b16 %v32
  %v853 = vunpack.c.l.b16 %v33
  %v854 = vunpack.c.h.b16 %v33
  %v855 = vunpack.c.l.b16 %v34
  %v856 = vunpack.c.h.b16 %v34
  %v857 = vunpack.c.l.b16 %v35
  %v858 = vunpack.c.h.b16 %v35
  %v859 = vunpack.c.l.b16 %v36
  %v860 = vunpack.c.h.b16 %v36
  %v861 = vunpack.c.l.b16 %v37
  %v862 = vunpack.c.h.b16 %v37
  %v863 = vunpack.c.l.b16 %v38
  %v864 = vunpack.c.h.b16 %v38
  %v865 = vpack.c.b16 %v841, %v841
  %v866 = vpack.c.b16 %v842, %v842
  %v867 = vpack.c.b16 %v843, %v843
  %v868 = vpack.c.b16 %v844, %v844
  %v869 = vpack.c.b16 %v845, %v845
  %v870 = vpack.c.b16 %v846, %v846
  %v871 = vpack.c.b16 %v847, %v847
  %v872 = vpack.c.b16 %v848, %v848
  %v873 = vpack.c.b16 %v849, %v849
  %v874 = vpack.c.b16 %v850, %v850
  %v875 = vpack.c.b16 %v851, %v851
  %v876 = vpack.c.b16 %v852, %v852
  %v877 = vpack.c.b16 %v853, %v853
  %v878 = vpack.c.b16 %v854, %v854
  %v879 = vpack.c.b16 %v855, %v855
  %v880 = vpack.c.b16 %v856, %v856
  %v881 = vpack.c.b16 %v857, %v857
  %v882 = vpack.c.b16 %v858, %v858
  %v883 = vpack.c.b16 %v859, %v859
  %v884 = vpack.c.b16 %v860, %v860
  %v885 = vpack.c.b16 %v861, %v861
  %v886 = vpack.c.b16 %v862, %v862
  %v887 = vpack.c.b16 %v863, %v863
  %v888 = vpack.c.b16 %v864, %v864
  %v1681 = vunpack.c.l.b16 %v39
  %v1682 = vunpack.c.h.b16 %v39
  %v1683 = vunpack.c.l.b16 %v40
  %v1684 = vunpack.c.h.b16 %v40
  %v1685 = vunpack.c.l.b16 %v41
  %v1686 = vunpack.c.h.b16 %v41
  %v1687 = vunpack.c.l.b16 %v42
  %v1688 = vunpack.c.h.b16 %v42
  %v1689 = vunpack.c.l.b16 %v43
  %v1690 = vunpack.c.h.b16 %v43
  %v1691 = vunpack.c.l.b16 %v44
  %v1692 = vunpack.c.h.b16 %v44
  %v1693 = vunpack.c.l.b16 %v45
  %v1694 = vunpack.c.h.b16 %v45
  %v1695 = vunpack.c.l.b16 %v46
  %v1696 = vunpack.c.h.b16 %v46
  %v1697 = vunpack.c.l.b16 %v47
  %v1698 = vunpack.c.h.b16 %v47
  %v1699 = vunpack.c.l.b16 %v48
  %v1700 = vunpack.c.h.b16 %v48
  %v1701 = vunpack.c.l.b16 %v49
  %v1702 = vunpack.c.h.b16 %v49
  %v1703 = vunpack.c.l.b16 %v50
  %v1704 = vunpack.c.h.b16 %v50
  %v1705 = vunpack.c.l.b16 %v51
  %v1706 = vunpack.c.h.b16 %v51
  %v1707 = vunpack.c.l.b16 %v52
  %v1708 = vunpack.c.h.b16 %v52
  %v1709 = vunpack.c.l.b16 %v53
  %v1710 = vunpack.c.h.b16 %v53
  %v1711 = vunpack.c.l.b16 %v54
  %v1712 = vunpack.c.h.b16 %v54
  %v1713 = vunpack.c.l.b16 %v55
  %v1714 = vunpack.c.h.b16 %v55
  %v1715 = vunpack.c.l.b16 %v56
  %v1716 = vunpack.c.h.b16 %v56
  %v1717 = vunpack.c.l.b16 %v57
  %v1718 = vunpack.c.h.b16 %v57
  %v1719 = vunpack.c.l.b16 %v58
  %v1720 = vunpack.c.h.b16 %v58
  %v1721 = vunpack.c.l.b16 %v59
  %v1722 = vunpack.c.h.b16 %v59
  %v1723 = vunpack.c.l.b16 %v60
  %v1724 = vunpack.c.h.b16 %v60
  %v1725 = vunpack.c.l.b16 %v61
  %v1726 = vunpack.c.h.b16 %v61
  %v1727 = vunpack.c.l.b16 %v62
  %v1728 = vunpack.c.h.b16 %v62
  %v1729 = vunpack.c.l.b16 %v63
  %v1730 = vunpack.c.h.b16 %v63
  %v1731 = vunpack.c.l.b16 %v64
  %v1732 = vunpack.c.h.b16 %v64
  %v1733 = vunpack.c.l.b16 %v65
  %v1734 = vunpack.c.h.b16 %v65
  %v1735 = vunpack.c.l.b16 %v66
  %v1736 = vunpack.c.h.b16 %v66
  %v1737 = vunpack.c.l.b16 %v67
  %v1738 = vunpack.c.h.b16 %v67
  %v1739 = vunpack.c.l.b16 %v68
  %v1740 = vunpack.c.h.b16 %v68
  %v1741 = vunpack.c.l.b16 %v69
  %v1742 = vunpack.c.h.b16 %v69
  %v1743 = vunpack.c.l.b16 %v70
  %v1744 = vunpack.c.h.b16 %v70
  %v1745 = vunpack.c.l.b16 %v71
  %v1746 = vunpack.c.h.b16 %v71
  %v1747 = vunpack.c.l.b16 %v72
  %v1748 = vunpack.c.h.b16 %v72
  %v1749 = vunpack.c.l.b16 %v73
  %v1750 = vunpack.c.h.b16 %v73
  %v1751 = vunpack.c.l.b16 %v74
  %v1752 = vunpack.c.h.b16 %v74
  %v1753 = vunpack.c.l.b16 %v75
  %v1754 = vunpack.c.h.b16 %v75
  %v1755 = vunpack.c.l.b16 %v76
  %v1756 = vunpack.c.h.b16 %v76
  %v1757 = vunpack.c.l.b16 %v77
  %v1758 = vunpack.c.h.b16 %v77
  %v1759 = vunpack.c.l.b16 %v78
  %v1760 = vunpack.c.h.b16 %v78
  %v1761 = vunpack.c.l.b16 %v79
  %v1762 = vunpack.c.h.b16 %v79
  %v1763 = vunpack.c.l.b16 %v80
  %v1764 = vunpack.c.h.b16 %v80
  %v1765 = vunpack.c.l.b16 %v81
  %v1766 = vunpack.c.h.b16 %v81
  %v1767 = vunpack.c.l.b16 %v82
  %v1768 = vunpack.c.h.b16 %v82
  %v1769 = vunpack.c.l.b16 %v83
  %v1770 = vunpack.c.h.b16 %v83
  %v1771 = vunpack.c.l.b16 %v84
  %v1772 = vunpack.c.h.b16 %v84
  %v1773 = vunpack.c.l.b16 %v85
  %v1774 = vunpack.c.h.b16 %v85
  %v1775 = vunpack.c.l.b16 %v86
  %v1776 = vunpack.c.h.b16 %v86
  %v1777 = vunpack.c.l.b16 %v87
  %v1778 = vunpack.c.h.b16 %v87
  %v1779 = vunpack.c.l.b16 %v88
  %v1780 = vunpack.c.h.b16 %v88
  %v1781 = vunpack.c.l.b16 %v89
  %v1782 = vunpack.c.h.b16 %v89
  %v1783 = vunpack.c.l.b16 %v90
  %v1784 = vunpack.c.h.b16 %v90
  %v1785 = vunpack.c.l.b16 %v91
  %v1786 = vunpack.c.h.b16 %v91
  %v1787 = vunpack.c.l.b16 %v92
  %v1788 = vunpack.c.h.b16 %v92
  %v1789 = vunpack.c.l.b16 %v93
  %v1790 = vunpack.c.h.b16 %v93
  %v1791 = vunpack.c.l.b16 %v94
  %v1792 = vunpack.c.h.b16 %v94
  %v1793 = vunpack.c.l.b16 %v95
  %v1794 = vunpack.c.h.b16 %v95
  %v1795 = vunpack.c.l.b16 %v96
  %v1796 = vunpack.c.h.b16 %v96
  %v1797 = vunpack.c.l.b16 %v97
  %v1798 = vunpack.c.h.b16 %v97
  %v1799 = vunpack.c.l.b16 %v98
  %v1800 = vunpack.c.h.b16 %v98
  %v1801 = vunpack.c.l.b16 %v99
  %v1802 = vunpack.c.h.b16 %v99
  %v1803 = vunpack.c.l.b16 %v100
  %v1804 = vunpack.c.h.b16 %v100
  %v1805 = vunpack.c.l.b16 %v101
  %v1806 = vunpack.c.h.b16 %v101
  %v1807 = vunpack.c.l.b16 %v102
  %v1808 = vunpack.c.h.b16 %v102
  %v1809 = vunpack.c.l.b16 %v103
  %v1810 = vunpack.c.h.b16 %v103
  %v1811 = vunpack.c.l.b16 %v104
  %v1812 = vunpack.c.h.b16 %v104
  %v1813 = vunpack.c.l.b16 %v105
  %v1814 = vunpack.c.h.b16 %v105
  %v1815 = vunpack.c.l.b16 %v106
  %v1816 = vunpack.c.h.b16 %v106
  %v1817 = vunpack.c.l.b16 %v107
  %v1818 = vunpack.c.h.b16 %v107
  %v1819 = vunpack.c.l.b16 %v108
  %v1820 = vunpack.c.h.b16 %v108
  %v1821 = vunpack.c.l.b16 %v109
  %v1822 = vunpack.c.h.b16 %v109
  %v1823 = vunpack.c.l.b16 %v110
  %v1824 = vunpack.c.h.b16 %v110
  %v1825 = vunpack.c.l.b16 %v111
  %v1826 = vunpack.c.h.b16 %v111
  %v1827 = vunpack.c.l.b16 %v112
  %v1828 = vunpack.c.h.b16 %v112
  %v1829 = vunpack.c.l.b16 %v113
  %v1830 = vunpack.c.h.b16 %v113
  %v1831 = vunpack.c.l.b16 %v114
  %v1832 = vunpack.c.h.b16 %v114
  %v1833 = vunpack.c.l.b16 %v115
  %v1834 = vunpack.c.h.b16 %v115
  %v1835 = vunpack.c.l.b16 %v116
  %v1836 = vunpack.c.h.b16 %v116
  %v1837 = vunpack.c.l.b16 %v117
  %v1838 = vunpack.c.h.b16 %v117
  %v1839 = vunpack.c.l.b16 %v118
  %v1840 = vunpack.c.h.b16 %v118
  %v1841 = vunpack.c.l.b16 %v119
  %v1842 = vunpack.c.h.b16 %v119
  %v1843 = vunpack.c.l.b16 %v120
  %v1844 = vunpack.c.h.b16 %v120
  %v1845 = vunpack.c.l.b16 %v121
  %v1846 = vunpack.c.h.b16 %v121
  %v1847 = vunpack.c.l.b16 %v122
  %v1848 = vunpack.c.h.b16 %v122
  %v1849 = vunpack.c.l.b16 %v123
  %v1850 = vunpack.c.h.b16 %v123
  %v1851 = vunpack.c.l.b16 %v124
  %v1852 = vunpack.c.h.b16 %v124
  %v1853 = vunpack.c.l.b16 %v125
  %v1854 = vunpack.c.h.b16 %v125
  %v1855 = vunpack.c.l.b16 %v126
  %v1856 = vunpack.c.h.b16 %v126
  %v1857 = vunpack.c.l.b16 %v127
  %v1858 = vunpack.c.h.b16 %v127
  %v1859 = vunpack.c.l.b16 %v128
  %v1860 = vunpack.c.h.b16 %v128
  %v1861 = vunpack.c.l.b16 %v129
  %v1862 = vunpack.c.h.b16 %v129
  %v1863 = vunpack.c.l.b16 %v130
  %v1864 = vunpack.c.h.b16 %v130
  %v1865 = vunpack.c.l.b16 %v131
  %v1866 = vunpack.c.h.b16 %v131
  %v1867 = vunpack.c.l.b16 %v132
  %v1868 = vunpack.c.h.b16 %v132
  %v1869 = vunpack.c.l.b16 %v133
  %v1870 = vunpack.c.h.b16 %v133
  %v1871 = vunpack.c.l.b16 %v134
  %v1872 = vunpack.c.h.b16 %v134
  %v1873 = vunpack.c.l.b16 %v135
  %v1874 = vunpack.c.h.b16 %v135
  %v1875 = vunpack.c.l.b16 %v136
  %v1876 = vunpack.c.h.b16 %v136
  %v1877 = vunpack.c.l.b16 %v137
  %v1878 = vunpack.c.h.b16 %v137
  %v1879 = vunpack.c.l.b16 %v138
  %v1880 = vunpack.c.h.b16 %v138
  %v1881 = vunpack.c.l.b16 %v139
  %v1882 = vunpack.c.h.b16 %v139
  %v1883 = vunpack.c.l.b16 %v140
  %v1884 = vunpack.c.h.b16 %v140
  %v1885 = vunpack.c.l.b16 %v141
  %v1886 = vunpack.c.h.b16 %v141
  %v1887 = vunpack.c.l.b16 %v142
  %v1888 = vunpack.c.h.b16 %v142
  %v1889 = vunpack.c.l.b16 %v143
  %v1890 = vunpack.c.h.b16 %v143
  %v1891 = vunpack.c.l.b16 %v144
  %v1892 = vunpack.c.h.b16 %v144
  %v1893 = vunpack.c.l.b16 %v145
  %v1894 = vunpack.c.h.b16 %v145
  %v1895 = vunpack.c.l.b16 %v146
  %v1896 = vunpack.c.h.b16 %v146
  %v1897 = vunpack.c.l.b16 %v147
  %v1898 = vunpack.c.h.b16 %v147
  %v1899 = vunpack.c.l.b16 %v148
  %v1900 = vunpack.c.h.b16 %v148
  %v1901 = vunpack.c.l.b16 %v149
  %v1902 = vunpack.c.h.b16 %v149
  %v1903 = vunpack.c.l.b16 %v150
  %v1904 = vunpack.c.h.b16 %v150
  %v1905 = vunpack.c.l.b16 %v151
  %v1906 = vunpack.c.h.b16 %v151
  %v1907 = vunpack.c.l.b16 %v152
  %v1908 = vunpack.c.h.b16 %v152
  %v1909 = vunpack.c.l.b16 %v153
  %v1910 = vunpack.c.h.b16 %v153
  %v1911 = vunpack.c.l.b16 %v154
  %v1912 = vunpack.c.h.b16 %v154
  %v1913 = vunpack.c.l.b16 %v155
  %v1914 = vunpack.c.h.b16 %v155
  %v1915 = vunpack.c.l.b16 %v156
  %v1916 = vunpack.c.h.b16 %v156
  %v1917 = vunpack.c.l.b16 %v157
  %v1918 = vunpack.c.h.b16 %v157
  %v1919 = vunpack.c.l.b16 %v158
  %v1920 = vunpack.c.h.b16 %v158
  %v1921 = vunpack.c.l.b16 %v159
  %v1922 = vunpack.c.h.b16 %v159
  %v1923 = vunpack.c.l.b16 %v160
  %v1924 = vunpack.c.h.b16 %v160
  %v1925 = vunpack.c.l.b16 %v161
  %v1926 = vunpack.c.h.b16 %v161
  %v1927 = vunpack.c.l.b16 %v162
  %v1928 = vunpack.c.h.b16 %v162
  %v1929 = vunpack.c.l.b16 %v163
  %v1930 = vunpack.c.h.b16 %v163
  %v1931 = vunpack.c.l.b16 %v164
  %v1932 = vunpack.c.h.b16 %v164
  %v1933 = vunpack.c.l.b16 %v165
  %v1934 = vunpack.c.h.b16 %v165
  %v1935 = vunpack.c.l.b16 %v166
  %v1936 = vunpack.c.h.b16 %v166
  %v1937 = vunpack.c.l.b16 %v167
  %v1938 = vunpack.c.h.b16 %v167
  %v1939 = vunpack.c.l.b16 %v168
  %v1940 = vunpack.c.h.b16 %v168
  %v1941 = vunpack.c.l.b16 %v169
  %v1942 = vunpack.c.h.b16 %v169
  %v1943 = vunpack.c.l.b16 %v170
  %v1944 = vunpack.c.h.b16 %v170
  %v1945 = vunpack.c.l.b16 %v171
  %v1946 = vunpack.c.h.b16 %v171
  %v1947 = vunpack.c.l.b16 %v172
  %v1948 = vunpack.c.h.b16 %v172
  %v1949 = vunpack.c.l.b16 %v173
  %v1950 = vunpack.c.h.b16 %v173
  %v1951 = vunpack.c.l.b16 %v174
  %v1952 = vunpack.c.h.b16 %v174
  %v1953 = vunpack.c.l.b16 %v175
  %v1954 = vunpack.c.h.b16 %v175
  %v1955 = vunpack.c.l.b16 %v176
  %v1956 = vunpack.c.h.b16 %v176
  %v1957 = vunpack.c.l.b16 %v177
  %v1958 = vunpack.c.h.b16 %v177
  %v1959 = vunpack.c.l.b16 %v178
  %v1960 = vunpack.c.h.b16 %v178
  %v1961 = vunpack.c.l.b16 %v179
  %v1962 = vunpack.c.h.b16 %v179
  %v1963 = vunpack.c.l.b16 %v180
  %v1964 = vunpack.c.h.b16 %v180
  %v1965 = vunpack.c.l.b16 %v181
  %v1966 = vunpack.c.h.b16 %v181
  %v1967 = vunpack.c.l.b16 %v182
  %v1968 = vunpack.c.h.b16 %v182
  %v1969 = vunpack.c.l.b16 %v183
  %v1970 = vunpack.c.h.b16 %v183
  %v1971 = vunpack.c.l.b16 %v184
  %v1972 = vunpack.c.h.b16 %v184
  %v1973 = vunpack.c.l.b16 %v185
  %v1974 = vunpack.c.h.b16 %v185
  %v1975 = vunpack.c.l.b16 %v186
  %v1976 = vunpack.c.h.b16 %v186
  %v1977 = vunpack.c.l.b16 %v187
  %v1978 = vunpack.c.h.b16 %v187
  %v1979 = vunpack.c.l.b16 %v188
  %v1980 = vunpack.c.h.b16 %v188
  %v1981 = vunpack.c.l.b16 %v189
  %v1982 = vunpack.c.h.b16 %v189
  %v1983 = vunpack.c.l.b16 %v190
  %v1984 = vunpack.c.h.b16 %v190
  %v1985 = vunpack.c.l.b16 %v191
  %v1986 = vunpack.c.h.b16 %v191
  %v1987 = vunpack.c.l.b16 %v192
  %v1988 = vunpack.c.h.b16 %v192
  %v1989 = vunpack.c.l.b16 %v193
  %v1990 = vunpack.c.h.b16 %v193
  %v1991 = vunpack.c.l.b16 %v194
  %v1992 = vunpack.c.h.b16 %v194
  %v1993 = vunpack.c.l.b16 %v195
  %v1994 = vunpack.c.h.b16 %v195
  %v1995 = vunpack.c.l.b16 %v196
  %v1996 = vunpack.c.h.b16 %v196
  %v1997 = vunpack.c.l.b16 %v197
  %v1998 = vunpack.c.h.b16 %v197
  %v1999 = vunpack.c.l.b16 %v198
  %v2000 = vunpack.c.h.b16 %v198
  %v2001 = vunpack.c.l.b16 %v199
  %v2002 = vunpack.c.h.b16 %v199
  %v2003 = vunpack.c.l.b16 %v200
  %v2004 = vunpack.c.h.b16 %v200
  %v2005 = vunpack.c.l.b16 %v201
  %v2006 = vunpack.c.h.b16 %v201
  %v2007 = vunpack.c.l.b16 %v202
  %v2008 = vunpack.c.h.b16 %v202
  %v2009 = vunpack.c.l.b16 %v203
  %v2010 = vunpack.c.h.b16 %v203
  %v2011 = vunpack.c.l.b16 %v204
  %v2012 = vunpack.c.h.b16 %v204
  %v2013 = vunpack.c.l.b16 %v205
  %v2014 = vunpack.c.h.b16 %v205
  %v2015 = vunpack.c.l.b16 %v206
  %v2016 = vunpack.c.h.b16 %v206
  %v2017 = vunpack.c.l.b16 %v207
  %v2018 = vunpack.c.h.b16 %v207
  %v2019 = vunpack.c.l.b16 %v208
  %v2020 = vunpack.c.h.b16 %v208
  %v2021 = vunpack.c.l.b16 %v209
  %v2022 = vunpack.c.h.b16 %v209
  %v2023 = vunpack.c.l.b16 %v210
  %v2024 = vunpack.c.h.b16 %v210
  %v2025 = vunpack.c.l.b16 %v211
  %v2026 = vunpack.c.h.b16 %v211
  %v2027 = vunpack.c.l.b16 %v212
  %v2028 = vunpack.c.h.b16 %v212
  %v2029 = vunpack.c.l.b16 %v213
  %v2030 = vunpack.c.h.b16 %v213
  %v2031 = vunpack.c.l.b16 %v214
  %v2032 = vunpack.c.h.b16 %v214
  %v2033 = vunpack.c.l.b16 %v215
  %v2034 = vunpack.c.h.b16 %v215
  %v2035 = vunpack.c.l.b16 %v216
  %v2036 = vunpack.c.h.b16 %v216
  %v2037 = vunpack.c.l.b16 %v217
  %v2038 = vunpack.c.h.b16 %v217
  %v2039 = vunpack.c.l.b16 %v218
  %v2040 = vunpack.c.h.b16 %v218
  %v2041 = vunpack.c.l.b16 %v219
  %v2042 = vunpack.c.h.b16 %v219
  %v2043 = vunpack.c.l.b16 %v220
  %v2044 = vunpack.c.h.b16 %v220
  %v2045 = vunpack.c.l.b16 %v221
  %v2046 = vunpack.c.h.b16 %v221
  %v2047 = vunpack.c.l.b16 %v222
  %v2048 = vunpack.c.h.b16 %v222
  %v2049 = vunpack.c.l.b16 %v223
  %v2050 = vunpack.c.h.b16 %v223
  %v2051 = vunpack.c.l.b16 %v224
  %v2052 = vunpack.c.h.b16 %v224
  %v2053 = vunpack.c.l.b16 %v225
  %v2054 = vunpack.c.h.b16 %v225
  %v2055 = vunpack.c.l.b16 %v226
  %v2056 = vunpack.c.h.b16 %v226
  %v2057 = vunpack.c.l.b16 %v227
  %v2058 = vunpack.c.h.b16 %v227
  %v2059 = vunpack.c.l.b16 %v228
  %v2060 = vunpack.c.h.b16 %v228
  %v2061 = vunpack.c.l.b16 %v229
  %v2062 = vunpack.c.h.b16 %v229
  %v2063 = vunpack.c.l.b16 %v230
  %v2064 = vunpack.c.h.b16 %v230
  %v2065 = vunpack.c.l.b16 %v231
  %v2066 = vunpack.c.h.b16 %v231
  %v2067 = vunpack.c.l.b16 %v232
  %v2068 = vunpack.c.h.b16 %v232
  %v2069 = vunpack.c.l.b16 %v233
  %v2070 = vunpack.c.h.b16 %v233
  %v2071 = vunpack.c.l.b16 %v234
  %v2072 = vunpack.c.h.b16 %v234
  %v2073 = vunpack.c.l.b16 %v235
  %v2074 = vunpack.c.h.b16 %v235
  %v2075 = vunpack.c.l.b16 %v236
  %v2076 = vunpack.c.h.b16 %v236
  %v2077 = vunpack.c.l.b16 %v237
  %v2078 = vunpack.c.h.b16 %v237
  %v2079 = vunpack.c.l.b16 %v238
  %v2080 = vunpack.c.h.b16 %v238
  %v2081 = vunpack.c.l.b16 %v239
  %v2082 = vunpack.c.h.b16 %v239
  %v2083 = vunpack.c.l.b16 %v240
  %v2084 = vunpack.c.h.b16 %v240
  %v2085 = vunpack.c.l.b16 %v241
  %v2086 = vunpack.c.h.b16 %v241
  %v2087 = vunpack.c.l.b16 %v242
  %v2088 = vunpack.c.h.b16 %v242
  %v2089 = vunpack.c.l.b16 %v243
  %v2090 = vunpack.c.h.b16 %v243
  %v2091 = vunpack.c.l.b16 %v244
  %v2092 = vunpack.c.h.b16 %v244
  %v2093 = vunpack.c.l.b16 %v245
  %v2094 = vunpack.c.h.b16 %v245
  %v2095 = vunpack.c.l.b16 %v246
  %v2096 = vunpack.c.h.b16 %v246
  %v2097 = vunpack.c.l.b16 %v247
  %v2098 = vunpack.c.h.b16 %v247
  %v2099 = vunpack.c.l.b16 %v248
  %v2100 = vunpack.c.h.b16 %v248
  %v2101 = vunpack.c.l.b16 %v249
  %v2102 = vunpack.c.h.b16 %v249
  %v2103 = vunpack.c.l.b16 %v250
  %v2104 = vunpack.c.h.b16 %v250
  %v2105 = vunpack.c.l.b16 %v251
  %v2106 = vunpack.c.h.b16 %v251
  %v2107 = vunpack.c.l.b16 %v252
  %v2108 = vunpack.c.h.b16 %v252
  %v2109 = vunpack.c.l.b16 %v253
  %v2110 = vunpack.c.h.b16 %v253
  %v2111 = vunpack.c.l.b16 %v254
  %v2112 = vunpack.c.h.b16 %v254
  %v2113 = vunpack.c.l.b16 %v255
  %v2114 = vunpack.c.h.b16 %v255
  %v2115 = vunpack.c.l.b16 %v256
  %v2116 = vunpack.c.h.b16 %v256
  %v2117 = vunpack.c.l.b16 %v257
  %v2118 = vunpack.c.h.b16 %v257
  %v2119 = vunpack.c.l.b16 %v258
  %v2120 = vunpack.c.h.b16 %v258
  %v2121 = vunpack.c.l.b16 %v259
  %v2122 = vunpack.c.h.b16 %v259
  %v2123 = vunpack.c.l.b16 %v260
  %v2124 = vunpack.c.h.b16 %v260
  %v2125 = vunpack.c.l.b16 %v261
  %v2126 = vunpack.c.h.b16 %v261
  %v2127 = vunpack.c.l.b16 %v262
  %v2128 = vunpack.c.h.b16 %v262
  %v2129 = vunpack.c.l.b16 %v263
  %v2130 = vunpack.c.h.b16 %v263
  %v2131 = vunpack.c.l.b16 %v264
  %v2132 = vunpack.c.h.b16 %v264
  %v2133 = vunpack.c.l.b16 %v265
  %v2134 = vunpack.c.h.b16 %v265
  %v2135 = vunpack.c.l.b16 %v266
  %v2136 = vunpack.c.h.b16 %v266
  %v2137 = vunpack.c.l.b16 %v267
  %v2138 = vunpack.c.h.b16 %v267
  %v2139 = vunpack.c.l.b16 %v268
  %v2140 = vunpack.c.h.b16 %v268
  %v2141 = vunpack.c.l.b16 %v269
  %v2142 = vunpack.c.h.b16 %v269
  %v2143 = vunpack.c.l.b16 %v270
  %v2144 = vunpack.c.h.b16 %v270
  %v2145 = vunpack.c.l.b16 %v271
  %v2146 = vunpack.c.h.b16 %v271
  %v2147 = vunpack.c.l.b16 %v272
  %v2148 = vunpack.c.h.b16 %v272
  %v2149 = vunpack.c.l.b16 %v273
  %v2150 = vunpack.c.h.b16 %v273
  %v2151 = vunpack.c.l.b16 %v274
  %v2152 = vunpack.c.h.b16 %v274
  %v2153 = vunpack.c.l.b16 %v275
  %v2154 = vunpack.c.h.b16 %v275
  %v2155 = vunpack.c.l.b16 %v276
  %v2156 = vunpack.c.h.b16 %v276
  %v2157 = vunpack.c.l.b16 %v277
  %v2158 = vunpack.c.h.b16 %v277
  %v2159 = vunpack.c.l.b16 %v278
  %v2160 = vunpack.c.h.b16 %v278
  %v2161 = vunpack.c.l.b16 %v279
  %v2162 = vunpack.c.h.b16 %v279
  %v2163 = vunpack.c.l.b16 %v280
  %v2164 = vunpack.c.h.b16 %v280
  %v2165 = vunpack.c.l.b16 %v281
  %v2166 = vunpack.c.h.b16 %v281
  %v2167 = vunpack.c.l.b16 %v282
  %v2168 = vunpack.c.h.b16 %v282
  %v2169 = vunpack.c.l.b16 %v283
  %v2170 = vunpack.c.h.b16 %v283
  %v2171 = vunpack.c.l.b16 %v284
  %v2172 = vunpack.c.h.b16 %v284
  %v2173 = vunpack.c.l.b16 %v285
  %v2174 = vunpack.c.h.b16 %v285
  %v2175 = vunpack.c.l.b16 %v286
  %v2176 = vunpack.c.h.b16 %v286
  %v2177 = vunpack.c.l.b16 %v287
  %v2178 = vunpack.c.h.b16 %v287
  %v2179 = vunpack.c.l.b16 %v288
  %v2180 = vunpack.c.h.b16 %v288
  %v2181 = vunpack.c.l.b16 %v289
  %v2182 = vunpack.c.h.b16 %v289
  %v2183 = vunpack.c.l.b16 %v290
  %v2184 = vunpack.c.h.b16 %v290
  %v2185 = vunpack.c.l.b16 %v291
  %v2186 = vunpack.c.h.b16 %v291
  %v2187 = vunpack.c.l.b16 %v292
  %v2188 = vunpack.c.h.b16 %v292
  %v2189 = vunpack.c.l.b16 %v293
  %v2190 = vunpack.c.h.b16 %v293
  %v2191 = vunpack.c.l.b16 %v294
  %v2192 = vunpack.c.h.b16 %v294
  %v2193 = vunpack.c.l.b16 %v295
  %v2194 = vunpack.c.h.b16 %v295
  %v2195 = vunpack.c.l.b16 %v296
  %v2196 = vunpack.c.h.b16 %v296
  %v2197 = vunpack.c.l.b16 %v297
  %v2198 = vunpack.c.h.b16 %v297
  %v2199 = vunpack.c.l.b16 %v298
  %v2200 = vunpack.c.h.b16 %v298
  %v2201 = vunpack.c.l.b16 %v299
  %v2202 = vunpack.c.h.b16 %v299
  %v2203 = vunpack.c.l.b16 %v300
  %v2204 = vunpack.c.h.b16 %v300
  %v2205 = vunpack.c.l.b16 %v301
  %v2206 = vunpack.c.h.b16 %v301
  %v2207 = vunpack.c.l.b16 %v302
  %v2208 = vunpack.c.h.b16 %v302
  %v2209 = vunpack.c.l.b16 %v303
  %v2210 = vunpack.c.h.b16 %v303
  %v2211 = vunpack.c.l.b16 %v304
  %v2212 = vunpack.c.h.b16 %v304
  %v2213 = vunpack.c.l.b16 %v305
  %v2214 = vunpack.c.h.b16 %v305
  %v2215 = vunpack.c.l.b16 %v306
  %v2216 = vunpack.c.h.b16 %v306
  %v2217 = vunpack.c.l.b16 %v307
  %v2218 = vunpack.c.h.b16 %v307
  %v2219 = vunpack.c.l.b16 %v308
  %v2220 = vunpack.c.h.b16 %v308
  %v2221 = vunpack.c.l.b16 %v309
  %v2222 = vunpack.c.h.b16 %v309
  %v2223 = vunpack.c.l.b16 %v310
  %v2224 = vunpack.c.h.b16 %v310
  %v2225 = vunpack.c.l.b16 %v311
  %v2226 = vunpack.c.h.b16 %v311
  %v2227 = vunpack.c.l.b16 %v312
  %v2228 = vunpack.c.h.b16 %v312
  %v2229 = vunpack.c.l.b16 %v313
  %v2230 = vunpack.c.h.b16 %v313
  %v2231 = vunpack.c.l.b16 %v314
  %v2232 = vunpack.c.h.b16 %v314
  %v2233 = vunpack.c.l.b16 %v315
  %v2234 = vunpack.c.h.b16 %v315
  %v2235 = vunpack.c.l.b16 %v316
  %v2236 = vunpack.c.h.b16 %v316
  %v2237 = vunpack.c.l.b16 %v317
  %v2238 = vunpack.c.h.b16 %v317
  %v2239 = vunpack.c.l.b16 %v318
  %v2240 = vunpack.c.h.b16 %v318
  %v2241 = vunpack.c.l.b16 %v319
  %v2242 = vunpack.c.h.b16 %v319
  %v2243 = vunpack.c.l.b16 %v320
  %v2244 = vunpack.c.h.b16 %v320
  %v2245 = vunpack.c.l.b16 %v321
  %v2246 = vunpack.c.h.b16 %v321
  %v2247 = vunpack.c.l.b16 %v322
  %v2248 = vunpack.c.h.b16 %v322
  %v2249 = vunpack.c.l.b16 %v323
  %v2250 = vunpack.c.h.b16 %v323
  %v2251 = vunpack.c.l.b16 %v324
  %v2252 = vunpack.c.h.b16 %v324
  %v2253 = vunpack.c.l.b16 %v325
  %v2254 = vunpack.c.h.b16 %v325
  %v2255 = vunpack.c.l.b16 %v326
  %v2256 = vunpack.c.h.b16 %v326
  %v2257 = vunpack.c.l.b16 %v327
  %v2258 = vunpack.c.h.b16 %v327
  %v2259 = vunpack.c.l.b16 %v328
  %v2260 = vunpack.c.h.b16 %v328
  %v2261 = vunpack.c.l.b16 %v329
  %v2262 = vunpack.c.h.b16 %v329
  %v2263 = vunpack.c.l.b16 %v330
  %v2264 = vunpack.c.h.b16 %v330
  %v2265 = vunpack.c.l.b16 %v331
  %v2266 = vunpack.c.h.b16 %v331
  %v2267 = vunpack.c.l.b16 %v332
  %v2268 = vunpack.c.h.b16 %v332
  %v2269 = vunpack.c.l.b16 %v333
  %v2270 = vunpack.c.h.b16 %v333
  %v2271 = vunpack.c.l.b16 %v334
  %v2272 = vunpack.c.h.b16 %v334
  %v2273 = vunpack.c.l.b16 %v335
  %v2274 = vunpack.c.h.b16 %v335
  %v2275 = vunpack.c.l.b16 %v336
  %v2276 = vunpack.c.h.b16 %v336
  %v2277 = vunpack.c.l.b16 %v337
  %v2278 = vunpack.c.h.b16 %v337
  %v2279 = vunpack.c.l.b16 %v338
  %v2280 = vunpack.c.h.b16 %v338
  %v2281 = vunpack.c.l.b16 %v339
  %v2282 = vunpack.c.h.b16 %v339
  %v2283 = vunpack.c.l.b16 %v340
  %v2284 = vunpack.c.h.b16 %v340
  %v2285 = vunpack.c.l.b16 %v341
  %v2286 = vunpack.c.h.b16 %v341
  %v2287 = vunpack.c.l.b16 %v342
  %v2288 = vunpack.c.h.b16 %v342
  %v2289 = vunpack.c.l.b16 %v343
  %v2290 = vunpack.c.h.b16 %v343
  %v2291 = vunpack.c.l.b16 %v344
  %v2292 = vunpack.c.h.b16 %v344
  %v2293 = vunpack.c.l.b16 %v345
  %v2294 = vunpack.c.h.b16 %v345
  %v2295 = vunpack.c.l.b16 %v346
  %v2296 = vunpack.c.h.b16 %v346
  %v2297 = vunpack.c.l.b16 %v347
  %v2298 = vunpack.c.h.b16 %v347
  %v2299 = vunpack.c.l.b16 %v348
  %v2300 = vunpack.c.h.b16 %v348
  %v2301 = vunpack.c.l.b16 %v349
  %v2302 = vunpack.c.h.b16 %v349
  %v2303 = vunpack.c.l.b16 %v350
  %v2304 = vunpack.c.h.b16 %v350
  %v2305 = vunpack.c.l.b16 %v351
  %v2306 = vunpack.c.h.b16 %v351
  %v2307 = vunpack.c.l.b16 %v352
  %v2308 = vunpack.c.h.b16 %v352
  %v2309 = vunpack.c.l.b16 %v353
  %v2310 = vunpack.c.h.b16 %v353
  %v2311 = vunpack.c.l.b16 %v354
  %v2312 = vunpack.c.h.b16 %v354
  %v2313 = vunpack.c.l.b16 %v355
  %v2314 = vunpack.c.h.b16 %v355
  %v2315 = vunpack.c.l.b16 %v356
  %v2316 = vunpack.c.h.b16 %v356
  %v2317 = vunpack.c.l.b16 %v357
  %v2318 = vunpack.c.h.b16 %v357
  %v2319 = vunpack.c.l.b16 %v358
  %v2320 = vunpack.c.h.b16 %v358
  %v2321 = vunpack.c.l.b16 %v359
  %v2322 = vunpack.c.h.b16 %v359
  %v2323 = vunpack.c.l.b16 %v360
  %v2324 = vunpack.c.h.b16 %v360
  %v2325 = vunpack.c.l.b16 %v361
  %v2326 = vunpack.c.h.b16 %v361
  %v2327 = vunpack.c.l.b16 %v362
  %v2328 = vunpack.c.h.b16 %v362
  %v2329 = vunpack.c.l.b16 %v363
  %v2330 = vunpack.c.h.b16 %v363
  %v2331 = vunpack.c.l.b16 %v364
  %v2332 = vunpack.c.h.b16 %v364
  %v2333 = vunpack.c.l.b16 %v365
  %v2334 = vunpack.c.h.b16 %v365
  %v2335 = vunpack.c.l.b16 %v366
  %v2336 = vunpack.c.h.b16 %v366
  %v2337 = vunpack.c.l.b16 %v367
  %v2338 = vunpack.c.h.b16 %v367
  %v2339 = vunpack.c.l.b16 %v368
  %v2340 = vunpack.c.h.b16 %v368
  %v2341 = vunpack.c.l.b16 %v369
  %v2342 = vunpack.c.h.b16 %v369
  %v2343 = vunpack.c.l.b16 %v370
  %v2344 = vunpack.c.h.b16 %v370
  %v2345 = vunpack.c.l.b16 %v371
  %v2346 = vunpack.c.h.b16 %v371
  %v2347 = vunpack.c.l.b16 %v372
  %v2348 = vunpack.c.h.b16 %v372
  %v2349 = vunpack.c.l.b16 %v373
  %v2350 = vunpack.c.h.b16 %v373
  %v2351 = vunpack.c.l.b16 %v374
  %v2352 = vunpack.c.h.b16 %v374
  %v2353 = vunpack.c.l.b16 %v375
  %v2354 = vunpack.c.h.b16 %v375
  %v2355 = vunpack.c.l.b16 %v376
  %v2356 = vunpack.c.h.b16 %v376
  %v2357 = vunpack.c.l.b16 %v377
  %v2358 = vunpack.c.h.b16 %v377
  %v2359 = vunpack.c.l.b16 %v378
  %v2360 = vunpack.c.h.b16 %v378
  %v2361 = vunpack.c.l.b16 %v379
  %v2362 = vunpack.c.h.b16 %v379
  %v2363 = vunpack.c.l.b16 %v380
  %v2364 = vunpack.c.h.b16 %v380
  %v2365 = vunpack.c.l.b16 %v381
  %v2366 = vunpack.c.h.b16 %v381
  %v2367 = vunpack.c.l.b16 %v382
  %v2368 = vunpack.c.h.b16 %v382
  %v2369 = vunpack.c.l.b16 %v383
  %v2370 = vunpack.c.h.b16 %v383
  %v2371 = vunpack.c.l.b16 %v384
  %v2372 = vunpack.c.h.b16 %v384
  %v2373 = vunpack.c.l.b16 %v385
  %v2374 = vunpack.c.h.b16 %v385
  %v2375 = vunpack.c.l.b16 %v386
  %v2376 = vunpack.c.h.b16 %v386
  %v2377 = vunpack.c.l.b16 %v387
  %v2378 = vunpack.c.h.b16 %v387
  %v2379 = vunpack.c.l.b16 %v388
  %v2380 = vunpack.c.h.b16 %v388
  %v2381 = vunpack.c.l.b16 %v389
  %v2382 = vunpack.c.h.b16 %v389
  %v2383 = vunpack.c.l.b16 %v390
  %v2384 = vunpack.c.h.b16 %v390
  %v2385 = vunpack.c.l.b16 %v391
  %v2386 = vunpack.c.h.b16 %v391
  %v2387 = vunpack.c.l.b16 %v392
  %v2388 = vunpack.c.h.b16 %v392
  %v2389 = vunpack.c.l.b16 %v393
  %v2390 = vunpack.c.h.b16 %v393
  %v2391 = vunpack.c.l.b16 %v394
  %v2392 = vunpack.c.h.b16 %v394
  %v2393 = vunpack.c.l.b16 %v395
  %v2394 = vunpack.c.h.b16 %v395
  %v2395 = vunpack.c.l.b16 %v396
  %v2396 = vunpack.c.h.b16 %v396
  %v2397 = vunpack.c.l.b16 %v397
  %v2398 = vunpack.c.h.b16 %v397
  %v2399 = vunpack.c.l.b16 %v398
  %v2400 = vunpack.c.h.b16 %v398
  %v2401 = vunpack.c.l.b16 %v399
  %v2402 = vunpack.c.h.b16 %v399
  %v2403 = vunpack.c.l.b16 %v400
  %v2404 = vunpack.c.h.b16 %v400
  %v2405 = vunpack.c.l.b16 %v401
  %v2406 = vunpack.c.h.b16 %v401
  %v2407 = vunpack.c.l.b16 %v402
  %v2408 = vunpack.c.h.b16 %v402
  %v2409 = vunpack.c.l.b16 %v403
  %v2410 = vunpack.c.h.b16 %v403
  %v2411 = vunpack.c.l.b16 %v404
  %v2412 = vunpack.c.h.b16 %v404
  %v2413 = vunpack.c.l.b16 %v405
  %v2414 = vunpack.c.h.b16 %v405
  %v2415 = vunpack.c.l.b16 %v406
  %v2416 = vunpack.c.h.b16 %v406
  %v2417 = vunpack.c.l.b16 %v407
  %v2418 = vunpack.c.h.b16 %v407
  %v2419 = vunpack.c.l.b16 %v408
  %v2420 = vunpack.c.h.b16 %v408
  %v2421 = vunpack.c.l.b16 %v409
  %v2422 = vunpack.c.h.b16 %v409
  %v2423 = vunpack.c.l.b16 %v410
  %v2424 = vunpack.c.h.b16 %v410
  %v2425 = vunpack.c.l.b16 %v411
  %v2426 = vunpack.c.h.b16 %v411
  %v2427 = vunpack.c.l.b16 %v412
  %v2428 = vunpack.c.h.b16 %v412
  %v2429 = vunpack.c.l.b16 %v413
  %v2430 = vunpack.c.h.b16 %v413
  %v2431 = vunpack.c.l.b16 %v414
  %v2432 = vunpack.c.h.b16 %v414
  %v2433 = vunpack.c.l.b16 %v415
  %v2434 = vunpack.c.h.b16 %v415
  %v2435 = vunpack.c.l.b16 %v416
  %v2436 = vunpack.c.h.b16 %v416
  %v2437 = vunpack.c.l.b16 %v417
  %v2438 = vunpack.c.h.b16 %v417
  %v2439 = vunpack.c.l.b16 %v418
  %v2440 = vunpack.c.h.b16 %v418
  %v2441 = vunpack.c.l.b16 %v419
  %v2442 = vunpack.c.h.b16 %v419
  %v2443 = vunpack.c.l.b16 %v420
  %v2444 = vunpack.c.h.b16 %v420
  %v2445 = vunpack.c.l.b16 %v421
  %v2446 = vunpack.c.h.b16 %v421
  %v2447 = vunpack.c.l.b16 %v422
  %v2448 = vunpack.c.h.b16 %v422
  %v2449 = vunpack.c.l.b16 %v423
  %v2450 = vunpack.c.h.b16 %v423
  %v2451 = vunpack.c.l.b16 %v424
  %v2452 = vunpack.c.h.b16 %v424
  %v2453 = vunpack.c.l.b16 %v425
  %v2454 = vunpack.c.h.b16 %v425
  %v2455 = vunpack.c.l.b16 %v426
  %v2456 = vunpack.c.h.b16 %v426
  %v2457 = vunpack.c.l.b16 %v427
  %v2458 = vunpack.c.h.b16 %v427
  %v2459 = vunpack.c.l.b16 %v428
  %v2460 = vunpack.c.h.b16 %v428
  %v2461 = vunpack.c.l.b16 %v429
  %v2462 = vunpack.c.h.b16 %v429
  %v2463 = vunpack.c.l.b16 %v430
  %v2464 = vunpack.c.h.b16 %v430
  %v2465 = vunpack.c.l.b16 %v431
  %v2466 = vunpack.c.h.b16 %v431
  %v2467 = vunpack.c.l.b16 %v432
  %v2468 = vunpack.c.h.b16 %v432
  %v2469 = vunpack.c.l.b16 %v433
  %v2470 = vunpack.c.h.b16 %v433
  %v2471 = vunpack.c.l.b16 %v434
  %v2472 = vunpack.c.h.b16 %v434
  %v2473 = vunpack.c.l.b16 %v435
  %v2474 = vunpack.c.h.b16 %v435
  %v2475 = vunpack.c.l.b16 %v436
  %v2476 = vunpack.c.h.b16 %v436
  %v2477 = vunpack.c.l.b16 %v437
  %v2478 = vunpack.c.h.b16 %v437
  %v2479 = vunpack.c.l.b16 %v438
  %v2480 = vunpack.c.h.b16 %v438
  %v2481 = vunpack.c.l.b16 %v439
  %v2482 = vunpack.c.h.b16 %v439
  %v2483 = vunpack.c.l.b16 %v440
  %v2484 = vunpack.c.h.b16 %v440
  %v2485 = vunpack.c.l.b16 %v441
  %v2486 = vunpack.c.h.b16 %v441
  %v2487 = vunpack.c.l.b16 %v442
  %v2488 = vunpack.c.h.b16 %v442
  %v2489 = vunpack.c.l.b16 %v443
  %v2490 = vunpack.c.h.b16 %v443
  %v2491 = vunpack.c.l.b16 %v444
  %v2492 = vunpack.c.h.b16 %v444
  %v2493 = vunpack.c.l.b16 %v445
  %v2494 = vunpack.c.h.b16 %v445
  %v2495 = vunpack.c.l.b16 %v446
  %v2496 = vunpack.c.h.b16 %v446
  %v2497 = vunpack.c.l.b16 %v447
  %v2498 = vunpack.c.h.b16 %v447
  %v2499 = vunpack.c.l.b16 %v448
  %v2500 = vunpack.c.h.b16 %v448
  %v2501 = vunpack.c.l.b16 %v449
  %v2502 = vunpack.c.h.b16 %v449
  %v2503 = vunpack.c.l.b16 %v450
  %v2504 = vunpack.c.h.b16 %v450
  %v2505 = vunpack.c.l.b16 %v451
  %v2506 = vunpack.c.h.b16 %v451
  %v2507 = vunpack.c.l.b16 %v452
  %v2508 = vunpack.c.h.b16 %v452
  %v2509 = vunpack.c.l.b16 %v453
  %v2510 = vunpack.c.h.b16 %v453
  %v2511 = vunpack.c.l.b16 %v454
  %v2512 = vunpack.c.h.b16 %v454
  %v2513 = vunpack.c.l.b16 %v455
  %v2514 = vunpack.c.h.b16 %v455
  %v2515 = vunpack.c.l.b16 %v456
  %v2516 = vunpack.c.h.b16 %v456
  %v2517 = vunpack.c.l.b16 %v457
  %v2518 = vunpack.c.h.b16 %v457
  %v2519 = vunpack.c.l.b16 %v458
  %v2520 = vunpack.c.h.b16 %v458
  %v2521 = vunpack.c.l.b16 %v459
  %v2522 = vunpack.c.h.b16 %v459
  %v2523 = vunpack.c.l.b16 %v460
  %v2524 = vunpack.c.h.b16 %v460
  %v2525 = vunpack.c.l.b16 %v461
  %v2526 = vunpack.c.h.b16 %v461
  %v2527 = vunpack.c.l.b16 %v462
  %v2528 = vunpack.c.h.b16 %v462
  %v2529 = vunpack.c.l.b16 %v463
  %v2530 = vunpack.c.h.b16 %v463
  %v2531 = vunpack.c.l.b16 %v464
  %v2532 = vunpack.c.h.b16 %v464
  %v2533 = vunpack.c.l.b16 %v465
  %v2534 = vunpack.c.h.b16 %v465
  %v2535 = vunpack.c.l.b16 %v466
  %v2536 = vunpack.c.h.b16 %v466
  %v2537 = vunpack.c.l.b16 %v467
  %v2538 = vunpack.c.h.b16 %v467
  %v2539 = vunpack.c.l.b16 %v468
  %v2540 = vunpack.c.h.b16 %v468
  %v2541 = vunpack.c.l.b16 %v469
  %v2542 = vunpack.c.h.b16 %v469
  %v2543 = vunpack.c.l.b16 %v470
  %v2544 = vunpack.c.h.b16 %v470
  %v2545 = vunpack.c.l.b16 %v471
  %v2546 = vunpack.c.h.b16 %v471
  %v2547 = vunpack.c.l.b16 %v472
  %v2548 = vunpack.c.h.b16 %v472
  %v2549 = vunpack.c.l.b16 %v473
  %v2550 = vunpack.c.h.b16 %v473
  %v2551 = vunpack.c.l.b16 %v474
  %v2552 = vunpack.c.h.b16 %v474
  %v2553 = vunpack.c.l.b16 %v475
  %v2554 = vunpack.c.h.b16 %v475
  %v2555 = vunpack.c.l.b16 %v476
  %v2556 = vunpack.c.h.b16 %v476
  %v2557 = vunpack.c.l.b16 %v477
  %v2558 = vunpack.c.h.b16 %v477
  %v2559 = vunpack.c.l.b16 %v478
  %v2560 = vunpack.c.h.b16 %v478
  %v2561 = vunpack.c.l.b16 %v479
  %v2562 = vunpack.c.h.b16 %v479
  %v2563 = vunpack.c.l.b16 %v480
  %v2564 = vunpack.c.h.b16 %v480
  %v2565 = vunpack.c.l.b16 %v481
  %v2566 = vunpack.c.h.b16 %v481
  %v2567 = vunpack.c.l.b16 %v482
  %v2568 = vunpack.c.h.b16 %v482
  %v2569 = vunpack.c.l.b16 %v483
  %v2570 = vunpack.c.h.b16 %v483
  %v2571 = vunpack.c.l.b16 %v484
  %v2572 = vunpack.c.h.b16 %v484
  %v2573 = vunpack.c.l.b16 %v485
  %v2574 = vunpack.c.h.b16 %v485
  %v2575 = vunpack.c.l.b16 %v486
  %v2576 = vunpack.c.h.b16 %v486
  %v2577 = vunpack.c.l.b16 %v487
  %v2578 = vunpack.c.h.b16 %v487
  %v2579 = vunpack.c.l.b16 %v488
  %v2580 = vunpack.c.h.b16 %v488
  %v2581 = vunpack.c.l.b16 %v489
  %v2582 = vunpack.c.h.b16 %v489
  %v2583 = vunpack.c.l.b16 %v490
  %v2584 = vunpack.c.h.b16 %v490
  %v2585 = vunpack.c.l.b16 %v491
  %v2586 = vunpack.c.h.b16 %v491
  %v2587 = vunpack.c.l.b16 %v492
  %v2588 = vunpack.c.h.b16 %v492
  %v2589 = vunpack.c.l.b16 %v493
  %v2590 = vunpack.c.h.b16 %v493
  %v2591 = vunpack.c.l.b16 %v494
  %v2592 = vunpack.c.h.b16 %v494
  %v2593 = vunpack.c.l.b16 %v495
  %v2594 = vunpack.c.h.b16 %v495
  %v2595 = vunpack.c.l.b16 %v496
  %v2596 = vunpack.c.h.b16 %v496
  %v2597 = vunpack.c.l.b16 %v497
  %v2598 = vunpack.c.h.b16 %v497
  %v2599 = vunpack.c.l.b16 %v498
  %v2600 = vunpack.c.h.b16 %v498
  %v2601 = vunpack.c.l.b16 %v499
  %v2602 = vunpack.c.h.b16 %v499
  %v2603 = vunpack.c.l.b16 %v500
  %v2604 = vunpack.c.h.b16 %v500
  %v2605 = vunpack.c.l.b16 %v501
  %v2606 = vunpack.c.h.b16 %v501
  %v2607 = vunpack.c.l.b16 %v502
  %v2608 = vunpack.c.h.b16 %v502
  %v2609 = vunpack.c.l.b16 %v503
  %v2610 = vunpack.c.h.b16 %v503
  %v2611 = vunpack.c.l.b16 %v504
  %v2612 = vunpack.c.h.b16 %v504
  %v2613 = vunpack.c.l.b16 %v505
  %v2614 = vunpack.c.h.b16 %v505
  %v2615 = vunpack.c.l.b16 %v506
  %v2616 = vunpack.c.h.b16 %v506
  %v2617 = vunpack.c.l.b16 %v507
  %v2618 = vunpack.c.h.b16 %v507
  %v2619 = vunpack.c.l.b16 %v508
  %v2620 = vunpack.c.h.b16 %v508
  %v2621 = vunpack.c.l.b16 %v509
  %v2622 = vunpack.c.h.b16 %v509
  %v2623 = vunpack.c.l.b16 %v510
  %v2624 = vunpack.c.h.b16 %v510
  %v2625 = vunpack.c.l.b16 %v511
  %v2626 = vunpack.c.h.b16 %v511
  %v2627 = vunpack.c.l.b16 %v512
  %v2628 = vunpack.c.h.b16 %v512
  %v2629 = vunpack.c.l.b16 %v513
  %v2630 = vunpack.c.h.b16 %v513
  %v2631 = vunpack.c.l.b16 %v514
  %v2632 = vunpack.c.h.b16 %v514
  %v2633 = vunpack.c.l.b16 %v515
  %v2634 = vunpack.c.h.b16 %v515
  %v2635 = vunpack.c.l.b16 %v516
  %v2636 = vunpack.c.h.b16 %v516
  %v2637 = vunpack.c.l.b16 %v517
  %v2638 = vunpack.c.h.b16 %v517
  %v2639 = vunpack.c.l.b16 %v518
  %v2640 = vunpack.c.h.b16 %v518
  %v2641 = vunpack.c.l.b16 %v519
  %v2642 = vunpack.c.h.b16 %v519
  %v2643 = vunpack.c.l.b16 %v520
  %v2644 = vunpack.c.h.b16 %v520
  %v2645 = vunpack.c.l.b16 %v521
  %v2646 = vunpack.c.h.b16 %v521
  %v2647 = vunpack.c.l.b16 %v522
  %v2648 = vunpack.c.h.b16 %v522
  %v2649 = vunpack.c.l.b16 %v523
  %v2650 = vunpack.c.h.b16 %v523
  %v2651 = vunpack.c.l.b16 %v524
  %v2652 = vunpack.c.h.b16 %v524
  %v2653 = vunpack.c.l.b16 %v525
  %v2654 = vunpack.c.h.b16 %v525
  %v2655 = vunpack.c.l.b16 %v526
  %v2656 = vunpack.c.h.b16 %v526
  %v2657 = vunpack.c.l.b16 %v527
  %v2658 = vunpack.c.h.b16 %v527
  %v2659 = vunpack.c.l.b16 %v528
  %v2660 = vunpack.c.h.b16 %v528
  %v2661 = vunpack.c.l.b16 %v529
  %v2662 = vunpack.c.h.b16 %v529
  %v2663 = vunpack.c.l.b16 %v530
  %v2664 = vunpack.c.h.b16 %v530
  %v2665 = vunpack.c.l.b16 %v531
  %v2666 = vunpack.c.h.b16 %v531
  %v2667 = vunpack.c.l.b16 %v532
  %v2668 = vunpack.c.h.b16 %v532
  %v2669 = vunpack.c.l.b16 %v533
  %v2670 = vunpack.c.h.b16 %v533
  %v2671 = vunpack.c.l.b16 %v534
  %v2672 = vunpack.c.h.b16 %v534
  %v2673 = vunpack.c.l.b16 %v535
  %v2674 = vunpack.c.h.b16 %v535
  %v2675 = vunpack.c.l.b16 %v536
  %v2676 = vunpack.c.h.b16 %v536
  %v2677 = vunpack.c.l.b16 %v537
  %v2678 = vunpack.c.h.b16 %v537
  %v2679 = vunpack.c.l.b16 %v538
  %v2680 = vunpack.c.h.b16 %v538
  %v2681 = vunpack.c.l.b16 %v539
  %v2682 = vunpack.c.h.b16 %v539
  %v2683 = vunpack.c.l.b16 %v540
  %v2684 = vunpack.c.h.b16 %v540
  %v2685 = vunpack.c.l.b16 %v541
  %v2686 = vunpack.c.h.b16 %v541
  %v2687 = vunpack.c.l.b16 %v542
  %v2688 = vunpack.c.h.b16 %v542
  %v2689 = vunpack.c.l.b16 %v543
  %v2690 = vunpack.c.h.b16 %v543
  %v2691 = vunpack.c.l.b16 %v544
  %v2692 = vunpack.c.h.b16 %v544
  %v2693 = vunpack.c.l.b16 %v545
  %v2694 = vunpack.c.h.b16 %v545
  %v2695 = vunpack.c.l.b16 %v546
  %v2696 = vunpack.c.h.b16 %v546
  %v2697 = vunpack.c.l.b16 %v547
  %v2698 = vunpack.c.h.b16 %v547
  %v2699 = vunpack.c.l.b16 %v548
  %v2700 = vunpack.c.h.b16 %v548
  %v2701 = vunpack.c.l.b16 %v549
  %v2702 = vunpack.c.h.b16 %v549
  %v2703 = vunpack.c.l.b16 %v550
  %v2704 = vunpack.c.h.b16 %v550
  %v2705 = vunpack.c.l.b16 %v551
  %v2706 = vunpack.c.h.b16 %v551
  %v2707 = vunpack.c.l.b16 %v552
  %v2708 = vunpack.c.h.b16 %v552
  %v2709 = vunpack.c.l.b16 %v553
  %v2710 = vunpack.c.h.b16 %v553
  %v2711 = vunpack.c.l.b16 %v554
  %v2712 = vunpack.c.h.b16 %v554
  %v2713 = vunpack.c.l.b16 %v555
  %v2714 = vunpack.c.h.b16 %v555
  %v2715 = vunpack.c.l.b16 %v556
  %v2716 = vunpack.c.h.b16 %v556
  %v2717 = vunpack.c.l.b16 %v557
  %v2718 = vunpack.c.h.b16 %v557
  %v2719 = vunpack.c.l.b16 %v558
  %v2720 = vunpack.c.h.b16 %v558
  %v2721 = vunpack.c.l.b16 %v559
  %v2722 = vunpack.c.h.b16 %v559
  %v2723 = vunpack.c.l.b16 %v560
  %v2724 = vunpack.c.h.b16 %v560
  %v2725 = vunpack.c.l.b16 %v561
  %v2726 = vunpack.c.h.b16 %v561
  %v2727 = vunpack.c.l.b16 %v562
  %v2728 = vunpack.c.h.b16 %v562
  %v2729 = vunpack.c.l.b16 %v563
  %v2730 = vunpack.c.h.b16 %v563
  %v2731 = vunpack.c.l.b16 %v564
  %v2732 = vunpack.c.h.b16 %v564
  %v2733 = vunpack.c.l.b16 %v565
  %v2734 = vunpack.c.h.b16 %v565
  %v2735 = vunpack.c.l.b16 %v566
  %v2736 = vunpack.c.h.b16 %v566
  %v2737 = vunpack.c.l.b16 %v567
  %v2738 = vunpack.c.h.b16 %v567
  %v2739 = vunpack.c.l.b16 %v568
  %v2740 = vunpack.c.h.b16 %v568
  %v2741 = vunpack.c.l.b16 %v569
  %v2742 = vunpack.c.h.b16 %v569
  %v2743 = vunpack.c.l.b16 %v570
  %v2744 = vunpack.c.h.b16 %v570
  %v2745 = vunpack.c.l.b16 %v571
  %v2746 = vunpack.c.h.b16 %v571
  %v2747 = vunpack.c.l.b16 %v572
  %v2748 = vunpack.c.h.b16 %v572
  %v2749 = vunpack.c.l.b16 %v573
  %v2750 = vunpack.c.h.b16 %v573
  %v2751 = vunpack.c.l.b16 %v574
  %v2752 = vunpack.c.h.b16 %v574
  %v2753 = vunpack.c.l.b16 %v575
  %v2754 = vunpack.c.h.b16 %v575
  %v2755 = vunpack.c.l.b16 %v576
  %v2756 = vunpack.c.h.b16 %v576
  %v2757 = vunpack.c.l.b16 %v577
  %v2758 = vunpack.c.h.b16 %v577
  %v2759 = vunpack.c.l.b16 %v578
  %v2760 = vunpack.c.h.b16 %v578
  %v2761 = vunpack.c.l.b16 %v579
  %v2762 = vunpack.c.h.b16 %v579
  %v2763 = vunpack.c.l.b16 %v580
  %v2764 = vunpack.c.h.b16 %v580
  %v2765 = vunpack.c.l.b16 %v581
  %v2766 = vunpack.c.h.b16 %v581
  %v2767 = vunpack.c.l.b16 %v582
  %v2768 = vunpack.c.h.b16 %v582
  %v2769 = vunpack.c.l.b16 %v583
  %v2770 = vunpack.c.h.b16 %v583
  %v2771 = vunpack.c.l.b16 %v584
  %v2772 = vunpack.c.h.b16 %v584
  %v2773 = vunpack.c.l.b16 %v585
  %v2774 = vunpack.c.h.b16 %v585
  %v2775 = vunpack.c.l.b16 %v586
  %v2776 = vunpack.c.h.b16 %v586
  %v2777 = vunpack.c.l.b16 %v587
  %v2778 = vunpack.c.h.b16 %v587
  %v2779 = vunpack.c.l.b16 %v588
  %v2780 = vunpack.c.h.b16 %v588
  %v2781 = vunpack.c.l.b16 %v589
  %v2782 = vunpack.c.h.b16 %v589
  %v2783 = vunpack.c.l.b16 %v590
  %v2784 = vunpack.c.h.b16 %v590
  %v2785 = vunpack.c.l.b16 %v591
  %v2786 = vunpack.c.h.b16 %v591
  %v2787 = vunpack.c.l.b16 %v592
  %v2788 = vunpack.c.h.b16 %v592
  %v2789 = vunpack.c.l.b16 %v593
  %v2790 = vunpack.c.h.b16 %v593
  %v2791 = vunpack.c.l.b16 %v594
  %v2792 = vunpack.c.h.b16 %v594
  %v2793 = vunpack.c.l.b16 %v595
  %v2794 = vunpack.c.h.b16 %v595
  %v2795 = vunpack.c.l.b16 %v596
  %v2796 = vunpack.c.h.b16 %v596
  %v2797 = vunpack.c.l.b16 %v597
  %v2798 = vunpack.c.h.b16 %v597
  %v2799 = vunpack.c.l.b16 %v598
  %v2800 = vunpack.c.h.b16 %v598
  %v2801 = vunpack.c.l.b16 %v599
  %v2802 = vunpack.c.h.b16 %v599
  %v2803 = vunpack.c.l.b16 %v600
  %v2804 = vunpack.c.h.b16 %v600
  %v2805 = vunpack.c.l.b16 %v601
  %v2806 = vunpack.c.h.b16 %v601
  %v2807 = vunpack.c.l.b16 %v602
  %v2808 = vunpack.c.h.b16 %v602
  %v2809 = vunpack.c.l.b16 %v603
  %v2810 = vunpack.c.h.b16 %v603
  %v2811 = vunpack.c.l.b16 %v604
  %v2812 = vunpack.c.h.b16 %v604
  %v2813 = vunpack.c.l.b16 %v605
  %v2814 = vunpack.c.h.b16 %v605
  %v2815 = vunpack.c.l.b16 %v606
  %v2816 = vunpack.c.h.b16 %v606
  %v2817 = vunpack.c.l.b16 %v607
  %v2818 = vunpack.c.h.b16 %v607
  %v2819 = vunpack.c.l.b16 %v608
  %v2820 = vunpack.c.h.b16 %v608
  %v2821 = vunpack.c.l.b16 %v609
  %v2822 = vunpack.c.h.b16 %v609
  %v2823 = vunpack.c.l.b16 %v610
  %v2824 = vunpack.c.h.b16 %v610
  %v2825 = vunpack.c.l.b16 %v611
  %v2826 = vunpack.c.h.b16 %v611
  %v2827 = vunpack.c.l.b16 %v612
  %v2828 = vunpack.c.h.b16 %v612
  %v2829 = vunpack.c.l.b16 %v613
  %v2830 = vunpack.c.h.b16 %v613
  %v2831 = vunpack.c.l.b16 %v614
  %v2832 = vunpack.c.h.b16 %v614
  %v2833 = vunpack.c.l.b16 %v615
  %v2834 = vunpack.c.h.b16 %v615
  %v2835 = vunpack.c.l.b16 %v616
  %v2836 = vunpack.c.h.b16 %v616
  %v2837 = vunpack.c.l.b16 %v617
  %v2838 = vunpack.c.h.b16 %v617
  %v2839 = vunpack.c.l.b16 %v618
  %v2840 = vunpack.c.h.b16 %v618
  %v2841 = vunpack.c.l.b16 %v619
  %v2842 = vunpack.c.h.b16 %v619
  %v2843 = vunpack.c.l.b16 %v620
  %v2844 = vunpack.c.h.b16 %v620
  %v2845 = vunpack.c.l.b16 %v621
  %v2846 = vunpack.c.h.b16 %v621
  %v2847 = vunpack.c.l.b16 %v622
  %v2848 = vunpack.c.h.b16 %v622
  %v2849 = vunpack.c.l.b16 %v623
  %v2850 = vunpack.c.h.b16 %v623
  %v2851 = vunpack.c.l.b16 %v624
  %v2852 = vunpack.c.h.b16 %v624
  %v2853 = vunpack.c.l.b16 %v625
  %v2854 = vunpack.c.h.b16 %v625
  %v2855 = vunpack.c.l.b16 %v626
  %v2856 = vunpack.c.h.b16 %v626
  %v2857 = vunpack.c.l.b16 %v627
  %v2858 = vunpack.c.h.b16 %v627
  %v2859 = vunpack.c.l.b16 %v628
  %v2860 = vunpack.c.h.b16 %v628
  %v2861 = vunpack.c.l.b16 %v629
  %v2862 = vunpack.c.h.b16 %v629
  %v2863 = vunpack.c.l.b16 %v630
  %v2864 = vunpack.c.h.b16 %v630
  %v2865 = vunpack.c.l.b16 %v631
  %v2866 = vunpack.c.h.b16 %v631
  %v2867 = vunpack.c.l.b16 %v632
  %v2868 = vunpack.c.h.b16 %v632
  %v2869 = vunpack.c.l.b16 %v633
  %v2870 = vunpack.c.h.b16 %v633
  %v2871 = vunpack.c.l.b16 %v634
  %v2872 = vunpack.c.h.b16 %v634
  %v2873 = vunpack.c.l.b16 %v635
  %v2874 = vunpack.c.h.b16 %v635
  %v2875 = vunpack.c.l.b16 %v636
  %v2876 = vunpack.c.h.b16 %v636
  %v2877 = vunpack.c.l.b16 %v637
  %v2878 = vunpack.c.h.b16 %v637
  %v2879 = vunpack.c.l.b16 %v638
  %v2880 = vunpack.c.h.b16 %v638
  %v2881 = vunpack.c.l.b16 %v639
  %v2882 = vunpack.c.h.b16 %v639
  %v2883 = vunpack.c.l.b16 %v640
  %v2884 = vunpack.c.h.b16 %v640
  %v2885 = vunpack.c.l.b16 %v641
  %v2886 = vunpack.c.h.b16 %v641
  %v2887 = vunpack.c.l.b16 %v642
  %v2888 = vunpack.c.h.b16 %v642
  %v2889 = vunpack.c.l.b16 %v643
  %v2890 = vunpack.c.h.b16 %v643
  %v2891 = vunpack.c.l.b16 %v644
  %v2892 = vunpack.c.h.b16 %v644
  %v2893 = vunpack.c.l.b16 %v645
  %v2894 = vunpack.c.h.b16 %v645
  %v2895 = vunpack.c.l.b16 %v646
  %v2896 = vunpack.c.h.b16 %v646
  %v2897 = vunpack.c.l.b16 %v647
  %v2898 = vunpack.c.h.b16 %v647
  %v2899 = vunpack.c.l.b16 %v648
  %v2900 = vunpack.c.h.b16 %v648
  %v2901 = vunpack.c.l.b16 %v649
  %v2902 = vunpack.c.h.b16 %v649
  %v2903 = vunpack.c.l.b16 %v650
  %v2904 = vunpack.c.h.b16 %v650
  %v2905 = vunpack.c.l.b16 %v651
  %v2906 = vunpack.c.h.b16 %v651
  %v2907 = vunpack.c.l.b16 %v652
  %v2908 = vunpack.c.h.b16 %v652
  %v2909 = vunpack.c.l.b16 %v653
  %v2910 = vunpack.c.h.b16 %v653
  %v2911 = vunpack.c.l.b16 %v654
  %v2912 = vunpack.c.h.b16 %v654
  %v2913 = vunpack.c.l.b16 %v655
  %v2914 = vunpack.c.h.b16 %v655
  %v2915 = vunpack.c.l.b16 %v656
  %v2916 = vunpack.c.h.b16 %v656
  %v2917 = vunpack.c.l.b16 %v657
  %v2918 = vunpack.c.h.b16 %v657
  %v2919 = vunpack.c.l.b16 %v658
  %v2920 = vunpack.c.h.b16 %v658
  %v2921 = vunpack.c.l.b16 %v659
  %v2922 = vunpack.c.h.b16 %v659
  %v2923 = vunpack.c.l.b16 %v660
  %v2924 = vunpack.c.h.b16 %v660
  %v2925 = vunpack.c.l.b16 %v661
  %v2926 = vunpack.c.h.b16 %v661
  %v2927 = vunpack.c.l.b16 %v662
  %v2928 = vunpack.c.h.b16 %v662
  %v2929 = vunpack.c.l.b16 %v663
  %v2930 = vunpack.c.h.b16 %v663
  %v2931 = vunpack.c.l.b16 %v664
  %v2932 = vunpack.c.h.b16 %v664
  %v2933 = vunpack.c.l.b16 %v665
  %v2934 = vunpack.c.h.b16 %v665
  %v2935 = vunpack.c.l.b16 %v666
  %v2936 = vunpack.c.h.b16 %v666
  %v2937 = vunpack.c.l.b16 %v667
  %v2938 = vunpack.c.h.b16 %v667
  %v2939 = vunpack.c.l.b16 %v668
  %v2940 = vunpack.c.h.b16 %v668
  %v2941 = vunpack.c.l.b16 %v669
  %v2942 = vunpack.c.h.b16 %v669
  %v2943 = vunpack.c.l.b16 %v670
  %v2944 = vunpack.c.h.b16 %v670
  %v2945 = vunpack.c.l.b16 %v671
  %v2946 = vunpack.c.h.b16 %v671
  %v2947 = vunpack.c.l.b16 %v672
  %v2948 = vunpack.c.h.b16 %v672
  %v2949 = vunpack.c.l.b16 %v673
  %v2950 = vunpack.c.h.b16 %v673
  %v2951 = vunpack.c.l.b16 %v674
  %v2952 = vunpack.c.h.b16 %v674
  %v2953 = vunpack.c.l.b16 %v675
  %v2954 = vunpack.c.h.b16 %v675
  %v2955 = vunpack.c.l.b16 %v676
  %v2956 = vunpack.c.h.b16 %v676
  %v2957 = vunpack.c.l.b16 %v677
  %v2958 = vunpack.c.h.b16 %v677
  %v2959 = vunpack.c.l.b16 %v678
  %v2960 = vunpack.c.h.b16 %v678
  %v2961 = vunpack.c.l.b16 %v679
  %v2962 = vunpack.c.h.b16 %v679
  %v2963 = vunpack.c.l.b16 %v680
  %v2964 = vunpack.c.h.b16 %v680
  %v2965 = vunpack.c.l.b16 %v681
  %v2966 = vunpack.c.h.b16 %v681
  %v2967 = vunpack.c.l.b16 %v682
  %v2968 = vunpack.c.h.b16 %v682
  %v2969 = vunpack.c.l.b16 %v683
  %v2970 = vunpack.c.h.b16 %v683
  %v2971 = vunpack.c.l.b16 %v684
  %v2972 = vunpack.c.h.b16 %v684
  %v2973 = vunpack.c.l.b16 %v685
  %v2974 = vunpack.c.h.b16 %v685
  %v2975 = vunpack.c.l.b16 %v686
  %v2976 = vunpack.c.h.b16 %v686
  %v2977 = vunpack.c.l.b16 %v687
  %v2978 = vunpack.c.h.b16 %v687
  %v2979 = vunpack.c.l.b16 %v688
  %v2980 = vunpack.c.h.b16 %v688
  %v2981 = vunpack.c.l.b16 %v689
  %v2982 = vunpack.c.h.b16 %v689
  %v2983 = vunpack.c.l.b16 %v690
  %v2984 = vunpack.c.h.b16 %v690
  %v2985 = vunpack.c.l.b16 %v691
  %v2986 = vunpack.c.h.b16 %v691
  %v2987 = vunpack.c.l.b16 %v692
  %v2988 = vunpack.c.h.b16 %v692
  %v2989 = vunpack.c.l.b16 %v693
  %v2990 = vunpack.c.h.b16 %v693
  %v2991 = vunpack.c.l.b16 %v694
  %v2992 = vunpack.c.h.b16 %v694
  %v2993 = vunpack.c.l.b16 %v695
  %v2994 = vunpack.c.h.b16 %v695
  %v2995 = vunpack.c.l.b16 %v696
  %v2996 = vunpack.c.h.b16 %v696
  %v2997 = vunpack.c.l.b16 %v697
  %v2998 = vunpack.c.h.b16 %v697
  %v2999 = vunpack.c.l.b16 %v698
  %v3000 = vunpack.c.h.b16 %v698
  %v3001 = vunpack.c.l.b16 %v699
  %v3002 = vunpack.c.h.b16 %v699
  %v3003 = vunpack.c.l.b16 %v700
  %v3004 = vunpack.c.h.b16 %v700
  %v3005 = vunpack.c.l.b16 %v701
  %v3006 = vunpack.c.h.b16 %v701
  %v3007 = vunpack.c.l.b16 %v702
  %v3008 = vunpack.c.h.b16 %v702
  %v3009 = vunpack.c.l.b16 %v703
  %v3010 = vunpack.c.h.b16 %v703
  %v3011 = vunpack.c.l.b16 %v704
  %v3012 = vunpack.c.h.b16 %v704
  %v3013 = vunpack.c.l.b16 %v705
  %v3014 = vunpack.c.h.b16 %v705
  %v3015 = vunpack.c.l.b16 %v706
  %v3016 = vunpack.c.h.b16 %v706
  %v3017 = vunpack.c.l.b16 %v707
  %v3018 = vunpack.c.h.b16 %v707
  %v3019 = vunpack.c.l.b16 %v708
  %v3020 = vunpack.c.h.b16 %v708
  %v3021 = vunpack.c.l.b16 %v709
  %v3022 = vunpack.c.h.b16 %v709
  %v3023 = vunpack.c.l.b16 %v710
  %v3024 = vunpack.c.h.b16 %v710
  %v3025 = vunpack.c.l.b16 %v711
  %v3026 = vunpack.c.h.b16 %v711
  %v3027 = vunpack.c.l.b16 %v712
  %v3028 = vunpack.c.h.b16 %v712
  %v3029 = vunpack.c.l.b16 %v713
  %v3030 = vunpack.c.h.b16 %v713
  %v3031 = vunpack.c.l.b16 %v714
  %v3032 = vunpack.c.h.b16 %v714
  %v3033 = vunpack.c.l.b16 %v715
  %v3034 = vunpack.c.h.b16 %v715
  %v3035 = vunpack.c.l.b16 %v716
  %v3036 = vunpack.c.h.b16 %v716
  %v3037 = vunpack.c.l.b16 %v717
  %v3038 = vunpack.c.h.b16 %v717
  %v3039 = vunpack.c.l.b16 %v718
  %v3040 = vunpack.c.h.b16 %v718
  %v3041 = vunpack.c.l.b16 %v719
  %v3042 = vunpack.c.h.b16 %v719
  %v3043 = vunpack.c.l.b16 %v720
  %v3044 = vunpack.c.h.b16 %v720
  %v3045 = vunpack.c.l.b16 %v721
  %v3046 = vunpack.c.h.b16 %v721
  %v3047 = vunpack.c.l.b16 %v722
  %v3048 = vunpack.c.h.b16 %v722
  %v3049 = vunpack.c.l.b16 %v723
  %v3050 = vunpack.c.h.b16 %v723
  %v3051 = vunpack.c.l.b16 %v724
  %v3052 = vunpack.c.h.b16 %v724
  %v3053 = vunpack.c.l.b16 %v725
  %v3054 = vunpack.c.h.b16 %v725
  %v3055 = vunpack.c.l.b16 %v726
  %v3056 = vunpack.c.h.b16 %v726
  %v3057 = vunpack.c.l.b16 %v727
  %v3058 = vunpack.c.h.b16 %v727
  %v3059 = vunpack.c.l.b16 %v728
  %v3060 = vunpack.c.h.b16 %v728
  %v3061 = vunpack.c.l.b16 %v729
  %v3062 = vunpack.c.h.b16 %v729
  %v3063 = vunpack.c.l.b16 %v730
  %v3064 = vunpack.c.h.b16 %v730
  %v3065 = vunpack.c.l.b16 %v731
  %v3066 = vunpack.c.h.b16 %v731
  %v3067 = vunpack.c.l.b16 %v732
  %v3068 = vunpack.c.h.b16 %v732
  %v3069 = vunpack.c.l.b16 %v733
  %v3070 = vunpack.c.h.b16 %v733
  %v3071 = vunpack.c.l.b16 %v734
  %v3072 = vunpack.c.h.b16 %v734
  %v3073 = vunpack.c.l.b16 %v735
  %v3074 = vunpack.c.h.b16 %v735
  %v3075 = vunpack.c.l.b16 %v736
  %v3076 = vunpack.c.h.b16 %v736
  %v3077 = vunpack.c.l.b16 %v737
  %v3078 = vunpack.c.h.b16 %v737
  %v3079 = vunpack.c.l.b16 %v738
  %v3080 = vunpack.c.h.b16 %v738
  %v3081 = vunpack.c.l.b16 %v739
  %v3082 = vunpack.c.h.b16 %v739
  %v3083 = vunpack.c.l.b16 %v740
  %v3084 = vunpack.c.h.b16 %v740
  %v3085 = vunpack.c.l.b16 %v741
  %v3086 = vunpack.c.h.b16 %v741
  %v3087 = vunpack.c.l.b16 %v742
  %v3088 = vunpack.c.h.b16 %v742
  %v3089 = vunpack.c.l.b16 %v743
  %v3090 = vunpack.c.h.b16 %v743
  %v3091 = vunpack.c.l.b16 %v744
  %v3092 = vunpack.c.h.b16 %v744
  %v3093 = vunpack.c.l.b16 %v745
  %v3094 = vunpack.c.h.b16 %v745
  %v3095 = vunpack.c.l.b16 %v746
  %v3096 = vunpack.c.h.b16 %v746
  %v3097 = vunpack.c.l.b16 %v747
  %v3098 = vunpack.c.h.b16 %v747
  %v3099 = vunpack.c.l.b16 %v748
  %v3100 = vunpack.c.h.b16 %v748
  %v3101 = vunpack.c.l.b16 %v749
  %v3102 = vunpack.c.h.b16 %v749
  %v3103 = vunpack.c.l.b16 %v750
  %v3104 = vunpack.c.h.b16 %v750
  %v3105 = vunpack.c.l.b16 %v751
  %v3106 = vunpack.c.h.b16 %v751
  %v3107 = vunpack.c.l.b16 %v752
  %v3108 = vunpack.c.h.b16 %v752
  %v3109 = vunpack.c.l.b16 %v753
  %v3110 = vunpack.c.h.b16 %v753
  %v3111 = vunpack.c.l.b16 %v754
  %v3112 = vunpack.c.h.b16 %v754
  %v3113 = vunpack.c.l.b16 %v755
  %v3114 = vunpack.c.h.b16 %v755
  %v3115 = vunpack.c.l.b16 %v756
  %v3116 = vunpack.c.h.b16 %v756
  %v3117 = vunpack.c.l.b16 %v757
  %v3118 = vunpack.c.h.b16 %v757
  %v3119 = vunpack.c.l.b16 %v758
  %v3120 = vunpack.c.h.b16 %v758
  %v3121 = vunpack.c.l.b16 %v759
  %v3122 = vunpack.c.h.b16 %v759
  %v3123 = vunpack.c.l.b16 %v760
  %v3124 = vunpack.c.h.b16 %v760
  %v3125 = vunpack.c.l.b16 %v761
  %v3126 = vunpack.c.h.b16 %v761
  %v3127 = vunpack.c.l.b16 %v762
  %v3128 = vunpack.c.h.b16 %v762
  %v3129 = vunpack.c.l.b16 %v763
  %v3130 = vunpack.c.h.b16 %v763
  %v3131 = vunpack.c.l.b16 %v764
  %v3132 = vunpack.c.h.b16 %v764
  %v3133 = vunpack.c.l.b16 %v765
  %v3134 = vunpack.c.h.b16 %v765
  %v3135 = vunpack.c.l.b16 %v766
  %v3136 = vunpack.c.h.b16 %v766
  %v3137 = vunpack.c.l.b16 %v767
  %v3138 = vunpack.c.h.b16 %v767
  %v3139 = vunpack.c.l.b16 %v768
  %v3140 = vunpack.c.h.b16 %v768
  %v3141 = vunpack.c.l.b16 %v769
  %v3142 = vunpack.c.h.b16 %v769
  %v3143 = vunpack.c.l.b16 %v770
  %v3144 = vunpack.c.h.b16 %v770
  %v3145 = vunpack.c.l.b16 %v771
  %v3146 = vunpack.c.h.b16 %v771
  %v3147 = vunpack.c.l.b16 %v772
  %v3148 = vunpack.c.h.b16 %v772
  %v3149 = vunpack.c.l.b16 %v773
  %v3150 = vunpack.c.h.b16 %v773
  %v3151 = vunpack.c.l.b16 %v774
  %v3152 = vunpack.c.h.b16 %v774
  %v3153 = vunpack.c.l.b16 %v775
  %v3154 = vunpack.c.h.b16 %v775
  %v3155 = vunpack.c.l.b16 %v776
  %v3156 = vunpack.c.h.b16 %v776
  %v3157 = vunpack.c.l.b16 %v777
  %v3158 = vunpack.c.h.b16 %v777
  %v3159 = vunpack.c.l.b16 %v778
  %v3160 = vunpack.c.h.b16 %v778
  %v3161 = vunpack.c.l.b16 %v779
  %v3162 = vunpack.c.h.b16 %v779
  %v3163 = vunpack.c.l.b16 %v780
  %v3164 = vunpack.c.h.b16 %v780
  %v3165 = vunpack.c.l.b16 %v781
  %v3166 = vunpack.c.h.b16 %v781
  %v3167 = vunpack.c.l.b16 %v782
  %v3168 = vunpack.c.h.b16 %v782
  %v3169 = vunpack.c.l.b16 %v783
  %v3170 = vunpack.c.h.b16 %v783
  %v3171 = vunpack.c.l.b16 %v784
  %v3172 = vunpack.c.h.b16 %v784
  %v3173 = vunpack.c.l.b16 %v785
  %v3174 = vunpack.c.h.b16 %v785
  %v3175 = vunpack.c.l.b16 %v786
  %v3176 = vunpack.c.h.b16 %v786
  %v3177 = vunpack.c.l.b16 %v787
  %v3178 = vunpack.c.h.b16 %v787
  %v3179 = vunpack.c.l.b16 %v788
  %v3180 = vunpack.c.h.b16 %v788
  %v3181 = vunpack.c.l.b16 %v789
  %v3182 = vunpack.c.h.b16 %v789
  %v3183 = vunpack.c.l.b16 %v790
  %v3184 = vunpack.c.h.b16 %v790
  %v3185 = vunpack.c.l.b16 %v791
  %v3186 = vunpack.c.h.b16 %v791
  %v3187 = vunpack.c.l.b16 %v792
  %v3188 = vunpack.c.h.b16 %v792
  %v3189 = vunpack.c.l.b16 %v793
  %v3190 = vunpack.c.h.b16 %v793
  %v3191 = vunpack.c.l.b16 %v794
  %v3192 = vunpack.c.h.b16 %v794
  %v3193 = vunpack.c.l.b16 %v795
  %v3194 = vunpack.c.h.b16 %v795
  %v3195 = vunpack.c.l.b16 %v796
  %v3196 = vunpack.c.h.b16 %v796
  %v3197 = vunpack.c.l.b16 %v797
  %v3198 = vunpack.c.h.b16 %v797
  %v3199 = vunpack.c.l.b16 %v798
  %v3200 = vunpack.c.h.b16 %v798
  %v3201 = vunpack.c.l.b16 %v799
  %v3202 = vunpack.c.h.b16 %v799
  %v3203 = vunpack.c.l.b16 %v800
  %v3204 = vunpack.c.h.b16 %v800
  %v3205 = vunpack.c.l.b16 %v801
  %v3206 = vunpack.c.h.b16 %v801
  %v3207 = vunpack.c.l.b16 %v802
  %v3208 = vunpack.c.h.b16 %v802
  %v3209 = vunpack.c.l.b16 %v803
  %v3210 = vunpack.c.h.b16 %v803
  %v3211 = vunpack.c.l.b16 %v804
  %v3212 = vunpack.c.h.b16 %v804
  %v3213 = vunpack.c.l.b16 %v805
  %v3214 = vunpack.c.h.b16 %v805
  %v3215 = vunpack.c.l.b16 %v806
  %v3216 = vunpack.c.h.b16 %v806
  %v3217 = vpack.c.b16 %v1685, %v1681
  %v3218 = vpack.c.b16 %v1686, %v1682
  %v3219 = vpack.c.b16 %v1687, %v1683
  %v3220 = vpack.c.b16 %v1688, %v1684
  %v3221 = vpack.c.b16 %v1693, %v1689
  %v3222 = vpack.c.b16 %v1694, %v1690
  %v3223 = vpack.c.b16 %v1695, %v1691
  %v3224 = vpack.c.b16 %v1696, %v1692
  %v3225 = vpack.c.b16 %v1701, %v1697
  %v3226 = vpack.c.b16 %v1702, %v1698
  %v3227 = vpack.c.b16 %v1703, %v1699
  %v3228 = vpack.c.b16 %v1704, %v1700
  %v3229 = vpack.c.b16 %v1709, %v1705
  %v3230 = vpack.c.b16 %v1710, %v1706
  %v3231 = vpack.c.b16 %v1711, %v1707
  %v3232 = vpack.c.b16 %v1712, %v1708
  %v3233 = vpack.c.b16 %v1717, %v1713
  %v3234 = vpack.c.b16 %v1718, %v1714
  %v3235 = vpack.c.b16 %v1719, %v1715
  %v3236 = vpack.c.b16 %v1720, %v1716
  %v3237 = vpack.c.b16 %v1725, %v1721
  %v3238 = vpack.c.b16 %v1726, %v1722
  %v3239 = vpack.c.b16 %v1727, %v1723
  %v3240 = vpack.c.b16 %v1728, %v1724
  %v3241 = vpack.c.b16 %v1733, %v1729
  %v3242 = vpack.c.b16 %v1734, %v1730
  %v3243 = vpack.c.b16 %v1735, %v1731
  %v3244 = vpack.c.b16 %v1736, %v1732
  %v3245 = vpack.c.b16 %v1741, %v1737
  %v3246 = vpack.c.b16 %v1742, %v1738
  %v3247 = vpack.c.b16 %v1743, %v1739
  %v3248 = vpack.c.b16 %v1744, %v1740
  %v3249 = vpack.c.b16 %v1749, %v1745
  %v3250 = vpack.c.b16 %v1750, %v1746
  %v3251 = vpack.c.b16 %v1751, %v1747
  %v3252 = vpack.c.b16 %v1752, %v1748
  %v3253 = vpack.c.b16 %v1757, %v1753
  %v3254 = vpack.c.b16 %v1758, %v1754
  %v3255 = vpack.c.b16 %v1759, %v1755
  %v3256 = vpack.c.b16 %v1760, %v1756
  %v3257 = vpack.c.b16 %v1765, %v1761
  %v3258 = vpack.c.b16 %v1766, %v1762
  %v3259 = vpack.c.b16 %v1767, %v1763
  %v3260 = vpack.c.b16 %v1768, %v1764
  %v3261 = vpack.c.b16 %v1773, %v1769
  %v3262 = vpack.c.b16 %v1774, %v1770
  %v3263 = vpack.c.b16 %v1775, %v1771
  %v3264 = vpack.c.b16 %v1776, %v1772
  %v3265 = vpack.c.b16 %v1781, %v1777
  %v3266 = vpack.c.b16 %v1782, %v1778
  %v3267 = vpack.c.b16 %v1783, %v1779
  %v3268 = vpack.c.b16 %v1784, %v1780
  %v3269 = vpack.c.b16 %v1789, %v1785
  %v3270 = vpack.c.b16 %v1790, %v1786
  %v3271 = vpack.c.b16 %v1791, %v1787
  %v3272 = vpack.c.b16 %v1792, %v1788
  %v3273 = vpack.c.b16 %v1797, %v1793
  %v3274 = vpack.c.b16 %v1798, %v1794
  %v3275 = vpack.c.b16 %v1799, %v1795
  %v3276 = vpack.c.b16 %v1800, %v1796
  %v3277 = vpack.c.b16 %v1805, %v1801
  %v3278 = vpack.c.b16 %v1806, %v1802
  %v3279 = vpack.c.b16 %v1807, %v1803
  %v3280 = vpack.c.b16 %v1808, %v1804
  %v3281 = vpack.c.b16 %v1813, %v1809
  %v3282 = vpack.c.b16 %v1814, %v1810
  %v3283 = vpack.c.b16 %v1815, %v1811
  %v3284 = vpack.c.b16 %v1816, %v1812
  %v3285 = vpack.c.b16 %v1821, %v1817
  %v3286 = vpack.c.b16 %v1822, %v1818
  %v3287 = vpack.c.b16 %v1823, %v1819
  %v3288 = vpack.c.b16 %v1824, %v1820
  %v3289 = vpack.c.b16 %v1829, %v1825
  %v3290 = vpack.c.b16 %v1830, %v1826
  %v3291 = vpack.c.b16 %v1831, %v1827
  %v3292 = vpack.c.b16 %v1832, %v1828
  %v3293 = vpack.c.b16 %v1837, %v1833
  %v3294 = vpack.c.b16 %v1838, %v1834
  %v3295 = vpack.c.b16 %v1839, %v1835
  %v3296 = vpack.c.b16 %v1840, %v1836
  %v3297 = vpack.c.b16 %v1845, %v1841
  %v3298 = vpack.c.b16 %v1846, %v1842
  %v3299 = vpack.c.b16 %v1847, %v1843
  %v3300 = vpack.c.b16 %v1848, %v1844
  %v3301 = vpack.c.b16 %v1853, %v1849
  %v3302 = vpack.c.b16 %v1854, %v1850
  %v3303 = vpack.c.b16 %v1855, %v1851
  %v3304 = vpack.c.b16 %v1856, %v1852
  %v3305 = vpack.c.b16 %v1861, %v1857
  %v3306 = vpack.c.b16 %v1862, %v1858
  %v3307 = vpack.c.b16 %v1863, %v1859
  %v3308 = vpack.c.b16 %v1864, %v1860
  %v3309 = vpack.c.b16 %v1869, %v1865
  %v3310 = vpack.c.b16 %v1870, %v1866
  %v3311 = vpack.c.b16 %v1871, %v1867
  %v3312 = vpack.c.b16 %v1872, %v1868
  %v3313 = vpack.c.b16 %v1877, %v1873
  %v3314 = vpack.c.b16 %v1878, %v1874
  %v3315 = vpack.c.b16 %v1879, %v1875
  %v3316 = vpack.c.b16 %v1880, %v1876
  %v3317 = vpack.c.b16 %v1885, %v1881
  %v3318 = vpack.c.b16 %v1886, %v1882
  %v3319 = vpack.c.b16 %v1887, %v1883
  %v3320 = vpack.c.b16 %v1888, %v1884
  %v3321 = vpack.c.b16 %v1893, %v1889
  %v3322 = vpack.c.b16 %v1894, %v1890
  %v3323 = vpack.c.b16 %v1895, %v1891
  %v3324 = vpack.c.b16 %v1896, %v1892
  %v3325 = vpack.c.b16 %v1901, %v1897
  %v3326 = vpack.c.b16 %v1902, %v1898
  %v3327 = vpack.c.b16 %v1903, %v1899
  %v3328 = vpack.c.b16 %v1904, %v1900
  %v3329 = vpack.c.b16 %v1909, %v1905
  %v3330 = vpack.c.b16 %v1910, %v1906
  %v3331 = vpack.c.b16 %v1911, %v1907
  %v3332 = vpack.c.b16 %v1912, %v1908
  %v3333 = vpack.c.b16 %v1917, %v1913
  %v3334 = vpack.c.b16 %v1918, %v1914
  %v3335 = vpack.c.b16 %v1919, %v1915
  %v3336 = vpack.c.b16 %v1920, %v1916
  %v3337 = vpack.c.b16 %v1925, %v1921
  %v3338 = vpack.c.b16 %v1926, %v1922
  %v3339 = vpack.c.b16 %v1927, %v1923
  %v3340 = vpack.c.b16 %v1928, %v1924
  %v3341 = vpack.c.b16 %v1933, %v1929
  %v3342 = vpack.c.b16 %v1934, %v1930
  %v3343 = vpack.c.b16 %v1935, %v1931
  %v3344 = vpack.c.b16 %v1936, %v1932
  %v3345 = vpack.c.b16 %v1941, %v1937
  %v3346 = vpack.c.b16 %v1942, %v1938
  %v3347 = vpack.c.b16 %v1943, %v1939
  %v3348 = vpack.c.b16 %v1944, %v1940
  %v3349 = vpack.c.b16 %v1949, %v1945
  %v3350 = vpack.c.b16 %v1950, %v1946
  %v3351 = vpack.c.b16 %v1951, %v1947
  %v3352 = vpack.c.b16 %v1952, %v1948
  %v3353 = vpack.c.b16 %v1957, %v1953
  %v3354 = vpack.c.b16 %v1958, %v1954
  %v3355 = vpack.c.b16 %v1959, %v1955
  %v3356 = vpack.c.b16 %v1960, %v1956
  %v3357 = vpack.c.b16 %v1965, %v1961
  %v3358 = vpack.c.b16 %v1966, %v1962
  %v3359 = vpack.c.b16 %v1967, %v1963
  %v3360 = vpack.c.b16 %v1968, %v1964
  %v3361 = vpack.c.b16 %v1973, %v1969
  %v3362 = vpack.c.b16 %v1974, %v1970
  %v3363 = vpack.c.b16 %v1975, %v1971
  %v3364 = vpack.c.b16 %v1976, %v1972
  %v3365 = vpack.c.b16 %v1981, %v1977
  %v3366 = vpack.c.b16 %v1982, %v1978
  %v3367 = vpack.c.b16 %v1983, %v1979
  %v3368 = vpack.c.b16 %v1984, %v1980
  %v3369 = vpack.c.b16 %v1989, %v1985
  %v3370 = vpack.c.b16 %v1990, %v1986
  %v3371 = vpack.c.b16 %v1991, %v1987
  %v3372 = vpack.c.b16 %v1992, %v1988
  %v3373 = vpack.c.b16 %v1997, %v1993
  %v3374 = vpack.c.b16 %v1998, %v1994
  %v3375 = vpack.c.b16 %v1999, %v1995
  %v3376 = vpack.c.b16 %v2000, %v1996
  %v3377 = vpack.c.b16 %v2005, %v2001
  %v3378 = vpack.c.b16 %v2006, %v2002
  %v3379 = vpack.c.b16 %v2007, %v2003
  %v3380 = vpack.c.b16 %v2008, %v2004
  %v3381 = vpack.c.b16 %v2013, %v2009
  %v3382 = vpack.c.b16 %v2014, %v2010
  %v3383 = vpack.c.b16 %v2015, %v2011
  %v3384 = vpack.c.b16 %v2016, %v2012
  %v3385 = vpack.c.b16 %v2021, %v2017
  %v3386 = vpack.c.b16 %v2022, %v2018
  %v3387 = vpack.c.b16 %v2023, %v2019
  %v3388 = vpack.c.b16 %v2024, %v2020
  %v3389 = vpack.c.b16 %v2029, %v2025
  %v3390 = vpack.c.b16 %v2030, %v2026
  %v3391 = vpack.c.b16 %v2031, %v2027
  %v3392 = vpack.c.b16 %v2032, %v2028
  %v3393 = vpack.c.b16 %v2037, %v2033
  %v3394 = vpack.c.b16 %v2038, %v2034
  %v3395 = vpack.c.b16 %v2039, %v2035
  %v3396 = vpack.c.b16 %v2040, %v2036
  %v3397 = vpack.c.b16 %v2045, %v2041
  %v3398 = vpack.c.b16 %v2046, %v2042
  %v3399 = vpack.c.b16 %v2047, %v2043
  %v3400 = vpack.c.b16 %v2048, %v2044
  %v3401 = vpack.c.b16 %v2053, %v2049
  %v3402 = vpack.c.b16 %v2054, %v2050
  %v3403 = vpack.c.b16 %v2055, %v2051
  %v3404 = vpack.c.b16 %v2056, %v2052
  %v3405 = vpack.c.b16 %v2061, %v2057
  %v3406 = vpack.c.b16 %v2062, %v2058
  %v3407 = vpack.c.b16 %v2063, %v2059
  %v3408 = vpack.c.b16 %v2064, %v2060
  %v3409 = vpack.c.b16 %v2069, %v2065
  %v3410 = vpack.c.b16 %v2070, %v2066
  %v3411 = vpack.c.b16 %v2071, %v2067
  %v3412 = vpack.c.b16 %v2072, %v2068
  %v3413 = vpack.c.b16 %v2077, %v2073
  %v3414 = vpack.c.b16 %v2078, %v2074
  %v3415 = vpack.c.b16 %v2079, %v2075
  %v3416 = vpack.c.b16 %v2080, %v2076
  %v3417 = vpack.c.b16 %v2085, %v2081
  %v3418 = vpack.c.b16 %v2086, %v2082
  %v3419 = vpack.c.b16 %v2087, %v2083
  %v3420 = vpack.c.b16 %v2088, %v2084
  %v3421 = vpack.c.b16 %v2093, %v2089
  %v3422 = vpack.c.b16 %v2094, %v2090
  %v3423 = vpack.c.b16 %v2095, %v2091
  %v3424 = vpack.c.b16 %v2096, %v2092
  %v3425 = vpack.c.b16 %v2101, %v2097
  %v3426 = vpack.c.b16 %v2102, %v2098
  %v3427 = vpack.c.b16 %v2103, %v2099
  %v3428 = vpack.c.b16 %v2104, %v2100
  %v3429 = vpack.c.b16 %v2109, %v2105
  %v3430 = vpack.c.b16 %v2110, %v2106
  %v3431 = vpack.c.b16 %v2111, %v2107
  %v3432 = vpack.c.b16 %v2112, %v2108
  %v3433 = vpack.c.b16 %v2117, %v2113
  %v3434 = vpack.c.b16 %v2118, %v2114
  %v3435 = vpack.c.b16 %v2119, %v2115
  %v3436 = vpack.c.b16 %v2120, %v2116
  %v3437 = vpack.c.b16 %v2125, %v2121
  %v3438 = vpack.c.b16 %v2126, %v2122
  %v3439 = vpack.c.b16 %v2127, %v2123
  %v3440 = vpack.c.b16 %v2128, %v2124
  %v3441 = vpack.c.b16 %v2133, %v2129
  %v3442 = vpack.c.b16 %v2134, %v2130
  %v3443 = vpack.c.b16 %v2135, %v2131
  %v3444 = vpack.c.b16 %v2136, %v2132
  %v3445 = vpack.c.b16 %v2141, %v2137
  %v3446 = vpack.c.b16 %v2142, %v2138
  %v3447 = vpack.c.b16 %v2143, %v2139
  %v3448 = vpack.c.b16 %v2144, %v2140
  %v3449 = vpack.c.b16 %v2149, %v2145
  %v3450 = vpack.c.b16 %v2150, %v2146
  %v3451 = vpack.c.b16 %v2151, %v2147
  %v3452 = vpack.c.b16 %v2152, %v2148
  %v3453 = vpack.c.b16 %v2157, %v2153
  %v3454 = vpack.c.b16 %v2158, %v2154
  %v3455 = vpack.c.b16 %v2159, %v2155
  %v3456 = vpack.c.b16 %v2160, %v2156
  %v3457 = vpack.c.b16 %v2165, %v2161
  %v3458 = vpack.c.b16 %v2166, %v2162
  %v3459 = vpack.c.b16 %v2167, %v2163
  %v3460 = vpack.c.b16 %v2168, %v2164
  %v3461 = vpack.c.b16 %v2173, %v2169
  %v3462 = vpack.c.b16 %v2174, %v2170
  %v3463 = vpack.c.b16 %v2175, %v2171
  %v3464 = vpack.c.b16 %v2176, %v2172
  %v3465 = vpack.c.b16 %v2181, %v2177
  %v3466 = vpack.c.b16 %v2182, %v2178
  %v3467 = vpack.c.b16 %v2183, %v2179
  %v3468 = vpack.c.b16 %v2184, %v2180
  %v3469 = vpack.c.b16 %v2189, %v2185
  %v3470 = vpack.c.b16 %v2190, %v2186
  %v3471 = vpack.c.b16 %v2191, %v2187
  %v3472 = vpack.c.b16 %v2192, %v2188
  %v3473 = vpack.c.b16 %v2197, %v2193
  %v3474 = vpack.c.b16 %v2198, %v2194
  %v3475 = vpack.c.b16 %v2199, %v2195
  %v3476 = vpack.c.b16 %v2200, %v2196
  %v3477 = vpack.c.b16 %v2205, %v2201
  %v3478 = vpack.c.b16 %v2206, %v2202
  %v3479 = vpack.c.b16 %v2207, %v2203
  %v3480 = vpack.c.b16 %v2208, %v2204
  %v3481 = vpack.c.b16 %v2213, %v2209
  %v3482 = vpack.c.b16 %v2214, %v2210
  %v3483 = vpack.c.b16 %v2215, %v2211
  %v3484 = vpack.c.b16 %v2216, %v2212
  %v3485 = vpack.c.b16 %v2221, %v2217
  %v3486 = vpack.c.b16 %v2222, %v2218
  %v3487 = vpack.c.b16 %v2223, %v2219
  %v3488 = vpack.c.b16 %v2224, %v2220
  %v3489 = vpack.c.b16 %v2229, %v2225
  %v3490 = vpack.c.b16 %v2230, %v2226
  %v3491 = vpack.c.b16 %v2231, %v2227
  %v3492 = vpack.c.b16 %v2232, %v2228
  %v3493 = vpack.c.b16 %v2237, %v2233
  %v3494 = vpack.c.b16 %v2238, %v2234
  %v3495 = vpack.c.b16 %v2239, %v2235
  %v3496 = vpack.c.b16 %v2240, %v2236
  %v3497 = vpack.c.b16 %v2245, %v2241
  %v3498 = vpack.c.b16 %v2246, %v2242
  %v3499 = vpack.c.b16 %v2247, %v2243
  %v3500 = vpack.c.b16 %v2248, %v2244
  %v3501 = vpack.c.b16 %v2253, %v2249
  %v3502 = vpack.c.b16 %v2254, %v2250
  %v3503 = vpack.c.b16 %v2255, %v2251
  %v3504 = vpack.c.b16 %v2256, %v2252
  %v3505 = vpack.c.b16 %v2261, %v2257
  %v3506 = vpack.c.b16 %v2262, %v2258
  %v3507 = vpack.c.b16 %v2263, %v2259
  %v3508 = vpack.c.b16 %v2264, %v2260
  %v3509 = vpack.c.b16 %v2269, %v2265
  %v3510 = vpack.c.b16 %v2270, %v2266
  %v3511 = vpack.c.b16 %v2271, %v2267
  %v3512 = vpack.c.b16 %v2272, %v2268
  %v3513 = vpack.c.b16 %v2277, %v2273
  %v3514 = vpack.c.b16 %v2278, %v2274
  %v3515 = vpack.c.b16 %v2279, %v2275
  %v3516 = vpack.c.b16 %v2280, %v2276
  %v3517 = vpack.c.b16 %v2285, %v2281
  %v3518 = vpack.c.b16 %v2286, %v2282
  %v3519 = vpack.c.b16 %v2287, %v2283
  %v3520 = vpack.c.b16 %v2288, %v2284
  %v3521 = vpack.c.b16 %v2293, %v2289
  %v3522 = vpack.c.b16 %v2294, %v2290
  %v3523 = vpack.c.b16 %v2295, %v2291
  %v3524 = vpack.c.b16 %v2296, %v2292
  %v3525 = vpack.c.b16 %v2301, %v2297
  %v3526 = vpack.c.b16 %v2302, %v2298
  %v3527 = vpack.c.b16 %v2303, %v2299
  %v3528 = vpack.c.b16 %v2304, %v2300
  %v3529 = vpack.c.b16 %v2309, %v2305
  %v3530 = vpack.c.b16 %v2310, %v2306
  %v3531 = vpack.c.b16 %v2311, %v2307
  %v3532 = vpack.c.b16 %v2312, %v2308
  %v3533 = vpack.c.b16 %v2317, %v2313
  %v3534 = vpack.c.b16 %v2318, %v2314
  %v3535 = vpack.c.b16 %v2319, %v2315
  %v3536 = vpack.c.b16 %v2320, %v2316
  %v3537 = vpack.c.b16 %v2325, %v2321
  %v3538 = vpack.c.b16 %v2326, %v2322
  %v3539 = vpack.c.b16 %v2327, %v2323
  %v3540 = vpack.c.b16 %v2328, %v2324
  %v3541 = vpack.c.b16 %v2333, %v2329
  %v3542 = vpack.c.b16 %v2334, %v2330
  %v3543 = vpack.c.b16 %v2335, %v2331
  %v3544 = vpack.c.b16 %v2336, %v2332
  %v3545 = vpack.c.b16 %v2341, %v2337
  %v3546 = vpack.c.b16 %v2342, %v2338
  %v3547 = vpack.c.b16 %v2343, %v2339
  %v3548 = vpack.c.b16 %v2344, %v2340
  %v3549 = vpack.c.b16 %v2349, %v2345
  %v3550 = vpack.c.b16 %v2350, %v2346
  %v3551 = vpack.c.b16 %v2351, %v2347
  %v3552 = vpack.c.b16 %v2352, %v2348
  %v3553 = vpack.c.b16 %v2357, %v2353
  %v3554 = vpack.c.b16 %v2358, %v2354
  %v3555 = vpack.c.b16 %v2359, %v2355
  %v3556 = vpack.c.b16 %v2360, %v2356
  %v3557 = vpack.c.b16 %v2365, %v2361
  %v3558 = vpack.c.b16 %v2366, %v2362
  %v3559 = vpack.c.b16 %v2367, %v2363
  %v3560 = vpack.c.b16 %v2368, %v2364
  %v3561 = vpack.c.b16 %v2373, %v2369
  %v3562 = vpack.c.b16 %v2374, %v2370
  %v3563 = vpack.c.b16 %v2375, %v2371
  %v3564 = vpack.c.b16 %v2376, %v2372
  %v3565 = vpack.c.b16 %v2381, %v2377
  %v3566 = vpack.c.b16 %v2382, %v2378
  %v3567 = vpack.c.b16 %v2383, %v2379
  %v3568 = vpack.c.b16 %v2384, %v2380
  %v3569 = vpack.c.b16 %v2389, %v2385
  %v3570 = vpack.c.b16 %v2390, %v2386
  %v3571 = vpack.c.b16 %v2391, %v2387
  %v3572 = vpack.c.b16 %v2392, %v2388
  %v3573 = vpack.c.b16 %v2397, %v2393
  %v3574 = vpack.c.b16 %v2398, %v2394
  %v3575 = vpack.c.b16 %v2399, %v2395
  %v3576 = vpack.c.b16 %v2400, %v2396
  %v3577 = vpack.c.b16 %v2405, %v2401
  %v3578 = vpack.c.b16 %v2406, %v2402
  %v3579 = vpack.c.b16 %v2407, %v2403
  %v3580 = vpack.c.b16 %v2408, %v2404
  %v3581 = vpack.c.b16 %v2413, %v2409
  %v3582 = vpack.c.b16 %v2414, %v2410
  %v3583 = vpack.c.b16 %v2415, %v2411
  %v3584 = vpack.c.b16 %v2416, %v2412
  %v3585 = vpack.c.b16 %v2421, %v2417
  %v3586 = vpack.c.b16 %v2422, %v2418
  %v3587 = vpack.c.b16 %v2423, %v2419
  %v3588 = vpack.c.b16 %v2424, %v2420
  %v3589 = vpack.c.b16 %v2429, %v2425
  %v3590 = vpack.c.b16 %v2430, %v2426
  %v3591 = vpack.c.b16 %v2431, %v2427
  %v3592 = vpack.c.b16 %v2432, %v2428
  %v3593 = vpack.c.b16 %v2437, %v2433
  %v3594 = vpack.c.b16 %v2438, %v2434
  %v3595 = vpack.c.b16 %v2439, %v2435
  %v3596 = vpack.c.b16 %v2440, %v2436
  %v3597 = vpack.c.b16 %v2445, %v2441
  %v3598 = vpack.c.b16 %v2446, %v2442
  %v3599 = vpack.c.b16 %v2447, %v2443
  %v3600 = vpack.c.b16 %v2448, %v2444
  %v3601 = vpack.c.b16 %v2453, %v2449
  %v3602 = vpack.c.b16 %v2454, %v2450
  %v3603 = vpack.c.b16 %v2455, %v2451
  %v3604 = vpack.c.b16 %v2456, %v2452
  %v3605 = vpack.c.b16 %v2461, %v2457
  %v3606 = vpack.c.b16 %v2462, %v2458
  %v3607 = vpack.c.b16 %v2463, %v2459
  %v3608 = vpack.c.b16 %v2464, %v2460
  %v3609 = vpack.c.b16 %v2469, %v2465
  %v3610 = vpack.c.b16 %v2470, %v2466
  %v3611 = vpack.c.b16 %v2471, %v2467
  %v3612 = vpack.c.b16 %v2472, %v2468
  %v3613 = vpack.c.b16 %v2477, %v2473
  %v3614 = vpack.c.b16 %v2478, %v2474
  %v3615 = vpack.c.b16 %v2479, %v2475
  %v3616 = vpack.c.b16 %v2480, %v2476
  %v3617 = vpack.c.b16 %v2485, %v2481
  %v3618 = vpack.c.b16 %v2486, %v2482
  %v3619 = vpack.c.b16 %v2487, %v2483
  %v3620 = vpack.c.b16 %v2488, %v2484
  %v3621 = vpack.c.b16 %v2493, %v2489
  %v3622 = vpack.c.b16 %v2494, %v2490
  %v3623 = vpack.c.b16 %v2495, %v2491
  %v3624 = vpack.c.b16 %v2496, %v2492
  %v3625 = vpack.c.b16 %v2501, %v2497
  %v3626 = vpack.c.b16 %v2502, %v2498
  %v3627 = vpack.c.b16 %v2503, %v2499
  %v3628 = vpack.c.b16 %v2504, %v2500
  %v3629 = vpack.c.b16 %v2509, %v2505
  %v3630 = vpack.c.b16 %v2510, %v2506
  %v3631 = vpack.c.b16 %v2511, %v2507
  %v3632 = vpack.c.b16 %v2512, %v2508
  %v3633 = vpack.c.b16 %v2517, %v2513
  %v3634 = vpack.c.b16 %v2518, %v2514
  %v3635 = vpack.c.b16 %v2519, %v2515
  %v3636 = vpack.c.b16 %v2520, %v2516
  %v3637 = vpack.c.b16 %v2525, %v2521
  %v3638 = vpack.c.b16 %v2526, %v2522
  %v3639 = vpack.c.b16 %v2527, %v2523
  %v3640 = vpack.c.b16 %v2528, %v2524
  %v3641 = vpack.c.b16 %v2533, %v2529
  %v3642 = vpack.c.b16 %v2534, %v2530
  %v3643 = vpack.c.b16 %v2535, %v2531
  %v3644 = vpack.c.b16 %v2536, %v2532
  %v3645 = vpack.c.b16 %v2541, %v2537
  %v3646 = vpack.c.b16 %v2542, %v2538
  %v3647 = vpack.c.b16 %v2543, %v2539
  %v3648 = vpack.c.b16 %v2544, %v2540
  %v3649 = vpack.c.b16 %v2549, %v2545
  %v3650 = vpack.c.b16 %v2550, %v2546
  %v3651 = vpack.c.b16 %v2551, %v2547
  %v3652 = vpack.c.b16 %v2552, %v2548
  %v3653 = vpack.c.b16 %v2557, %v2553
  %v3654 = vpack.c.b16 %v2558, %v2554
  %v3655 = vpack.c.b16 %v2559, %v2555
  %v3656 = vpack.c.b16 %v2560, %v2556
  %v3657 = vpack.c.b16 %v2565, %v2561
  %v3658 = vpack.c.b16 %v2566, %v2562
  %v3659 = vpack.c.b16 %v2567, %v2563
  %v3660 = vpack.c.b16 %v2568, %v2564
  %v3661 = vpack.c.b16 %v2573, %v2569
  %v3662 = vpack.c.b16 %v2574, %v2570
  %v3663 = vpack.c.b16 %v2575, %v2571
  %v3664 = vpack.c.b16 %v2576, %v2572
  %v3665 = vpack.c.b16 %v2581, %v2577
  %v3666 = vpack.c.b16 %v2582, %v2578
  %v3667 = vpack.c.b16 %v2583, %v2579
  %v3668 = vpack.c.b16 %v2584, %v2580
  %v3669 = vpack.c.b16 %v2589, %v2585
  %v3670 = vpack.c.b16 %v2590, %v2586
  %v3671 = vpack.c.b16 %v2591, %v2587
  %v3672 = vpack.c.b16 %v2592, %v2588
  %v3673 = vpack.c.b16 %v2597, %v2593
  %v3674 = vpack.c.b16 %v2598, %v2594
  %v3675 = vpack.c.b16 %v2599, %v2595
  %v3676 = vpack.c.b16 %v2600, %v2596
  %v3677 = vpack.c.b16 %v2605, %v2601
  %v3678 = vpack.c.b16 %v2606, %v2602
  %v3679 = vpack.c.b16 %v2607, %v2603
  %v3680 = vpack.c.b16 %v2608, %v2604
  %v3681 = vpack.c.b16 %v2613, %v2609
  %v3682 = vpack.c.b16 %v2614, %v2610
  %v3683 = vpack.c.b16 %v2615, %v2611
  %v3684 = vpack.c.b16 %v2616, %v2612
  %v3685 = vpack.c.b16 %v2621, %v2617
  %v3686 = vpack.c.b16 %v2622, %v2618
  %v3687 = vpack.c.b16 %v2623, %v2619
  %v3688 = vpack.c.b16 %v2624, %v2620
  %v3689 = vpack.c.b16 %v2629, %v2625
  %v3690 = vpack.c.b16 %v2630, %v2626
  %v3691 = vpack.c.b16 %v2631, %v2627
  %v3692 = vpack.c.b16 %v2632, %v2628
  %v3693 = vpack.c.b16 %v2637, %v2633
  %v3694 = vpack.c.b16 %v2638, %v2634
  %v3695 = vpack.c.b16 %v2639, %v2635
  %v3696 = vpack.c.b16 %v2640, %v2636
  %v3697 = vpack.c.b16 %v2645, %v2641
  %v3698 = vpack.c.b16 %v2646, %v2642
  %v3699 = vpack.c.b16 %v2647, %v2643
  %v3700 = vpack.c.b16 %v2648, %v2644
  %v3701 = vpack.c.b16 %v2653, %v2649
  %v3702 = vpack.c.b16 %v2654, %v2650
  %v3703 = vpack.c.b16 %v2655, %v2651
  %v3704 = vpack.c.b16 %v2656, %v2652
  %v3705 = vpack.c.b16 %v2661, %v2657
  %v3706 = vpack.c.b16 %v2662, %v2658
  %v3707 = vpack.c.b16 %v2663, %v2659
  %v3708 = vpack.c.b16 %v2664, %v2660
  %v3709 = vpack.c.b16 %v2669, %v2665
  %v3710 = vpack.c.b16 %v2670, %v2666
  %v3711 = vpack.c.b16 %v2671, %v2667
  %v3712 = vpack.c.b16 %v2672, %v2668
  %v3713 = vpack.c.b16 %v2677, %v2673
  %v3714 = vpack.c.b16 %v2678, %v2674
  %v3715 = vpack.c.b16 %v2679, %v2675
  %v3716 = vpack.c.b16 %v2680, %v2676
  %v3717 = vpack.c.b16 %v2685, %v2681
  %v3718 = vpack.c.b16 %v2686, %v2682
  %v3719 = vpack.c.b16 %v2687, %v2683
  %v3720 = vpack.c.b16 %v2688, %v2684
  %v3721 = vpack.c.b16 %v2693, %v2689
  %v3722 = vpack.c.b16 %v2694, %v2690
  %v3723 = vpack.c.b16 %v2695, %v2691
  %v3724 = vpack.c.b16 %v2696, %v2692
  %v3725 = vpack.c.b16 %v2701, %v2697
  %v3726 = vpack.c.b16 %v2702, %v2698
  %v3727 = vpack.c.b16 %v2703, %v2699
  %v3728 = vpack.c.b16 %v2704, %v2700
  %v3729 = vpack.c.b16 %v2709, %v2705
  %v3730 = vpack.c.b16 %v2710, %v2706
  %v3731 = vpack.c.b16 %v2711, %v2707
  %v3732 = vpack.c.b16 %v2712, %v2708
  %v3733 = vpack.c.b16 %v2717, %v2713
  %v3734 = vpack.c.b16 %v2718, %v2714
  %v3735 = vpack.c.b16 %v2719, %v2715
  %v3736 = vpack.c.b16 %v2720, %v2716
  %v3737 = vpack.c.b16 %v2725, %v2721
  %v3738 = vpack.c.b16 %v2726, %v2722
  %v3739 = vpack.c.b16 %v2727, %v2723
  %v3740 = vpack.c.b16 %v2728, %v2724
  %v3741 = vpack.c.b16 %v2733, %v2729
  %v3742 = vpack.c.b16 %v2734, %v2730
  %v3743 = vpack.c.b16 %v2735, %v2731
  %v3744 = vpack.c.b16 %v2736, %v2732
  %v3745 = vpack.c.b16 %v2741, %v2737
  %v3746 = vpack.c.b16 %v2742, %v2738
  %v3747 = vpack.c.b16 %v2743, %v2739
  %v3748 = vpack.c.b16 %v2744, %v2740
  %v3749 = vpack.c.b16 %v2749, %v2745
  %v3750 = vpack.c.b16 %v2750, %v2746
  %v3751 = vpack.c.b16 %v2751, %v2747
  %v3752 = vpack.c.b16 %v2752, %v2748
  %v3753 = vpack.c.b16 %v2757, %v2753
  %v3754 = vpack.c.b16 %v2758, %v2754
  %v3755 = vpack.c.b16 %v2759, %v2755
  %v3756 = vpack.c.b16 %v2760, %v2756
  %v3757 = vpack.c.b16 %v2765, %v2761
  %v3758 = vpack.c.b16 %v2766, %v2762
  %v3759 = vpack.c.b16 %v2767, %v2763
  %v3760 = vpack.c.b16 %v2768, %v2764
  %v3761 = vpack.c.b16 %v2773, %v2769
  %v3762 = vpack.c.b16 %v2774, %v2770
  %v3763 = vpack.c.b16 %v2775, %v2771
  %v3764 = vpack.c.b16 %v2776, %v2772
  %v3765 = vpack.c.b16 %v2781, %v2777
  %v3766 = vpack.c.b16 %v2782, %v2778
  %v3767 = vpack.c.b16 %v2783, %v2779
  %v3768 = vpack.c.b16 %v2784, %v2780
  %v3769 = vpack.c.b16 %v2789, %v2785
  %v3770 = vpack.c.b16 %v2790, %v2786
  %v3771 = vpack.c.b16 %v2791, %v2787
  %v3772 = vpack.c.b16 %v2792, %v2788
  %v3773 = vpack.c.b16 %v2797, %v2793
  %v3774 = vpack.c.b16 %v2798, %v2794
  %v3775 = vpack.c.b16 %v2799, %v2795
  %v3776 = vpack.c.b16 %v2800, %v2796
  %v3777 = vpack.c.b16 %v2805, %v2801
  %v3778 = vpack.c.b16 %v2806, %v2802
  %v3779 = vpack.c.b16 %v2807, %v2803
  %v3780 = vpack.c.b16 %v2808, %v2804
  %v3781 = vpack.c.b16 %v2813, %v2809
  %v3782 = vpack.c.b16 %v2814, %v2810
  %v3783 = vpack.c.b16 %v2815, %v2811
  %v3784 = vpack.c.b16 %v2816, %v2812
  %v3785 = vpack.c.b16 %v2821, %v2817
  %v3786 = vpack.c.b16 %v2822, %v2818
  %v3787 = vpack.c.b16 %v2823, %v2819
  %v3788 = vpack.c.b16 %v2824, %v2820
  %v3789 = vpack.c.b16 %v2829, %v2825
  %v3790 = vpack.c.b16 %v2830, %v2826
  %v3791 = vpack.c.b16 %v2831, %v2827
  %v3792 = vpack.c.b16 %v2832, %v2828
  %v3793 = vpack.c.b16 %v2837, %v2833
  %v3794 = vpack.c.b16 %v2838, %v2834
  %v3795 = vpack.c.b16 %v2839, %v2835
  %v3796 = vpack.c.b16 %v2840, %v2836
  %v3797 = vpack.c.b16 %v2845, %v2841
  %v3798 = vpack.c.b16 %v2846, %v2842
  %v3799 = vpack.c.b16 %v2847, %v2843
  %v3800 = vpack.c.b16 %v2848, %v2844
  %v3801 = vpack.c.b16 %v2853, %v2849
  %v3802 = vpack.c.b16 %v2854, %v2850
  %v3803 = vpack.c.b16 %v2855, %v2851
  %v3804 = vpack.c.b16 %v2856, %v2852
  %v3805 = vpack.c.b16 %v2861, %v2857
  %v3806 = vpack.c.b16 %v2862, %v2858
  %v3807 = vpack.c.b16 %v2863, %v2859
  %v3808 = vpack.c.b16 %v2864, %v2860
  %v3809 = vpack.c.b16 %v2869, %v2865
  %v3810 = vpack.c.b16 %v2870, %v2866
  %v3811 = vpack.c.b16 %v2871, %v2867
  %v3812 = vpack.c.b16 %v2872, %v2868
  %v3813 = vpack.c.b16 %v2877, %v2873
  %v3814 = vpack.c.b16 %v2878, %v2874
  %v3815 = vpack.c.b16 %v2879, %v2875
  %v3816 = vpack.c.b16 %v2880, %v2876
  %v3817 = vpack.c.b16 %v2885, %v2881
  %v3818 = vpack.c.b16 %v2886, %v2882
  %v3819 = vpack.c.b16 %v2887, %v2883
  %v3820 = vpack.c.b16 %v2888, %v2884
  %v3821 = vpack.c.b16 %v2893, %v2889
  %v3822 = vpack.c.b16 %v2894, %v2890
  %v3823 = vpack.c.b16 %v2895, %v2891
  %v3824 = vpack.c.b16 %v2896, %v2892
  %v3825 = vpack.c.b16 %v2901, %v2897
  %v3826 = vpack.c.b16 %v2902, %v2898
  %v3827 = vpack.c.b16 %v2903, %v2899
  %v3828 = vpack.c.b16 %v2904, %v2900
  %v3829 = vpack.c.b16 %v2909, %v2905
  %v3830 = vpack.c.b16 %v2910, %v2906
  %v3831 = vpack.c.b16 %v2911, %v2907
  %v3832 = vpack.c.b16 %v2912, %v2908
  %v3833 = vpack.c.b16 %v2917, %v2913
  %v3834 = vpack.c.b16 %v2918, %v2914
  %v3835 = vpack.c.b16 %v2919, %v2915
  %v3836 = vpack.c.b16 %v2920, %v2916
  %v3837 = vpack.c.b16 %v2925, %v2921
  %v3838 = vpack.c.b16 %v2926, %v2922
  %v3839 = vpack.c.b16 %v2927, %v2923
  %v3840 = vpack.c.b16 %v2928, %v2924
  %v3841 = vpack.c.b16 %v2933, %v2929
  %v3842 = vpack.c.b16 %v2934, %v2930
  %v3843 = vpack.c.b16 %v2935, %v2931
  %v3844 = vpack.c.b16 %v2936, %v2932
  %v3845 = vpack.c.b16 %v2941, %v2937
  %v3846 = vpack.c.b16 %v2942, %v2938
  %v3847 = vpack.c.b16 %v2943, %v2939
  %v3848 = vpack.c.b16 %v2944, %v2940
  %v3849 = vpack.c.b16 %v2949, %v2945
  %v3850 = vpack.c.b16 %v2950, %v2946
  %v3851 = vpack.c.b16 %v2951, %v2947
  %v3852 = vpack.c.b16 %v2952, %v2948
  %v3853 = vpack.c.b16 %v2957, %v2953
  %v3854 = vpack.c.b16 %v2958, %v2954
  %v3855 = vpack.c.b16 %v2959, %v2955
  %v3856 = vpack.c.b16 %v2960, %v2956
  %v3857 = vpack.c.b16 %v2965, %v2961
  %v3858 = vpack.c.b16 %v2966, %v2962
  %v3859 = vpack.c.b16 %v2967, %v2963
  %v3860 = vpack.c.b16 %v2968, %v2964
  %v3861 = vpack.c.b16 %v2973, %v2969
  %v3862 = vpack.c.b16 %v2974, %v2970
  %v3863 = vpack.c.b16 %v2975, %v2971
  %v3864 = vpack.c.b16 %v2976, %v2972
  %v3865 = vpack.c.b16 %v2981, %v2977
  %v3866 = vpack.c.b16 %v2982, %v2978
  %v3867 = vpack.c.b16 %v2983, %v2979
  %v3868 = vpack.c.b16 %v2984, %v2980
  %v3869 = vpack.c.b16 %v2989, %v2985
  %v3870 = vpack.c.b16 %v2990, %v2986
  %v3871 = vpack.c.b16 %v2991, %v2987
  %v3872 = vpack.c.b16 %v2992, %v2988
  %v3873 = vpack.c.b16 %v2997, %v2993
  %v3874 = vpack.c.b16 %v2998, %v2994
  %v3875 = vpack.c.b16 %v2999, %v2995
  %v3876 = vpack.c.b16 %v3000, %v2996
  %v3877 = vpack.c.b16 %v3005, %v3001
  %v3878 = vpack.c.b16 %v3006, %v3002
  %v3879 = vpack.c.b16 %v3007, %v3003
  %v3880 = vpack.c.b16 %v3008, %v3004
  %v3881 = vpack.c.b16 %v3013, %v3009
  %v3882 = vpack.c.b16 %v3014, %v3010
  %v3883 = vpack.c.b16 %v3015, %v3011
  %v3884 = vpack.c.b16 %v3016, %v3012
  %v3885 = vpack.c.b16 %v3021, %v3017
  %v3886 = vpack.c.b16 %v3022, %v3018
  %v3887 = vpack.c.b16 %v3023, %v3019
  %v3888 = vpack.c.b16 %v3024, %v3020
  %v3889 = vpack.c.b16 %v3029, %v3025
  %v3890 = vpack.c.b16 %v3030, %v3026
  %v3891 = vpack.c.b16 %v3031, %v3027
  %v3892 = vpack.c.b16 %v3032, %v3028
  %v3893 = vpack.c.b16 %v3037, %v3033
  %v3894 = vpack.c.b16 %v3038, %v3034
  %v3895 = vpack.c.b16 %v3039, %v3035
  %v3896 = vpack.c.b16 %v3040, %v3036
  %v3897 = vpack.c.b16 %v3045, %v3041
  %v3898 = vpack.c.b16 %v3046, %v3042
  %v3899 = vpack.c.b16 %v3047, %v3043
  %v3900 = vpack.c.b16 %v3048, %v3044
  %v3901 = vpack.c.b16 %v3053, %v3049
  %v3902 = vpack.c.b16 %v3054, %v3050
  %v3903 = vpack.c.b16 %v3055, %v3051
  %v3904 = vpack.c.b16 %v3056, %v3052
  %v3905 = vpack.c.b16 %v3061, %v3057
  %v3906 = vpack.c.b16 %v3062, %v3058
  %v3907 = vpack.c.b16 %v3063, %v3059
  %v3908 = vpack.c.b16 %v3064, %v3060
  %v3909 = vpack.c.b16 %v3069, %v3065
  %v3910 = vpack.c.b16 %v3070, %v3066
  %v3911 = vpack.c.b16 %v3071, %v3067
  %v3912 = vpack.c.b16 %v3072, %v3068
  %v3913 = vpack.c.b16 %v3077, %v3073
  %v3914 = vpack.c.b16 %v3078, %v3074
  %v3915 = vpack.c.b16 %v3079, %v3075
  %v3916 = vpack.c.b16 %v3080, %v3076
  %v3917 = vpack.c.b16 %v3085, %v3081
  %v3918 = vpack.c.b16 %v3086, %v3082
  %v3919 = vpack.c.b16 %v3087, %v3083
  %v3920 = vpack.c.b16 %v3088, %v3084
  %v3921 = vpack.c.b16 %v3093, %v3089
  %v3922 = vpack.c.b16 %v3094, %v3090
  %v3923 = vpack.c.b16 %v3095, %v3091
  %v3924 = vpack.c.b16 %v3096, %v3092
  %v3925 = vpack.c.b16 %v3101, %v3097
  %v3926 = vpack.c.b16 %v3102, %v3098
  %v3927 = vpack.c.b16 %v3103, %v3099
  %v3928 = vpack.c.b16 %v3104, %v3100
  %v3929 = vpack.c.b16 %v3109, %v3105
  %v3930 = vpack.c.b16 %v3110, %v3106
  %v3931 = vpack.c.b16 %v3111, %v3107
  %v3932 = vpack.c.b16 %v3112, %v3108
  %v3933 = vpack.c.b16 %v3117, %v3113
  %v3934 = vpack.c.b16 %v3118, %v3114
  %v3935 = vpack.c.b16 %v3119, %v3115
  %v3936 = vpack.c.b16 %v3120, %v3116
  %v3937 = vpack.c.b16 %v3125, %v3121
  %v3938 = vpack.c.b16 %v3126, %v3122
  %v3939 = vpack.c.b16 %v3127, %v3123
  %v3940 = vpack.c.b16 %v3128, %v3124
  %v3941 = vpack.c.b16 %v3133, %v3129
  %v3942 = vpack.c.b16 %v3134, %v3130
  %v3943 = vpack.c.b16 %v3135, %v3131
  %v3944 = vpack.c.b16 %v3136, %v3132
  %v3945 = vpack.c.b16 %v3141, %v3137
  %v3946 = vpack.c.b16 %v3142, %v3138
  %v3947 = vpack.c.b16 %v3143, %v3139
  %v3948 = vpack.c.b16 %v3144, %v3140
  %v3949 = vpack.c.b16 %v3149, %v3145
  %v3950 = vpack.c.b16 %v3150, %v3146
  %v3951 = vpack.c.b16 %v3151, %v3147
  %v3952 = vpack.c.b16 %v3152, %v3148
  %v3953 = vpack.c.b16 %v3157, %v3153
  %v3954 = vpack.c.b16 %v3158, %v3154
  %v3955 = vpack.c.b16 %v3159, %v3155
  %v3956 = vpack.c.b16 %v3160, %v3156
  %v3957 = vpack.c.b16 %v3165, %v3161
  %v3958 = vpack.c.b16 %v3166, %v3162
  %v3959 = vpack.c.b16 %v3167, %v3163
  %v3960 = vpack.c.b16 %v3168, %v3164
  %v3961 = vpack.c.b16 %v3173, %v3169
  %v3962 = vpack.c.b16 %v3174, %v3170
  %v3963 = vpack.c.b16 %v3175, %v3171
  %v3964 = vpack.c.b16 %v3176, %v3172
  %v3965 = vpack.c.b16 %v3181, %v3177
  %v3966 = vpack.c.b16 %v3182, %v3178
  %v3967 = vpack.c.b16 %v3183, %v3179
  %v3968 = vpack.c.b16 %v3184, %v3180
  %v3969 = vpack.c.b16 %v3189, %v3185
  %v3970 = vpack.c.b16 %v3190, %v3186
  %v3971 = vpack.c.b16 %v3191, %v3187
  %v3972 = vpack.c.b16 %v3192, %v3188
  %v3973 = vpack.c.b16 %v3197, %v3193
  %v3974 = vpack.c.b16 %v3198, %v3194
  %v3975 = vpack.c.b16 %v3199, %v3195
  %v3976 = vpack.c.b16 %v3200, %v3196
  %v3977 = vpack.c.b16 %v3205, %v3201
  %v3978 = vpack.c.b16 %v3206, %v3202
  %v3979 = vpack.c.b16 %v3207, %v3203
  %v3980 = vpack.c.b16 %v3208, %v3204
  %v3981 = vpack.c.b16 %v3213, %v3209
  %v3982 = vpack.c.b16 %v3214, %v3210
  %v3983 = vpack.c.b16 %v3215, %v3211
  %v3984 = vpack.c.b16 %v3216, %v3212
  %4753 = vmatprep.subr.bf16.mxu0 %v3246
  %4754 = vmatpush1.bf16.msra.mxu0 %v3245
  %4755 = vmatprep.subr.bf16.mxu0 %v3242
  %4756 = vmatpush1.bf16.msra.mxu0 %v3241
  %4757 = vmatprep.subr.bf16.mxu0 %v3238
  %4758 = vmatpush1.bf16.msra.mxu0 %v3237
  %4759 = vmatprep.subr.bf16.mxu0 %v3234
  %4760 = vmatpush1.bf16.msra.mxu0 %v3233
  %4761 = vmatprep.subr.bf16.mxu0 %v3230
  %4762 = vmatpush1.bf16.msra.mxu0 %v3229
  %4763 = vmatprep.subr.bf16.mxu0 %v3226
  %4764 = vmatpush1.bf16.msra.mxu0 %v3225
  %4765 = vmatprep.subr.bf16.mxu0 %v3222
  %4766 = vmatpush1.bf16.msra.mxu0 %v3221
  %4767 = vmatprep.subr.bf16.mxu0 %v3218
  %4768 = vmatpush1.bf16.msra.mxu0 %v3217
  %4769 = vmatprep.subr.bf16.mxu0 %v3278
  %4770 = vmatpush2.bf16.msra.mxu0 %v3277
  %4771 = vmatprep.subr.bf16.mxu0 %v3274
  %4772 = vmatpush2.bf16.msra.mxu0 %v3273
  %4773 = vmatprep.subr.bf16.mxu0 %v3270
  %4774 = vmatpush2.bf16.msra.mxu0 %v3269
  %4775 = vmatprep.subr.bf16.mxu0 %v3266
  %4776 = vmatpush2.bf16.msra.mxu0 %v3265
  %4777 = vmatprep.subr.bf16.mxu0 %v3262
  %4778 = vmatpush2.bf16.msra.mxu0 %v3261
  %4779 = vmatprep.subr.bf16.mxu0 %v3258
  %4780 = vmatpush2.bf16.msra.mxu0 %v3257
  %4781 = vmatprep.subr.bf16.mxu0 %v3254
  %4782 = vmatpush2.bf16.msra.mxu0 %v3253
  %4783 = vmatprep.subr.bf16.mxu0 %v3250
  %4784 = vmatpush2.bf16.msra.mxu0 %v3249
  %4785 = vmatprep.mubr.bf16.mxu0 %v866
  %4786 = vmatmul.mubr.bf16.gmra.mxu0 %v865
  %v4787 = vpop.f32.mrf.mxu0
  %v4788 = vadd.f32 %v812, %v4787
  %v4789 = vpop.f32.mrf.mxu0
  %v4790 = vadd.f32 %v816, %v4789
  %v4791 = vpop.f32.mrf.mxu0
  %v4792 = vpop.f32.mrf.mxu0
  %4793 = vdwg.mxu0
  %4794 = vmatprep.subr.bf16.mxu0 %v3310
  %4795 = vmatpush1.bf16.msra.mxu0 %v3309
  %4796 = vmatprep.subr.bf16.mxu0 %v3306
  %4797 = vmatpush1.bf16.msra.mxu0 %v3305
  %4798 = vmatprep.subr.bf16.mxu0 %v3302
  %4799 = vmatpush1.bf16.msra.mxu0 %v3301
  %4800 = vmatprep.subr.bf16.mxu0 %v3298
  %4801 = vmatpush1.bf16.msra.mxu0 %v3297
  %4802 = vmatprep.subr.bf16.mxu0 %v3294
  %4803 = vmatpush1.bf16.msra.mxu0 %v3293
  %4804 = vmatprep.subr.bf16.mxu0 %v3290
  %4805 = vmatpush1.bf16.msra.mxu0 %v3289
  %4806 = vmatprep.subr.bf16.mxu0 %v3286
  %4807 = vmatpush1.bf16.msra.mxu0 %v3285
  %4808 = vmatprep.subr.bf16.mxu0 %v3282
  %4809 = vmatpush1.bf16.msra.mxu0 %v3281
  %4810 = vmatprep.subr.bf16.mxu0 %v3342
  %4811 = vmatpush2.bf16.msra.mxu0 %v3341
  %4812 = vmatprep.subr.bf16.mxu0 %v3338
  %4813 = vmatpush2.bf16.msra.mxu0 %v3337
  %4814 = vmatprep.subr.bf16.mxu0 %v3334
  %4815 = vmatpush2.bf16.msra.mxu0 %v3333
  %4816 = vmatprep.subr.bf16.mxu0 %v3330
  %4817 = vmatpush2.bf16.msra.mxu0 %v3329
  %4818 = vmatprep.subr.bf16.mxu0 %v3326
  %4819 = vmatpush2.bf16.msra.mxu0 %v3325
  %4820 = vmatprep.subr.bf16.mxu0 %v3322
  %4821 = vmatpush2.bf16.msra.mxu0 %v3321
  %4822 = vmatprep.subr.bf16.mxu0 %v3318
  %4823 = vmatpush2.bf16.msra.mxu0 %v3317
  %4824 = vmatprep.subr.bf16.mxu0 %v3314
  %4825 = vmatpush2.bf16.msra.mxu0 %v3313
  %4826 = vmatprep.mubr.bf16.mxu0 %v868
  %4827 = vmatmul.mubr.bf16.gmra.mxu0 %v867
  %v4828 = vpop.f32.mrf.mxu0
  %v4829 = vadd.f32 %v4788, %v4828
  %v4830 = vpop.f32.mrf.mxu0
  %v4831 = vadd.f32 %v4790, %v4830
  %v4832 = vpop.f32.mrf.mxu0
  %v4833 = vpop.f32.mrf.mxu0
  %4834 = vdwg.mxu0
  %4835 = vmatprep.subr.bf16.mxu0 %v3374
  %4836 = vmatpush1.bf16.msra.mxu0 %v3373
  %4837 = vmatprep.subr.bf16.mxu0 %v3370
  %4838 = vmatpush1.bf16.msra.mxu0 %v3369
  %4839 = vmatprep.subr.bf16.mxu0 %v3366
  %4840 = vmatpush1.bf16.msra.mxu0 %v3365
  %4841 = vmatprep.subr.bf16.mxu0 %v3362
  %4842 = vmatpush1.bf16.msra.mxu0 %v3361
  %4843 = vmatprep.subr.bf16.mxu0 %v3358
  %4844 = vmatpush1.bf16.msra.mxu0 %v3357
  %4845 = vmatprep.subr.bf16.mxu0 %v3354
  %4846 = vmatpush1.bf16.msra.mxu0 %v3353
  %4847 = vmatprep.subr.bf16.mxu0 %v3350
  %4848 = vmatpush1.bf16.msra.mxu0 %v3349
  %4849 = vmatprep.subr.bf16.mxu0 %v3346
  %4850 = vmatpush1.bf16.msra.mxu0 %v3345
  %4851 = vmatprep.subr.bf16.mxu0 %v3406
  %4852 = vmatpush2.bf16.msra.mxu0 %v3405
  %4853 = vmatprep.subr.bf16.mxu0 %v3402
  %4854 = vmatpush2.bf16.msra.mxu0 %v3401
  %4855 = vmatprep.subr.bf16.mxu0 %v3398
  %4856 = vmatpush2.bf16.msra.mxu0 %v3397
  %4857 = vmatprep.subr.bf16.mxu0 %v3394
  %4858 = vmatpush2.bf16.msra.mxu0 %v3393
  %4859 = vmatprep.subr.bf16.mxu0 %v3390
  %4860 = vmatpush2.bf16.msra.mxu0 %v3389
  %4861 = vmatprep.subr.bf16.mxu0 %v3386
  %4862 = vmatpush2.bf16.msra.mxu0 %v3385
  %4863 = vmatprep.subr.bf16.mxu0 %v3382
  %4864 = vmatpush2.bf16.msra.mxu0 %v3381
  %4865 = vmatprep.subr.bf16.mxu0 %v3378
  %4866 = vmatpush2.bf16.msra.mxu0 %v3377
  %4867 = vmatprep.mubr.bf16.mxu0 %v870
  %4868 = vmatmul.mubr.bf16.gmra.mxu0 %v869
  %v4869 = vpop.f32.mrf.mxu0
  %v4870 = vadd.f32 %v4829, %v4869
  %v4871 = vpop.f32.mrf.mxu0
  %v4872 = vadd.f32 %v4831, %v4871
  %v4873 = vpop.f32.mrf.mxu0
  %v4874 = vpop.f32.mrf.mxu0
  %4875 = vdwg.mxu0
  %4876 = vmatprep.subr.bf16.mxu0 %v3438
  %4877 = vmatpush1.bf16.msra.mxu0 %v3437
  %4878 = vmatprep.subr.bf16.mxu0 %v3434
  %4879 = vmatpush1.bf16.msra.mxu0 %v3433
  %4880 = vmatprep.subr.bf16.mxu0 %v3430
  %4881 = vmatpush1.bf16.msra.mxu0 %v3429
  %4882 = vmatprep.subr.bf16.mxu0 %v3426
  %4883 = vmatpush1.bf16.msra.mxu0 %v3425
  %4884 = vmatprep.subr.bf16.mxu0 %v3422
  %4885 = vmatpush1.bf16.msra.mxu0 %v3421
  %4886 = vmatprep.subr.bf16.mxu0 %v3418
  %4887 = vmatpush1.bf16.msra.mxu0 %v3417
  %4888 = vmatprep.subr.bf16.mxu0 %v3414
  %4889 = vmatpush1.bf16.msra.mxu0 %v3413
  %4890 = vmatprep.subr.bf16.mxu0 %v3410
  %4891 = vmatpush1.bf16.msra.mxu0 %v3409
  %4892 = vmatprep.subr.bf16.mxu0 %v3470
  %4893 = vmatpush2.bf16.msra.mxu0 %v3469
  %4894 = vmatprep.subr.bf16.mxu0 %v3466
  %4895 = vmatpush2.bf16.msra.mxu0 %v3465
  %4896 = vmatprep.subr.bf16.mxu0 %v3462
  %4897 = vmatpush2.bf16.msra.mxu0 %v3461
  %4898 = vmatprep.subr.bf16.mxu0 %v3458
  %4899 = vmatpush2.bf16.msra.mxu0 %v3457
  %4900 = vmatprep.subr.bf16.mxu0 %v3454
  %4901 = vmatpush2.bf16.msra.mxu0 %v3453
  %4902 = vmatprep.subr.bf16.mxu0 %v3450
  %4903 = vmatpush2.bf16.msra.mxu0 %v3449
  %4904 = vmatprep.subr.bf16.mxu0 %v3446
  %4905 = vmatpush2.bf16.msra.mxu0 %v3445
  %4906 = vmatprep.subr.bf16.mxu0 %v3442
  %4907 = vmatpush2.bf16.msra.mxu0 %v3441
  %4908 = vmatprep.mubr.bf16.mxu0 %v872
  %4909 = vmatmul.mubr.bf16.gmra.mxu0 %v871
  %v4910 = vpop.f32.mrf.mxu0
  %v4911 = vadd.f32 %v4870, %v4910
  %v4912 = vpop.f32.mrf.mxu0
  %v4913 = vadd.f32 %v4872, %v4912
  %v4914 = vpop.f32.mrf.mxu0
  %v4915 = vpop.f32.mrf.mxu0
  %4916 = vdwg.mxu0
  %4917 = vmatprep.subr.bf16.mxu0 %v3502
  %4918 = vmatpush1.bf16.msra.mxu0 %v3501
  %4919 = vmatprep.subr.bf16.mxu0 %v3498
  %4920 = vmatpush1.bf16.msra.mxu0 %v3497
  %4921 = vmatprep.subr.bf16.mxu0 %v3494
  %4922 = vmatpush1.bf16.msra.mxu0 %v3493
  %4923 = vmatprep.subr.bf16.mxu0 %v3490
  %4924 = vmatpush1.bf16.msra.mxu0 %v3489
  %4925 = vmatprep.subr.bf16.mxu0 %v3486
  %4926 = vmatpush1.bf16.msra.mxu0 %v3485
  %4927 = vmatprep.subr.bf16.mxu0 %v3482
  %4928 = vmatpush1.bf16.msra.mxu0 %v3481
  %4929 = vmatprep.subr.bf16.mxu0 %v3478
  %4930 = vmatpush1.bf16.msra.mxu0 %v3477
  %4931 = vmatprep.subr.bf16.mxu0 %v3474
  %4932 = vmatpush1.bf16.msra.mxu0 %v3473
  %4933 = vmatprep.subr.bf16.mxu0 %v3534
  %4934 = vmatpush2.bf16.msra.mxu0 %v3533
  %4935 = vmatprep.subr.bf16.mxu0 %v3530
  %4936 = vmatpush2.bf16.msra.mxu0 %v3529
  %4937 = vmatprep.subr.bf16.mxu0 %v3526
  %4938 = vmatpush2.bf16.msra.mxu0 %v3525
  %4939 = vmatprep.subr.bf16.mxu0 %v3522
  %4940 = vmatpush2.bf16.msra.mxu0 %v3521
  %4941 = vmatprep.subr.bf16.mxu0 %v3518
  %4942 = vmatpush2.bf16.msra.mxu0 %v3517
  %4943 = vmatprep.subr.bf16.mxu0 %v3514
  %4944 = vmatpush2.bf16.msra.mxu0 %v3513
  %4945 = vmatprep.subr.bf16.mxu0 %v3510
  %4946 = vmatpush2.bf16.msra.mxu0 %v3509
  %4947 = vmatprep.subr.bf16.mxu0 %v3506
  %4948 = vmatpush2.bf16.msra.mxu0 %v3505
  %4949 = vmatprep.mubr.bf16.mxu0 %v874
  %4950 = vmatmul.mubr.bf16.gmra.mxu0 %v873
  %v4951 = vpop.f32.mrf.mxu0
  %v4952 = vadd.f32 %v4911, %v4951
  %v4953 = vpop.f32.mrf.mxu0
  %v4954 = vadd.f32 %v4913, %v4953
  %v4955 = vpop.f32.mrf.mxu0
  %v4956 = vpop.f32.mrf.mxu0
  %4957 = vdwg.mxu0
  %4958 = vmatprep.subr.bf16.mxu0 %v3566
  %4959 = vmatpush1.bf16.msra.mxu0 %v3565
  %4960 = vmatprep.subr.bf16.mxu0 %v3562
  %4961 = vmatpush1.bf16.msra.mxu0 %v3561
  %4962 = vmatprep.subr.bf16.mxu0 %v3558
  %4963 = vmatpush1.bf16.msra.mxu0 %v3557
  %4964 = vmatprep.subr.bf16.mxu0 %v3554
  %4965 = vmatpush1.bf16.msra.mxu0 %v3553
  %4966 = vmatprep.subr.bf16.mxu0 %v3550
  %4967 = vmatpush1.bf16.msra.mxu0 %v3549
  %4968 = vmatprep.subr.bf16.mxu0 %v3546
  %4969 = vmatpush1.bf16.msra.mxu0 %v3545
  %4970 = vmatprep.subr.bf16.mxu0 %v3542
  %4971 = vmatpush1.bf16.msra.mxu0 %v3541
  %4972 = vmatprep.subr.bf16.mxu0 %v3538
  %4973 = vmatpush1.bf16.msra.mxu0 %v3537
  %4974 = vmatprep.subr.bf16.mxu0 %v3598
  %4975 = vmatpush2.bf16.msra.mxu0 %v3597
  %4976 = vmatprep.subr.bf16.mxu0 %v3594
  %4977 = vmatpush2.bf16.msra.mxu0 %v3593
  %4978 = vmatprep.subr.bf16.mxu0 %v3590
  %4979 = vmatpush2.bf16.msra.mxu0 %v3589
  %4980 = vmatprep.subr.bf16.mxu0 %v3586
  %4981 = vmatpush2.bf16.msra.mxu0 %v3585
  %4982 = vmatprep.subr.bf16.mxu0 %v3582
  %4983 = vmatpush2.bf16.msra.mxu0 %v3581
  %4984 = vmatprep.subr.bf16.mxu0 %v3578
  %4985 = vmatpush2.bf16.msra.mxu0 %v3577
  %4986 = vmatprep.subr.bf16.mxu0 %v3574
  %4987 = vmatpush2.bf16.msra.mxu0 %v3573
  %4988 = vmatprep.subr.bf16.mxu0 %v3570
  %4989 = vmatpush2.bf16.msra.mxu0 %v3569
  %4990 = vmatprep.mubr.bf16.mxu0 %v876
  %4991 = vmatmul.mubr.bf16.gmra.mxu0 %v875
  %v4992 = vpop.f32.mrf.mxu0
  %v4993 = vadd.f32 %v4952, %v4992
  %v4994 = vpop.f32.mrf.mxu0
  %v4995 = vadd.f32 %v4954, %v4994
  %v4996 = vpop.f32.mrf.mxu0
  %v4997 = vpop.f32.mrf.mxu0
  %4998 = vdwg.mxu0
  %4999 = vmatprep.subr.bf16.mxu0 %v3630
  %5000 = vmatpush1.bf16.msra.mxu0 %v3629
  %5001 = vmatprep.subr.bf16.mxu0 %v3626
  %5002 = vmatpush1.bf16.msra.mxu0 %v3625
  %5003 = vmatprep.subr.bf16.mxu0 %v3622
  %5004 = vmatpush1.bf16.msra.mxu0 %v3621
  %5005 = vmatprep.subr.bf16.mxu0 %v3618
  %5006 = vmatpush1.bf16.msra.mxu0 %v3617
  %5007 = vmatprep.subr.bf16.mxu0 %v3614
  %5008 = vmatpush1.bf16.msra.mxu0 %v3613
  %5009 = vmatprep.subr.bf16.mxu0 %v3610
  %5010 = vmatpush1.bf16.msra.mxu0 %v3609
  %5011 = vmatprep.subr.bf16.mxu0 %v3606
  %5012 = vmatpush1.bf16.msra.mxu0 %v3605
  %5013 = vmatprep.subr.bf16.mxu0 %v3602
  %5014 = vmatpush1.bf16.msra.mxu0 %v3601
  %5015 = vmatprep.subr.bf16.mxu0 %v3662
  %5016 = vmatpush2.bf16.msra.mxu0 %v3661
  %5017 = vmatprep.subr.bf16.mxu0 %v3658
  %5018 = vmatpush2.bf16.msra.mxu0 %v3657
  %5019 = vmatprep.subr.bf16.mxu0 %v3654
  %5020 = vmatpush2.bf16.msra.mxu0 %v3653
  %5021 = vmatprep.subr.bf16.mxu0 %v3650
  %5022 = vmatpush2.bf16.msra.mxu0 %v3649
  %5023 = vmatprep.subr.bf16.mxu0 %v3646
  %5024 = vmatpush2.bf16.msra.mxu0 %v3645
  %5025 = vmatprep.subr.bf16.mxu0 %v3642
  %5026 = vmatpush2.bf16.msra.mxu0 %v3641
  %5027 = vmatprep.subr.bf16.mxu0 %v3638
  %5028 = vmatpush2.bf16.msra.mxu0 %v3637
  %5029 = vmatprep.subr.bf16.mxu0 %v3634
  %5030 = vmatpush2.bf16.msra.mxu0 %v3633
  %5031 = vmatprep.mubr.bf16.mxu0 %v878
  %5032 = vmatmul.mubr.bf16.gmra.mxu0 %v877
  %v5033 = vpop.f32.mrf.mxu0
  %v5034 = vadd.f32 %v4993, %v5033
  %v5035 = vpop.f32.mrf.mxu0
  %v5036 = vadd.f32 %v4995, %v5035
  %v5037 = vpop.f32.mrf.mxu0
  %v5038 = vpop.f32.mrf.mxu0
  %5039 = vdwg.mxu0
  %5040 = vmatprep.subr.bf16.mxu0 %v3694
  %5041 = vmatpush1.bf16.msra.mxu0 %v3693
  %5042 = vmatprep.subr.bf16.mxu0 %v3690
  %5043 = vmatpush1.bf16.msra.mxu0 %v3689
  %5044 = vmatprep.subr.bf16.mxu0 %v3686
  %5045 = vmatpush1.bf16.msra.mxu0 %v3685
  %5046 = vmatprep.subr.bf16.mxu0 %v3682
  %5047 = vmatpush1.bf16.msra.mxu0 %v3681
  %5048 = vmatprep.subr.bf16.mxu0 %v3678
  %5049 = vmatpush1.bf16.msra.mxu0 %v3677
  %5050 = vmatprep.subr.bf16.mxu0 %v3674
  %5051 = vmatpush1.bf16.msra.mxu0 %v3673
  %5052 = vmatprep.subr.bf16.mxu0 %v3670
  %5053 = vmatpush1.bf16.msra.mxu0 %v3669
  %5054 = vmatprep.subr.bf16.mxu0 %v3666
  %5055 = vmatpush1.bf16.msra.mxu0 %v3665
  %5056 = vmatprep.subr.bf16.mxu0 %v3726
  %5057 = vmatpush2.bf16.msra.mxu0 %v3725
  %5058 = vmatprep.subr.bf16.mxu0 %v3722
  %5059 = vmatpush2.bf16.msra.mxu0 %v3721
  %5060 = vmatprep.subr.bf16.mxu0 %v3718
  %5061 = vmatpush2.bf16.msra.mxu0 %v3717
  %5062 = vmatprep.subr.bf16.mxu0 %v3714
  %5063 = vmatpush2.bf16.msra.mxu0 %v3713
  %5064 = vmatprep.subr.bf16.mxu0 %v3710
  %5065 = vmatpush2.bf16.msra.mxu0 %v3709
  %5066 = vmatprep.subr.bf16.mxu0 %v3706
  %5067 = vmatpush2.bf16.msra.mxu0 %v3705
  %5068 = vmatprep.subr.bf16.mxu0 %v3702
  %5069 = vmatpush2.bf16.msra.mxu0 %v3701
  %5070 = vmatprep.subr.bf16.mxu0 %v3698
  %5071 = vmatpush2.bf16.msra.mxu0 %v3697
  %5072 = vmatprep.mubr.bf16.mxu0 %v880
  %5073 = vmatmul.mubr.bf16.gmra.mxu0 %v879
  %v5074 = vpop.f32.mrf.mxu0
  %v5075 = vadd.f32 %v5034, %v5074
  %v5076 = vpop.f32.mrf.mxu0
  %v5077 = vadd.f32 %v5036, %v5076
  %v5078 = vpop.f32.mrf.mxu0
  %v5079 = vpop.f32.mrf.mxu0
  %5080 = vdwg.mxu0
  %5081 = vmatprep.subr.bf16.mxu0 %v3758
  %5082 = vmatpush1.bf16.msra.mxu0 %v3757
  %5083 = vmatprep.subr.bf16.mxu0 %v3754
  %5084 = vmatpush1.bf16.msra.mxu0 %v3753
  %5085 = vmatprep.subr.bf16.mxu0 %v3750
  %5086 = vmatpush1.bf16.msra.mxu0 %v3749
  %5087 = vmatprep.subr.bf16.mxu0 %v3746
  %5088 = vmatpush1.bf16.msra.mxu0 %v3745
  %5089 = vmatprep.subr.bf16.mxu0 %v3742
  %5090 = vmatpush1.bf16.msra.mxu0 %v3741
  %5091 = vmatprep.subr.bf16.mxu0 %v3738
  %5092 = vmatpush1.bf16.msra.mxu0 %v3737
  %5093 = vmatprep.subr.bf16.mxu0 %v3734
  %5094 = vmatpush1.bf16.msra.mxu0 %v3733
  %5095 = vmatprep.subr.bf16.mxu0 %v3730
  %5096 = vmatpush1.bf16.msra.mxu0 %v3729
  %5097 = vmatprep.subr.bf16.mxu0 %v3790
  %5098 = vmatpush2.bf16.msra.mxu0 %v3789
  %5099 = vmatprep.subr.bf16.mxu0 %v3786
  %5100 = vmatpush2.bf16.msra.mxu0 %v3785
  %5101 = vmatprep.subr.bf16.mxu0 %v3782
  %5102 = vmatpush2.bf16.msra.mxu0 %v3781
  %5103 = vmatprep.subr.bf16.mxu0 %v3778
  %5104 = vmatpush2.bf16.msra.mxu0 %v3777
  %5105 = vmatprep.subr.bf16.mxu0 %v3774
  %5106 = vmatpush2.bf16.msra.mxu0 %v3773
  %5107 = vmatprep.subr.bf16.mxu0 %v3770
  %5108 = vmatpush2.bf16.msra.mxu0 %v3769
  %5109 = vmatprep.subr.bf16.mxu0 %v3766
  %5110 = vmatpush2.bf16.msra.mxu0 %v3765
  %5111 = vmatprep.subr.bf16.mxu0 %v3762
  %5112 = vmatpush2.bf16.msra.mxu0 %v3761
  %5113 = vmatprep.mubr.bf16.mxu0 %v882
  %5114 = vmatmul.mubr.bf16.gmra.mxu0 %v881
  %v5115 = vpop.f32.mrf.mxu0
  %v5116 = vadd.f32 %v5075, %v5115
  %v5117 = vpop.f32.mrf.mxu0
  %v5118 = vadd.f32 %v5077, %v5117
  %v5119 = vpop.f32.mrf.mxu0
  %v5120 = vpop.f32.mrf.mxu0
  %5121 = vdwg.mxu0
  %5122 = vmatprep.subr.bf16.mxu0 %v3822
  %5123 = vmatpush1.bf16.msra.mxu0 %v3821
  %5124 = vmatprep.subr.bf16.mxu0 %v3818
  %5125 = vmatpush1.bf16.msra.mxu0 %v3817
  %5126 = vmatprep.subr.bf16.mxu0 %v3814
  %5127 = vmatpush1.bf16.msra.mxu0 %v3813
  %5128 = vmatprep.subr.bf16.mxu0 %v3810
  %5129 = vmatpush1.bf16.msra.mxu0 %v3809
  %5130 = vmatprep.subr.bf16.mxu0 %v3806
  %5131 = vmatpush1.bf16.msra.mxu0 %v3805
  %5132 = vmatprep.subr.bf16.mxu0 %v3802
  %5133 = vmatpush1.bf16.msra.mxu0 %v3801
  %5134 = vmatprep.subr.bf16.mxu0 %v3798
  %5135 = vmatpush1.bf16.msra.mxu0 %v3797
  %5136 = vmatprep.subr.bf16.mxu0 %v3794
  %5137 = vmatpush1.bf16.msra.mxu0 %v3793
  %5138 = vmatprep.subr.bf16.mxu0 %v3854
  %5139 = vmatpush2.bf16.msra.mxu0 %v3853
  %5140 = vmatprep.subr.bf16.mxu0 %v3850
  %5141 = vmatpush2.bf16.msra.mxu0 %v3849
  %5142 = vmatprep.subr.bf16.mxu0 %v3846
  %5143 = vmatpush2.bf16.msra.mxu0 %v3845
  %5144 = vmatprep.subr.bf16.mxu0 %v3842
  %5145 = vmatpush2.bf16.msra.mxu0 %v3841
  %5146 = vmatprep.subr.bf16.mxu0 %v3838
  %5147 = vmatpush2.bf16.msra.mxu0 %v3837
  %5148 = vmatprep.subr.bf16.mxu0 %v3834
  %5149 = vmatpush2.bf16.msra.mxu0 %v3833
  %5150 = vmatprep.subr.bf16.mxu0 %v3830
  %5151 = vmatpush2.bf16.msra.mxu0 %v3829
  %5152 = vmatprep.subr.bf16.mxu0 %v3826
  %5153 = vmatpush2.bf16.msra.mxu0 %v3825
  %5154 = vmatprep.mubr.bf16.mxu0 %v884
  %5155 = vmatmul.mubr.bf16.gmra.mxu0 %v883
  %v5156 = vpop.f32.mrf.mxu0
  %v5157 = vadd.f32 %v5116, %v5156
  %v5158 = vpop.f32.mrf.mxu0
  %v5159 = vadd.f32 %v5118, %v5158
  %v5160 = vpop.f32.mrf.mxu0
  %v5161 = vpop.f32.mrf.mxu0
  %5162 = vdwg.mxu0
  %5163 = vmatprep.subr.bf16.mxu0 %v3886
  %5164 = vmatpush1.bf16.msra.mxu0 %v3885
  %5165 = vmatprep.subr.bf16.mxu0 %v3882
  %5166 = vmatpush1.bf16.msra.mxu0 %v3881
  %5167 = vmatprep.subr.bf16.mxu0 %v3878
  %5168 = vmatpush1.bf16.msra.mxu0 %v3877
  %5169 = vmatprep.subr.bf16.mxu0 %v3874
  %5170 = vmatpush1.bf16.msra.mxu0 %v3873
  %5171 = vmatprep.subr.bf16.mxu0 %v3870
  %5172 = vmatpush1.bf16.msra.mxu0 %v3869
  %5173 = vmatprep.subr.bf16.mxu0 %v3866
  %5174 = vmatpush1.bf16.msra.mxu0 %v3865
  %5175 = vmatprep.subr.bf16.mxu0 %v3862
  %5176 = vmatpush1.bf16.msra.mxu0 %v3861
  %5177 = vmatprep.subr.bf16.mxu0 %v3858
  %5178 = vmatpush1.bf16.msra.mxu0 %v3857
  %5179 = vmatprep.subr.bf16.mxu0 %v3918
  %5180 = vmatpush2.bf16.msra.mxu0 %v3917
  %5181 = vmatprep.subr.bf16.mxu0 %v3914
  %5182 = vmatpush2.bf16.msra.mxu0 %v3913
  %5183 = vmatprep.subr.bf16.mxu0 %v3910
  %5184 = vmatpush2.bf16.msra.mxu0 %v3909
  %5185 = vmatprep.subr.bf16.mxu0 %v3906
  %5186 = vmatpush2.bf16.msra.mxu0 %v3905
  %5187 = vmatprep.subr.bf16.mxu0 %v3902
  %5188 = vmatpush2.bf16.msra.mxu0 %v3901
  %5189 = vmatprep.subr.bf16.mxu0 %v3898
  %5190 = vmatpush2.bf16.msra.mxu0 %v3897
  %5191 = vmatprep.subr.bf16.mxu0 %v3894
  %5192 = vmatpush2.bf16.msra.mxu0 %v3893
  %5193 = vmatprep.subr.bf16.mxu0 %v3890
  %5194 = vmatpush2.bf16.msra.mxu0 %v3889
  %5195 = vmatprep.mubr.bf16.mxu0 %v886
  %5196 = vmatmul.mubr.bf16.gmra.mxu0 %v885
  %v5197 = vpop.f32.mrf.mxu0
  %v5198 = vadd.f32 %v5157, %v5197
  %v5199 = vpop.f32.mrf.mxu0
  %v5200 = vadd.f32 %v5159, %v5199
  %v5201 = vpop.f32.mrf.mxu0
  %v5202 = vpop.f32.mrf.mxu0
  %5203 = vdwg.mxu0
  %5204 = vmatprep.subr.bf16.mxu0 %v3950
  %5205 = vmatpush1.bf16.msra.mxu0 %v3949
  %5206 = vmatprep.subr.bf16.mxu0 %v3946
  %5207 = vmatpush1.bf16.msra.mxu0 %v3945
  %5208 = vmatprep.subr.bf16.mxu0 %v3942
  %5209 = vmatpush1.bf16.msra.mxu0 %v3941
  %5210 = vmatprep.subr.bf16.mxu0 %v3938
  %5211 = vmatpush1.bf16.msra.mxu0 %v3937
  %5212 = vmatprep.subr.bf16.mxu0 %v3934
  %5213 = vmatpush1.bf16.msra.mxu0 %v3933
  %5214 = vmatprep.subr.bf16.mxu0 %v3930
  %5215 = vmatpush1.bf16.msra.mxu0 %v3929
  %5216 = vmatprep.subr.bf16.mxu0 %v3926
  %5217 = vmatpush1.bf16.msra.mxu0 %v3925
  %5218 = vmatprep.subr.bf16.mxu0 %v3922
  %5219 = vmatpush1.bf16.msra.mxu0 %v3921
  %5220 = vmatprep.subr.bf16.mxu0 %v3982
  %5221 = vmatpush2.bf16.msra.mxu0 %v3981
  %5222 = vmatprep.subr.bf16.mxu0 %v3978
  %5223 = vmatpush2.bf16.msra.mxu0 %v3977
  %5224 = vmatprep.subr.bf16.mxu0 %v3974
  %5225 = vmatpush2.bf16.msra.mxu0 %v3973
  %5226 = vmatprep.subr.bf16.mxu0 %v3970
  %5227 = vmatpush2.bf16.msra.mxu0 %v3969
  %5228 = vmatprep.subr.bf16.mxu0 %v3966
  %5229 = vmatpush2.bf16.msra.mxu0 %v3965
  %5230 = vmatprep.subr.bf16.mxu0 %v3962
  %5231 = vmatpush2.bf16.msra.mxu0 %v3961
  %5232 = vmatprep.subr.bf16.mxu0 %v3958
  %5233 = vmatpush2.bf16.msra.mxu0 %v3957
  %5234 = vmatprep.subr.bf16.mxu0 %v3954
  %5235 = vmatpush2.bf16.msra.mxu0 %v3953
  %5236 = vmatprep.mubr.bf16.mxu0 %v888
  %5237 = vmatmul.mubr.bf16.gmra.mxu0 %v887
  %v5238 = vpop.f32.mrf.mxu0
  %v5239 = vadd.f32 %v5198, %v5238
  %v5240 = vpop.f32.mrf.mxu0
  %v5241 = vadd.f32 %v5200, %v5240
  %v5242 = vpop.f32.mrf.mxu0
  %v5243 = vpop.f32.mrf.mxu0
  %5244 = vdwg.mxu0
  %5245 = vmatprep.subr.bf16.mxu0 %v3248
  %5246 = vmatpush1.bf16.msra.mxu0 %v3247
  %5247 = vmatprep.subr.bf16.mxu0 %v3244
  %5248 = vmatpush1.bf16.msra.mxu0 %v3243
  %5249 = vmatprep.subr.bf16.mxu0 %v3240
  %5250 = vmatpush1.bf16.msra.mxu0 %v3239
  %5251 = vmatprep.subr.bf16.mxu0 %v3236
  %5252 = vmatpush1.bf16.msra.mxu0 %v3235
  %5253 = vmatprep.subr.bf16.mxu0 %v3232
  %5254 = vmatpush1.bf16.msra.mxu0 %v3231
  %5255 = vmatprep.subr.bf16.mxu0 %v3228
  %5256 = vmatpush1.bf16.msra.mxu0 %v3227
  %5257 = vmatprep.subr.bf16.mxu0 %v3224
  %5258 = vmatpush1.bf16.msra.mxu0 %v3223
  %5259 = vmatprep.subr.bf16.mxu0 %v3220
  %5260 = vmatpush1.bf16.msra.mxu0 %v3219
  %5261 = vmatprep.subr.bf16.mxu0 %v3280
  %5262 = vmatpush2.bf16.msra.mxu0 %v3279
  %5263 = vmatprep.subr.bf16.mxu0 %v3276
  %5264 = vmatpush2.bf16.msra.mxu0 %v3275
  %5265 = vmatprep.subr.bf16.mxu0 %v3272
  %5266 = vmatpush2.bf16.msra.mxu0 %v3271
  %5267 = vmatprep.subr.bf16.mxu0 %v3268
  %5268 = vmatpush2.bf16.msra.mxu0 %v3267
  %5269 = vmatprep.subr.bf16.mxu0 %v3264
  %5270 = vmatpush2.bf16.msra.mxu0 %v3263
  %5271 = vmatprep.subr.bf16.mxu0 %v3260
  %5272 = vmatpush2.bf16.msra.mxu0 %v3259
  %5273 = vmatprep.subr.bf16.mxu0 %v3256
  %5274 = vmatpush2.bf16.msra.mxu0 %v3255
  %5275 = vmatprep.subr.bf16.mxu0 %v3252
  %5276 = vmatpush2.bf16.msra.mxu0 %v3251
  %5277 = vmatprep.mubr.bf16.mxu0 %v866
  %5278 = vmatmul.mubr.bf16.gmra.mxu0 %v865
  %v5279 = vpop.f32.mrf.mxu0
  %v5280 = vadd.f32 %v820, %v5279
  %v5281 = vpop.f32.mrf.mxu0
  %v5282 = vadd.f32 %v824, %v5281
  %v5283 = vpop.f32.mrf.mxu0
  %v5284 = vpop.f32.mrf.mxu0
  %5285 = vdwg.mxu0
  %5286 = vmatprep.subr.bf16.mxu0 %v3312
  %5287 = vmatpush1.bf16.msra.mxu0 %v3311
  %5288 = vmatprep.subr.bf16.mxu0 %v3308
  %5289 = vmatpush1.bf16.msra.mxu0 %v3307
  %5290 = vmatprep.subr.bf16.mxu0 %v3304
  %5291 = vmatpush1.bf16.msra.mxu0 %v3303
  %5292 = vmatprep.subr.bf16.mxu0 %v3300
  %5293 = vmatpush1.bf16.msra.mxu0 %v3299
  %5294 = vmatprep.subr.bf16.mxu0 %v3296
  %5295 = vmatpush1.bf16.msra.mxu0 %v3295
  %5296 = vmatprep.subr.bf16.mxu0 %v3292
  %5297 = vmatpush1.bf16.msra.mxu0 %v3291
  %5298 = vmatprep.subr.bf16.mxu0 %v3288
  %5299 = vmatpush1.bf16.msra.mxu0 %v3287
  %5300 = vmatprep.subr.bf16.mxu0 %v3284
  %5301 = vmatpush1.bf16.msra.mxu0 %v3283
  %5302 = vmatprep.subr.bf16.mxu0 %v3344
  %5303 = vmatpush2.bf16.msra.mxu0 %v3343
  %5304 = vmatprep.subr.bf16.mxu0 %v3340
  %5305 = vmatpush2.bf16.msra.mxu0 %v3339
  %5306 = vmatprep.subr.bf16.mxu0 %v3336
  %5307 = vmatpush2.bf16.msra.mxu0 %v3335
  %5308 = vmatprep.subr.bf16.mxu0 %v3332
  %5309 = vmatpush2.bf16.msra.mxu0 %v3331
  %5310 = vmatprep.subr.bf16.mxu0 %v3328
  %5311 = vmatpush2.bf16.msra.mxu0 %v3327
  %5312 = vmatprep.subr.bf16.mxu0 %v3324
  %5313 = vmatpush2.bf16.msra.mxu0 %v3323
  %5314 = vmatprep.subr.bf16.mxu0 %v3320
  %5315 = vmatpush2.bf16.msra.mxu0 %v3319
  %5316 = vmatprep.subr.bf16.mxu0 %v3316
  %5317 = vmatpush2.bf16.msra.mxu0 %v3315
  %5318 = vmatprep.mubr.bf16.mxu0 %v868
  %5319 = vmatmul.mubr.bf16.gmra.mxu0 %v867
  %v5320 = vpop.f32.mrf.mxu0
  %v5321 = vadd.f32 %v5280, %v5320
  %v5322 = vpop.f32.mrf.mxu0
  %v5323 = vadd.f32 %v5282, %v5322
  %v5324 = vpop.f32.mrf.mxu0
  %v5325 = vpop.f32.mrf.mxu0
  %5326 = vdwg.mxu0
  %5327 = vmatprep.subr.bf16.mxu0 %v3376
  %5328 = vmatpush1.bf16.msra.mxu0 %v3375
  %5329 = vmatprep.subr.bf16.mxu0 %v3372
  %5330 = vmatpush1.bf16.msra.mxu0 %v3371
  %5331 = vmatprep.subr.bf16.mxu0 %v3368
  %5332 = vmatpush1.bf16.msra.mxu0 %v3367
  %5333 = vmatprep.subr.bf16.mxu0 %v3364
  %5334 = vmatpush1.bf16.msra.mxu0 %v3363
  %5335 = vmatprep.subr.bf16.mxu0 %v3360
  %5336 = vmatpush1.bf16.msra.mxu0 %v3359
  %5337 = vmatprep.subr.bf16.mxu0 %v3356
  %5338 = vmatpush1.bf16.msra.mxu0 %v3355
  %5339 = vmatprep.subr.bf16.mxu0 %v3352
  %5340 = vmatpush1.bf16.msra.mxu0 %v3351
  %5341 = vmatprep.subr.bf16.mxu0 %v3348
  %5342 = vmatpush1.bf16.msra.mxu0 %v3347
  %5343 = vmatprep.subr.bf16.mxu0 %v3408
  %5344 = vmatpush2.bf16.msra.mxu0 %v3407
  %5345 = vmatprep.subr.bf16.mxu0 %v3404
  %5346 = vmatpush2.bf16.msra.mxu0 %v3403
  %5347 = vmatprep.subr.bf16.mxu0 %v3400
  %5348 = vmatpush2.bf16.msra.mxu0 %v3399
  %5349 = vmatprep.subr.bf16.mxu0 %v3396
  %5350 = vmatpush2.bf16.msra.mxu0 %v3395
  %5351 = vmatprep.subr.bf16.mxu0 %v3392
  %5352 = vmatpush2.bf16.msra.mxu0 %v3391
  %5353 = vmatprep.subr.bf16.mxu0 %v3388
  %5354 = vmatpush2.bf16.msra.mxu0 %v3387
  %5355 = vmatprep.subr.bf16.mxu0 %v3384
  %5356 = vmatpush2.bf16.msra.mxu0 %v3383
  %5357 = vmatprep.subr.bf16.mxu0 %v3380
  %5358 = vmatpush2.bf16.msra.mxu0 %v3379
  %5359 = vmatprep.mubr.bf16.mxu0 %v870
  %5360 = vmatmul.mubr.bf16.gmra.mxu0 %v869
  %v5361 = vpop.f32.mrf.mxu0
  %v5362 = vadd.f32 %v5321, %v5361
  %v5363 = vpop.f32.mrf.mxu0
  %v5364 = vadd.f32 %v5323, %v5363
  %v5365 = vpop.f32.mrf.mxu0
  %v5366 = vpop.f32.mrf.mxu0
  %5367 = vdwg.mxu0
  %5368 = vmatprep.subr.bf16.mxu0 %v3440
  %5369 = vmatpush1.bf16.msra.mxu0 %v3439
  %5370 = vmatprep.subr.bf16.mxu0 %v3436
  %5371 = vmatpush1.bf16.msra.mxu0 %v3435
  %5372 = vmatprep.subr.bf16.mxu0 %v3432
  %5373 = vmatpush1.bf16.msra.mxu0 %v3431
  %5374 = vmatprep.subr.bf16.mxu0 %v3428
  %5375 = vmatpush1.bf16.msra.mxu0 %v3427
  %5376 = vmatprep.subr.bf16.mxu0 %v3424
  %5377 = vmatpush1.bf16.msra.mxu0 %v3423
  %5378 = vmatprep.subr.bf16.mxu0 %v3420
  %5379 = vmatpush1.bf16.msra.mxu0 %v3419
  %5380 = vmatprep.subr.bf16.mxu0 %v3416
  %5381 = vmatpush1.bf16.msra.mxu0 %v3415
  %5382 = vmatprep.subr.bf16.mxu0 %v3412
  %5383 = vmatpush1.bf16.msra.mxu0 %v3411
  %5384 = vmatprep.subr.bf16.mxu0 %v3472
  %5385 = vmatpush2.bf16.msra.mxu0 %v3471
  %5386 = vmatprep.subr.bf16.mxu0 %v3468
  %5387 = vmatpush2.bf16.msra.mxu0 %v3467
  %5388 = vmatprep.subr.bf16.mxu0 %v3464
  %5389 = vmatpush2.bf16.msra.mxu0 %v3463
  %5390 = vmatprep.subr.bf16.mxu0 %v3460
  %5391 = vmatpush2.bf16.msra.mxu0 %v3459
  %5392 = vmatprep.subr.bf16.mxu0 %v3456
  %5393 = vmatpush2.bf16.msra.mxu0 %v3455
  %5394 = vmatprep.subr.bf16.mxu0 %v3452
  %5395 = vmatpush2.bf16.msra.mxu0 %v3451
  %5396 = vmatprep.subr.bf16.mxu0 %v3448
  %5397 = vmatpush2.bf16.msra.mxu0 %v3447
  %5398 = vmatprep.subr.bf16.mxu0 %v3444
  %5399 = vmatpush2.bf16.msra.mxu0 %v3443
  %5400 = vmatprep.mubr.bf16.mxu0 %v872
  %5401 = vmatmul.mubr.bf16.gmra.mxu0 %v871
  %v5402 = vpop.f32.mrf.mxu0
  %v5403 = vadd.f32 %v5362, %v5402
  %v5404 = vpop.f32.mrf.mxu0
  %v5405 = vadd.f32 %v5364, %v5404
  %v5406 = vpop.f32.mrf.mxu0
  %v5407 = vpop.f32.mrf.mxu0
  %5408 = vdwg.mxu0
  %5409 = vmatprep.subr.bf16.mxu0 %v3504
  %5410 = vmatpush1.bf16.msra.mxu0 %v3503
  %5411 = vmatprep.subr.bf16.mxu0 %v3500
  %5412 = vmatpush1.bf16.msra.mxu0 %v3499
  %5413 = vmatprep.subr.bf16.mxu0 %v3496
  %5414 = vmatpush1.bf16.msra.mxu0 %v3495
  %5415 = vmatprep.subr.bf16.mxu0 %v3492
  %5416 = vmatpush1.bf16.msra.mxu0 %v3491
  %5417 = vmatprep.subr.bf16.mxu0 %v3488
  %5418 = vmatpush1.bf16.msra.mxu0 %v3487
  %5419 = vmatprep.subr.bf16.mxu0 %v3484
  %5420 = vmatpush1.bf16.msra.mxu0 %v3483
  %5421 = vmatprep.subr.bf16.mxu0 %v3480
  %5422 = vmatpush1.bf16.msra.mxu0 %v3479
  %5423 = vmatprep.subr.bf16.mxu0 %v3476
  %5424 = vmatpush1.bf16.msra.mxu0 %v3475
  %5425 = vmatprep.subr.bf16.mxu0 %v3536
  %5426 = vmatpush2.bf16.msra.mxu0 %v3535
  %5427 = vmatprep.subr.bf16.mxu0 %v3532
  %5428 = vmatpush2.bf16.msra.mxu0 %v3531
  %5429 = vmatprep.subr.bf16.mxu0 %v3528
  %5430 = vmatpush2.bf16.msra.mxu0 %v3527
  %5431 = vmatprep.subr.bf16.mxu0 %v3524
  %5432 = vmatpush2.bf16.msra.mxu0 %v3523
  %5433 = vmatprep.subr.bf16.mxu0 %v3520
  %5434 = vmatpush2.bf16.msra.mxu0 %v3519
  %5435 = vmatprep.subr.bf16.mxu0 %v3516
  %5436 = vmatpush2.bf16.msra.mxu0 %v3515
  %5437 = vmatprep.subr.bf16.mxu0 %v3512
  %5438 = vmatpush2.bf16.msra.mxu0 %v3511
  %5439 = vmatprep.subr.bf16.mxu0 %v3508
  %5440 = vmatpush2.bf16.msra.mxu0 %v3507
  %5441 = vmatprep.mubr.bf16.mxu0 %v874
  %5442 = vmatmul.mubr.bf16.gmra.mxu0 %v873
  %v5443 = vpop.f32.mrf.mxu0
  %v5444 = vadd.f32 %v5403, %v5443
  %v5445 = vpop.f32.mrf.mxu0
  %v5446 = vadd.f32 %v5405, %v5445
  %v5447 = vpop.f32.mrf.mxu0
  %v5448 = vpop.f32.mrf.mxu0
  %5449 = vdwg.mxu0
  %5450 = vmatprep.subr.bf16.mxu0 %v3568
  %5451 = vmatpush1.bf16.msra.mxu0 %v3567
  %5452 = vmatprep.subr.bf16.mxu0 %v3564
  %5453 = vmatpush1.bf16.msra.mxu0 %v3563
  %5454 = vmatprep.subr.bf16.mxu0 %v3560
  %5455 = vmatpush1.bf16.msra.mxu0 %v3559
  %5456 = vmatprep.subr.bf16.mxu0 %v3556
  %5457 = vmatpush1.bf16.msra.mxu0 %v3555
  %5458 = vmatprep.subr.bf16.mxu0 %v3552
  %5459 = vmatpush1.bf16.msra.mxu0 %v3551
  %5460 = vmatprep.subr.bf16.mxu0 %v3548
  %5461 = vmatpush1.bf16.msra.mxu0 %v3547
  %5462 = vmatprep.subr.bf16.mxu0 %v3544
  %5463 = vmatpush1.bf16.msra.mxu0 %v3543
  %5464 = vmatprep.subr.bf16.mxu0 %v3540
  %5465 = vmatpush1.bf16.msra.mxu0 %v3539
  %5466 = vmatprep.subr.bf16.mxu0 %v3600
  %5467 = vmatpush2.bf16.msra.mxu0 %v3599
  %5468 = vmatprep.subr.bf16.mxu0 %v3596
  %5469 = vmatpush2.bf16.msra.mxu0 %v3595
  %5470 = vmatprep.subr.bf16.mxu0 %v3592
  %5471 = vmatpush2.bf16.msra.mxu0 %v3591
  %5472 = vmatprep.subr.bf16.mxu0 %v3588
  %5473 = vmatpush2.bf16.msra.mxu0 %v3587
  %5474 = vmatprep.subr.bf16.mxu0 %v3584
  %5475 = vmatpush2.bf16.msra.mxu0 %v3583
  %5476 = vmatprep.subr.bf16.mxu0 %v3580
  %5477 = vmatpush2.bf16.msra.mxu0 %v3579
  %5478 = vmatprep.subr.bf16.mxu0 %v3576
  %5479 = vmatpush2.bf16.msra.mxu0 %v3575
  %5480 = vmatprep.subr.bf16.mxu0 %v3572
  %5481 = vmatpush2.bf16.msra.mxu0 %v3571
  %5482 = vmatprep.mubr.bf16.mxu0 %v876
  %5483 = vmatmul.mubr.bf16.gmra.mxu0 %v875
  %v5484 = vpop.f32.mrf.mxu0
  %v5485 = vadd.f32 %v5444, %v5484
  %v5486 = vpop.f32.mrf.mxu0
  %v5487 = vadd.f32 %v5446, %v5486
  %v5488 = vpop.f32.mrf.mxu0
  %v5489 = vpop.f32.mrf.mxu0
  %5490 = vdwg.mxu0
  %5491 = vmatprep.subr.bf16.mxu0 %v3632
  %5492 = vmatpush1.bf16.msra.mxu0 %v3631
  %5493 = vmatprep.subr.bf16.mxu0 %v3628
  %5494 = vmatpush1.bf16.msra.mxu0 %v3627
  %5495 = vmatprep.subr.bf16.mxu0 %v3624
  %5496 = vmatpush1.bf16.msra.mxu0 %v3623
  %5497 = vmatprep.subr.bf16.mxu0 %v3620
  %5498 = vmatpush1.bf16.msra.mxu0 %v3619
  %5499 = vmatprep.subr.bf16.mxu0 %v3616
  %5500 = vmatpush1.bf16.msra.mxu0 %v3615
  %5501 = vmatprep.subr.bf16.mxu0 %v3612
  %5502 = vmatpush1.bf16.msra.mxu0 %v3611
  %5503 = vmatprep.subr.bf16.mxu0 %v3608
  %5504 = vmatpush1.bf16.msra.mxu0 %v3607
  %5505 = vmatprep.subr.bf16.mxu0 %v3604
  %5506 = vmatpush1.bf16.msra.mxu0 %v3603
  %5507 = vmatprep.subr.bf16.mxu0 %v3664
  %5508 = vmatpush2.bf16.msra.mxu0 %v3663
  %5509 = vmatprep.subr.bf16.mxu0 %v3660
  %5510 = vmatpush2.bf16.msra.mxu0 %v3659
  %5511 = vmatprep.subr.bf16.mxu0 %v3656
  %5512 = vmatpush2.bf16.msra.mxu0 %v3655
  %5513 = vmatprep.subr.bf16.mxu0 %v3652
  %5514 = vmatpush2.bf16.msra.mxu0 %v3651
  %5515 = vmatprep.subr.bf16.mxu0 %v3648
  %5516 = vmatpush2.bf16.msra.mxu0 %v3647
  %5517 = vmatprep.subr.bf16.mxu0 %v3644
  %5518 = vmatpush2.bf16.msra.mxu0 %v3643
  %5519 = vmatprep.subr.bf16.mxu0 %v3640
  %5520 = vmatpush2.bf16.msra.mxu0 %v3639
  %5521 = vmatprep.subr.bf16.mxu0 %v3636
  %5522 = vmatpush2.bf16.msra.mxu0 %v3635
  %5523 = vmatprep.mubr.bf16.mxu0 %v878
  %5524 = vmatmul.mubr.bf16.gmra.mxu0 %v877
  %v5525 = vpop.f32.mrf.mxu0
  %v5526 = vadd.f32 %v5485, %v5525
  %v5527 = vpop.f32.mrf.mxu0
  %v5528 = vadd.f32 %v5487, %v5527
  %v5529 = vpop.f32.mrf.mxu0
  %v5530 = vpop.f32.mrf.mxu0
  %5531 = vdwg.mxu0
  %5532 = vmatprep.subr.bf16.mxu0 %v3696
  %5533 = vmatpush1.bf16.msra.mxu0 %v3695
  %5534 = vmatprep.subr.bf16.mxu0 %v3692
  %5535 = vmatpush1.bf16.msra.mxu0 %v3691
  %5536 = vmatprep.subr.bf16.mxu0 %v3688
  %5537 = vmatpush1.bf16.msra.mxu0 %v3687
  %5538 = vmatprep.subr.bf16.mxu0 %v3684
  %5539 = vmatpush1.bf16.msra.mxu0 %v3683
  %5540 = vmatprep.subr.bf16.mxu0 %v3680
  %5541 = vmatpush1.bf16.msra.mxu0 %v3679
  %5542 = vmatprep.subr.bf16.mxu0 %v3676
  %5543 = vmatpush1.bf16.msra.mxu0 %v3675
  %5544 = vmatprep.subr.bf16.mxu0 %v3672
  %5545 = vmatpush1.bf16.msra.mxu0 %v3671
  %5546 = vmatprep.subr.bf16.mxu0 %v3668
  %5547 = vmatpush1.bf16.msra.mxu0 %v3667
  %5548 = vmatprep.subr.bf16.mxu0 %v3728
  %5549 = vmatpush2.bf16.msra.mxu0 %v3727
  %5550 = vmatprep.subr.bf16.mxu0 %v3724
  %5551 = vmatpush2.bf16.msra.mxu0 %v3723
  %5552 = vmatprep.subr.bf16.mxu0 %v3720
  %5553 = vmatpush2.bf16.msra.mxu0 %v3719
  %5554 = vmatprep.subr.bf16.mxu0 %v3716
  %5555 = vmatpush2.bf16.msra.mxu0 %v3715
  %5556 = vmatprep.subr.bf16.mxu0 %v3712
  %5557 = vmatpush2.bf16.msra.mxu0 %v3711
  %5558 = vmatprep.subr.bf16.mxu0 %v3708
  %5559 = vmatpush2.bf16.msra.mxu0 %v3707
  %5560 = vmatprep.subr.bf16.mxu0 %v3704
  %5561 = vmatpush2.bf16.msra.mxu0 %v3703
  %5562 = vmatprep.subr.bf16.mxu0 %v3700
  %5563 = vmatpush2.bf16.msra.mxu0 %v3699
  %5564 = vmatprep.mubr.bf16.mxu0 %v880
  %5565 = vmatmul.mubr.bf16.gmra.mxu0 %v879
  %v5566 = vpop.f32.mrf.mxu0
  %v5567 = vadd.f32 %v5526, %v5566
  %v5568 = vpop.f32.mrf.mxu0
  %v5569 = vadd.f32 %v5528, %v5568
  %v5570 = vpop.f32.mrf.mxu0
  %v5571 = vpop.f32.mrf.mxu0
  %5572 = vdwg.mxu0
  %5573 = vmatprep.subr.bf16.mxu0 %v3760
  %5574 = vmatpush1.bf16.msra.mxu0 %v3759
  %5575 = vmatprep.subr.bf16.mxu0 %v3756
  %5576 = vmatpush1.bf16.msra.mxu0 %v3755
  %5577 = vmatprep.subr.bf16.mxu0 %v3752
  %5578 = vmatpush1.bf16.msra.mxu0 %v3751
  %5579 = vmatprep.subr.bf16.mxu0 %v3748
  %5580 = vmatpush1.bf16.msra.mxu0 %v3747
  %5581 = vmatprep.subr.bf16.mxu0 %v3744
  %5582 = vmatpush1.bf16.msra.mxu0 %v3743
  %5583 = vmatprep.subr.bf16.mxu0 %v3740
  %5584 = vmatpush1.bf16.msra.mxu0 %v3739
  %5585 = vmatprep.subr.bf16.mxu0 %v3736
  %5586 = vmatpush1.bf16.msra.mxu0 %v3735
  %5587 = vmatprep.subr.bf16.mxu0 %v3732
  %5588 = vmatpush1.bf16.msra.mxu0 %v3731
  %5589 = vmatprep.subr.bf16.mxu0 %v3792
  %5590 = vmatpush2.bf16.msra.mxu0 %v3791
  %5591 = vmatprep.subr.bf16.mxu0 %v3788
  %5592 = vmatpush2.bf16.msra.mxu0 %v3787
  %5593 = vmatprep.subr.bf16.mxu0 %v3784
  %5594 = vmatpush2.bf16.msra.mxu0 %v3783
  %5595 = vmatprep.subr.bf16.mxu0 %v3780
  %5596 = vmatpush2.bf16.msra.mxu0 %v3779
  %5597 = vmatprep.subr.bf16.mxu0 %v3776
  %5598 = vmatpush2.bf16.msra.mxu0 %v3775
  %5599 = vmatprep.subr.bf16.mxu0 %v3772
  %5600 = vmatpush2.bf16.msra.mxu0 %v3771
  %5601 = vmatprep.subr.bf16.mxu0 %v3768
  %5602 = vmatpush2.bf16.msra.mxu0 %v3767
  %5603 = vmatprep.subr.bf16.mxu0 %v3764
  %5604 = vmatpush2.bf16.msra.mxu0 %v3763
  %5605 = vmatprep.mubr.bf16.mxu0 %v882
  %5606 = vmatmul.mubr.bf16.gmra.mxu0 %v881
  %v5607 = vpop.f32.mrf.mxu0
  %v5608 = vadd.f32 %v5567, %v5607
  %v5609 = vpop.f32.mrf.mxu0
  %v5610 = vadd.f32 %v5569, %v5609
  %v5611 = vpop.f32.mrf.mxu0
  %v5612 = vpop.f32.mrf.mxu0
  %5613 = vdwg.mxu0
  %5614 = vmatprep.subr.bf16.mxu0 %v3824
  %5615 = vmatpush1.bf16.msra.mxu0 %v3823
  %5616 = vmatprep.subr.bf16.mxu0 %v3820
  %5617 = vmatpush1.bf16.msra.mxu0 %v3819
  %5618 = vmatprep.subr.bf16.mxu0 %v3816
  %5619 = vmatpush1.bf16.msra.mxu0 %v3815
  %5620 = vmatprep.subr.bf16.mxu0 %v3812
  %5621 = vmatpush1.bf16.msra.mxu0 %v3811
  %5622 = vmatprep.subr.bf16.mxu0 %v3808
  %5623 = vmatpush1.bf16.msra.mxu0 %v3807
  %5624 = vmatprep.subr.bf16.mxu0 %v3804
  %5625 = vmatpush1.bf16.msra.mxu0 %v3803
  %5626 = vmatprep.subr.bf16.mxu0 %v3800
  %5627 = vmatpush1.bf16.msra.mxu0 %v3799
  %5628 = vmatprep.subr.bf16.mxu0 %v3796
  %5629 = vmatpush1.bf16.msra.mxu0 %v3795
  %5630 = vmatprep.subr.bf16.mxu0 %v3856
  %5631 = vmatpush2.bf16.msra.mxu0 %v3855
  %5632 = vmatprep.subr.bf16.mxu0 %v3852
  %5633 = vmatpush2.bf16.msra.mxu0 %v3851
  %5634 = vmatprep.subr.bf16.mxu0 %v3848
  %5635 = vmatpush2.bf16.msra.mxu0 %v3847
  %5636 = vmatprep.subr.bf16.mxu0 %v3844
  %5637 = vmatpush2.bf16.msra.mxu0 %v3843
  %5638 = vmatprep.subr.bf16.mxu0 %v3840
  %5639 = vmatpush2.bf16.msra.mxu0 %v3839
  %5640 = vmatprep.subr.bf16.mxu0 %v3836
  %5641 = vmatpush2.bf16.msra.mxu0 %v3835
  %5642 = vmatprep.subr.bf16.mxu0 %v3832
  %5643 = vmatpush2.bf16.msra.mxu0 %v3831
  %5644 = vmatprep.subr.bf16.mxu0 %v3828
  %5645 = vmatpush2.bf16.msra.mxu0 %v3827
  %5646 = vmatprep.mubr.bf16.mxu0 %v884
  %5647 = vmatmul.mubr.bf16.gmra.mxu0 %v883
  %v5648 = vpop.f32.mrf.mxu0
  %v5649 = vadd.f32 %v5608, %v5648
  %v5650 = vpop.f32.mrf.mxu0
  %v5651 = vadd.f32 %v5610, %v5650
  %v5652 = vpop.f32.mrf.mxu0
  %v5653 = vpop.f32.mrf.mxu0
  %5654 = vdwg.mxu0
  %5655 = vmatprep.subr.bf16.mxu0 %v3888
  %5656 = vmatpush1.bf16.msra.mxu0 %v3887
  %5657 = vmatprep.subr.bf16.mxu0 %v3884
  %5658 = vmatpush1.bf16.msra.mxu0 %v3883
  %5659 = vmatprep.subr.bf16.mxu0 %v3880
  %5660 = vmatpush1.bf16.msra.mxu0 %v3879
  %5661 = vmatprep.subr.bf16.mxu0 %v3876
  %5662 = vmatpush1.bf16.msra.mxu0 %v3875
  %5663 = vmatprep.subr.bf16.mxu0 %v3872
  %5664 = vmatpush1.bf16.msra.mxu0 %v3871
  %5665 = vmatprep.subr.bf16.mxu0 %v3868
  %5666 = vmatpush1.bf16.msra.mxu0 %v3867
  %5667 = vmatprep.subr.bf16.mxu0 %v3864
  %5668 = vmatpush1.bf16.msra.mxu0 %v3863
  %5669 = vmatprep.subr.bf16.mxu0 %v3860
  %5670 = vmatpush1.bf16.msra.mxu0 %v3859
  %5671 = vmatprep.subr.bf16.mxu0 %v3920
  %5672 = vmatpush2.bf16.msra.mxu0 %v3919
  %5673 = vmatprep.subr.bf16.mxu0 %v3916
  %5674 = vmatpush2.bf16.msra.mxu0 %v3915
  %5675 = vmatprep.subr.bf16.mxu0 %v3912
  %5676 = vmatpush2.bf16.msra.mxu0 %v3911
  %5677 = vmatprep.subr.bf16.mxu0 %v3908
  %5678 = vmatpush2.bf16.msra.mxu0 %v3907
  %5679 = vmatprep.subr.bf16.mxu0 %v3904
  %5680 = vmatpush2.bf16.msra.mxu0 %v3903
  %5681 = vmatprep.subr.bf16.mxu0 %v3900
  %5682 = vmatpush2.bf16.msra.mxu0 %v3899
  %5683 = vmatprep.subr.bf16.mxu0 %v3896
  %5684 = vmatpush2.bf16.msra.mxu0 %v3895
  %5685 = vmatprep.subr.bf16.mxu0 %v3892
  %5686 = vmatpush2.bf16.msra.mxu0 %v3891
  %5687 = vmatprep.mubr.bf16.mxu0 %v886
  %5688 = vmatmul.mubr.bf16.gmra.mxu0 %v885
  %v5689 = vpop.f32.mrf.mxu0
  %v5690 = vadd.f32 %v5649, %v5689
  %v5691 = vpop.f32.mrf.mxu0
  %v5692 = vadd.f32 %v5651, %v5691
  %v5693 = vpop.f32.mrf.mxu0
  %v5694 = vpop.f32.mrf.mxu0
  %5695 = vdwg.mxu0
  %5696 = vmatprep.subr.bf16.mxu0 %v3952
  %5697 = vmatpush1.bf16.msra.mxu0 %v3951
  %5698 = vmatprep.subr.bf16.mxu0 %v3948
  %5699 = vmatpush1.bf16.msra.mxu0 %v3947
  %5700 = vmatprep.subr.bf16.mxu0 %v3944
  %5701 = vmatpush1.bf16.msra.mxu0 %v3943
  %5702 = vmatprep.subr.bf16.mxu0 %v3940
  %5703 = vmatpush1.bf16.msra.mxu0 %v3939
  %5704 = vmatprep.subr.bf16.mxu0 %v3936
  %5705 = vmatpush1.bf16.msra.mxu0 %v3935
  %5706 = vmatprep.subr.bf16.mxu0 %v3932
  %5707 = vmatpush1.bf16.msra.mxu0 %v3931
  %5708 = vmatprep.subr.bf16.mxu0 %v3928
  %5709 = vmatpush1.bf16.msra.mxu0 %v3927
  %5710 = vmatprep.subr.bf16.mxu0 %v3924
  %5711 = vmatpush1.bf16.msra.mxu0 %v3923
  %5712 = vmatprep.subr.bf16.mxu0 %v3984
  %5713 = vmatpush2.bf16.msra.mxu0 %v3983
  %5714 = vmatprep.subr.bf16.mxu0 %v3980
  %5715 = vmatpush2.bf16.msra.mxu0 %v3979
  %5716 = vmatprep.subr.bf16.mxu0 %v3976
  %5717 = vmatpush2.bf16.msra.mxu0 %v3975
  %5718 = vmatprep.subr.bf16.mxu0 %v3972
  %5719 = vmatpush2.bf16.msra.mxu0 %v3971
  %5720 = vmatprep.subr.bf16.mxu0 %v3968
  %5721 = vmatpush2.bf16.msra.mxu0 %v3967
  %5722 = vmatprep.subr.bf16.mxu0 %v3964
  %5723 = vmatpush2.bf16.msra.mxu0 %v3963
  %5724 = vmatprep.subr.bf16.mxu0 %v3960
  %5725 = vmatpush2.bf16.msra.mxu0 %v3959
  %5726 = vmatprep.subr.bf16.mxu0 %v3956
  %5727 = vmatpush2.bf16.msra.mxu0 %v3955
  %5728 = vmatprep.mubr.bf16.mxu0 %v888
  %5729 = vmatmul.mubr.bf16.gmra.mxu0 %v887
  %v5730 = vpop.f32.mrf.mxu0
  %v5731 = vadd.f32 %v5690, %v5730
  %v5732 = vpop.f32.mrf.mxu0
  %v5733 = vadd.f32 %v5692, %v5732
  %v5734 = vpop.f32.mrf.mxu0
  %v5735 = vpop.f32.mrf.mxu0
  %5736 = vdwg.mxu0
  %v5737 = vmax.f32 %v5239, 0.0
  %v5738 = vmax.f32 %v5241, 0.0
  %v5739 = vmax.f32 %v5731, 0.0
  %v5740 = vmax.f32 %v5733, 0.0
  %v5741 = vpack.c.bf16 %v5737, %v5737
  %v5742 = vpack.c.bf16 %v5738, %v5738
  %v5743 = vpack.c.bf16 %v5739, %v5739
  %v5744 = vpack.c.bf16 %v5740, %v5740
  %v5745 = vld [vmem:[%s3] sm:$0xff]
  %v5746 = vld [vmem:[%s3 + $0x8] sm:$0xff]
  %v5747 = vld [vmem:[%s3 + $0x10] sm:$0xff]
  %v5748 = vld [vmem:[%s3 + $0x18] sm:$0xff]
  %v5749 = vld [vmem:[%s3 + $0x20] sm:$0xff]
  %v5750 = vld [vmem:[%s3 + $0x28] sm:$0xff]
  %v5751 = vld [vmem:[%s3 + $0x30] sm:$0xff]
  %v5752 = vld [vmem:[%s3 + $0x38] sm:$0xff]
  %v5753 = vld [vmem:[%s3 + $0x40] sm:$0xff]
  %v5754 = vld [vmem:[%s3 + $0x48] sm:$0xff]
  %v5755 = vld [vmem:[%s3 + $0x50] sm:$0xff]
  %v5756 = vld [vmem:[%s3 + $0x58] sm:$0xff]
  %v5757 = vld [vmem:[%s3 + $0x60] sm:$0xff]
  %v5758 = vld [vmem:[%s3 + $0x68] sm:$0xff]
  %v5759 = vld [vmem:[%s3 + $0x70] sm:$0xff]
  %v5760 = vld [vmem:[%s3 + $0x78] sm:$0xff]
  %v5761 = vld [vmem:[%s3 + $0x80] sm:$0xff]
  %v5762 = vld [vmem:[%s3 + $0x88] sm:$0xff]
  %v5763 = vld [vmem:[%s3 + $0x90] sm:$0xff]
  %v5764 = vld [vmem:[%s3 + $0x98] sm:$0xff]
  %v5765 = vld [vmem:[%s3 + $0xa0] sm:$0xff]
  %v5766 = vld [vmem:[%s3 + $0xa8] sm:$0xff]
  %v5767 = vld [vmem:[%s3 + $0xb0] sm:$0xff]
  %v5768 = vld [vmem:[%s3 + $0xb8] sm:$0xff]
  %v5769 = vld [vmem:[%s3 + $0xc0] sm:$0xff]
  %v5770 = vld [vmem:[%s3 + $0xc8] sm:$0xff]
  %v5771 = vld [vmem:[%s3 + $0xd0] sm:$0xff]
  %v5772 = vld [vmem:[%s3 + $0xd8] sm:$0xff]
  %v5773 = vld [vmem:[%s3 + $0xe0] sm:$0xff]
  %v5774 = vld [vmem:[%s3 + $0xe8] sm:$0xff]
  %v5775 = vld [vmem:[%s3 + $0xf0] sm:$0xff]
  %v5776 = vld [vmem:[%s3 + $0xf8] sm:$0xff]
  %v5777 = vld [vmem:[%s3 + $0x100] sm:$0xff]
  %v5778 = vld [vmem:[%s3 + $0x108] sm:$0xff]
  %v5779 = vld [vmem:[%s3 + $0x110] sm:$0xff]
  %v5780 = vld [vmem:[%s3 + $0x118] sm:$0xff]
  %v5781 = vld [vmem:[%s3 + $0x120] sm:$0xff]
  %v5782 = vld [vmem:[%s3 + $0x128] sm:$0xff]
  %v5783 = vld [vmem:[%s3 + $0x130] sm:$0xff]
  %v5784 = vld [vmem:[%s3 + $0x138] sm:$0xff]
  %v5785 = vld [vmem:[%s3 + $0x140] sm:$0xff]
  %v5786 = vld [vmem:[%s3 + $0x148] sm:$0xff]
  %v5787 = vld [vmem:[%s3 + $0x150] sm:$0xff]
  %v5788 = vld [vmem:[%s3 + $0x158] sm:$0xff]
  %v5789 = vld [vmem:[%s3 + $0x160] sm:$0xff]
  %v5790 = vld [vmem:[%s3 + $0x168] sm:$0xff]
  %v5791 = vld [vmem:[%s3 + $0x170] sm:$0xff]
  %v5792 = vld [vmem:[%s3 + $0x178] sm:$0xff]
  %v5793 = vld [vmem:[%s3 + $0x180] sm:$0xff]
  %v5794 = vld [vmem:[%s3 + $0x188] sm:$0xff]
  %v5795 = vld [vmem:[%s3 + $0x190] sm:$0xff]
  %v5796 = vld [vmem:[%s3 + $0x198] sm:$0xff]
  %v5797 = vld [vmem:[%s3 + $0x1a0] sm:$0xff]
  %v5798 = vld [vmem:[%s3 + $0x1a8] sm:$0xff]
  %v5799 = vld [vmem:[%s3 + $0x1b0] sm:$0xff]
  %v5800 = vld [vmem:[%s3 + $0x1b8] sm:$0xff]
  %v5801 = vld [vmem:[%s3 + $0x1c0] sm:$0xff]
  %v5802 = vld [vmem:[%s3 + $0x1c8] sm:$0xff]
  %v5803 = vld [vmem:[%s3 + $0x1d0] sm:$0xff]
  %v5804 = vld [vmem:[%s3 + $0x1d8] sm:$0xff]
  %v5805 = vld [vmem:[%s3 + $0x1e0] sm:$0xff]
  %v5806 = vld [vmem:[%s3 + $0x1e8] sm:$0xff]
  %v5807 = vld [vmem:[%s3 + $0x1f0] sm:$0xff]
  %v5808 = vld [vmem:[%s3 + $0x1f8] sm:$0xff]
  %v5809 = vld [vmem:[%s4] sm:$0x3]
  %v5811 = vlaneseq
  %v5812 = vshrl.u32 %v5811, 7
  %v5813 = vsub.s32 0, %v5812
  %v5814 = vrot.slane %v5809, %v5813
  %v5815 = vlaneseq
  %v5816 = vshrl.u32 %v5815, 7
  %v5817 = vsub.s32 1, %v5816
  %v5818 = vrot.slane %v5809, %v5817
  %v5885 = vunpack.c.l.b16 %v5745
  %v5886 = vunpack.c.h.b16 %v5745
  %v5887 = vunpack.c.l.b16 %v5746
  %v5888 = vunpack.c.h.b16 %v5746
  %v5889 = vunpack.c.l.b16 %v5747
  %v5890 = vunpack.c.h.b16 %v5747
  %v5891 = vunpack.c.l.b16 %v5748
  %v5892 = vunpack.c.h.b16 %v5748
  %v5893 = vunpack.c.l.b16 %v5749
  %v5894 = vunpack.c.h.b16 %v5749
  %v5895 = vunpack.c.l.b16 %v5750
  %v5896 = vunpack.c.h.b16 %v5750
  %v5897 = vunpack.c.l.b16 %v5751
  %v5898 = vunpack.c.h.b16 %v5751
  %v5899 = vunpack.c.l.b16 %v5752
  %v5900 = vunpack.c.h.b16 %v5752
  %v5901 = vunpack.c.l.b16 %v5753
  %v5902 = vunpack.c.h.b16 %v5753
  %v5903 = vunpack.c.l.b16 %v5754
  %v5904 = vunpack.c.h.b16 %v5754
  %v5905 = vunpack.c.l.b16 %v5755
  %v5906 = vunpack.c.h.b16 %v5755
  %v5907 = vunpack.c.l.b16 %v5756
  %v5908 = vunpack.c.h.b16 %v5756
  %v5909 = vunpack.c.l.b16 %v5757
  %v5910 = vunpack.c.h.b16 %v5757
  %v5911 = vunpack.c.l.b16 %v5758
  %v5912 = vunpack.c.h.b16 %v5758
  %v5913 = vunpack.c.l.b16 %v5759
  %v5914 = vunpack.c.h.b16 %v5759
  %v5915 = vunpack.c.l.b16 %v5760
  %v5916 = vunpack.c.h.b16 %v5760
  %v5917 = vunpack.c.l.b16 %v5761
  %v5918 = vunpack.c.h.b16 %v5761
  %v5919 = vunpack.c.l.b16 %v5762
  %v5920 = vunpack.c.h.b16 %v5762
  %v5921 = vunpack.c.l.b16 %v5763
  %v5922 = vunpack.c.h.b16 %v5763
  %v5923 = vunpack.c.l.b16 %v5764
  %v5924 = vunpack.c.h.b16 %v5764
  %v5925 = vunpack.c.l.b16 %v5765
  %v5926 = vunpack.c.h.b16 %v5765
  %v5927 = vunpack.c.l.b16 %v5766
  %v5928 = vunpack.c.h.b16 %v5766
  %v5929 = vunpack.c.l.b16 %v5767
  %v5930 = vunpack.c.h.b16 %v5767
  %v5931 = vunpack.c.l.b16 %v5768
  %v5932 = vunpack.c.h.b16 %v5768
  %v5933 = vunpack.c.l.b16 %v5769
  %v5934 = vunpack.c.h.b16 %v5769
  %v5935 = vunpack.c.l.b16 %v5770
  %v5936 = vunpack.c.h.b16 %v5770
  %v5937 = vunpack.c.l.b16 %v5771
  %v5938 = vunpack.c.h.b16 %v5771
  %v5939 = vunpack.c.l.b16 %v5772
  %v5940 = vunpack.c.h.b16 %v5772
  %v5941 = vunpack.c.l.b16 %v5773
  %v5942 = vunpack.c.h.b16 %v5773
  %v5943 = vunpack.c.l.b16 %v5774
  %v5944 = vunpack.c.h.b16 %v5774
  %v5945 = vunpack.c.l.b16 %v5775
  %v5946 = vunpack.c.h.b16 %v5775
  %v5947 = vunpack.c.l.b16 %v5776
  %v5948 = vunpack.c.h.b16 %v5776
  %v5949 = vunpack.c.l.b16 %v5777
  %v5950 = vunpack.c.h.b16 %v5777
  %v5951 = vunpack.c.l.b16 %v5778
  %v5952 = vunpack.c.h.b16 %v5778
  %v5953 = vunpack.c.l.b16 %v5779
  %v5954 = vunpack.c.h.b16 %v5779
  %v5955 = vunpack.c.l.b16 %v5780
  %v5956 = vunpack.c.h.b16 %v5780
  %v5957 = vunpack.c.l.b16 %v5781
  %v5958 = vunpack.c.h.b16 %v5781
  %v5959 = vunpack.c.l.b16 %v5782
  %v5960 = vunpack.c.h.b16 %v5782
  %v5961 = vunpack.c.l.b16 %v5783
  %v5962 = vunpack.c.h.b16 %v5783
  %v5963 = vunpack.c.l.b16 %v5784
  %v5964 = vunpack.c.h.b16 %v5784
  %v5965 = vunpack.c.l.b16 %v5785
  %v5966 = vunpack.c.h.b16 %v5785
  %v5967 = vunpack.c.l.b16 %v5786
  %v5968 = vunpack.c.h.b16 %v5786
  %v5969 = vunpack.c.l.b16 %v5787
  %v5970 = vunpack.c.h.b16 %v5787
  %v5971 = vunpack.c.l.b16 %v5788
  %v5972 = vunpack.c.h.b16 %v5788
  %v5973 = vunpack.c.l.b16 %v5789
  %v5974 = vunpack.c.h.b16 %v5789
  %v5975 = vunpack.c.l.b16 %v5790
  %v5976 = vunpack.c.h.b16 %v5790
  %v5977 = vunpack.c.l.b16 %v5791
  %v5978 = vunpack.c.h.b16 %v5791
  %v5979 = vunpack.c.l.b16 %v5792
  %v5980 = vunpack.c.h.b16 %v5792
  %v5981 = vunpack.c.l.b16 %v5793
  %v5982 = vunpack.c.h.b16 %v5793
  %v5983 = vunpack.c.l.b16 %v5794
  %v5984 = vunpack.c.h.b16 %v5794
  %v5985 = vunpack.c.l.b16 %v5795
  %v5986 = vunpack.c.h.b16 %v5795
  %v5987 = vunpack.c.l.b16 %v5796
  %v5988 = vunpack.c.h.b16 %v5796
  %v5989 = vunpack.c.l.b16 %v5797
  %v5990 = vunpack.c.h.b16 %v5797
  %v5991 = vunpack.c.l.b16 %v5798
  %v5992 = vunpack.c.h.b16 %v5798
  %v5993 = vunpack.c.l.b16 %v5799
  %v5994 = vunpack.c.h.b16 %v5799
  %v5995 = vunpack.c.l.b16 %v5800
  %v5996 = vunpack.c.h.b16 %v5800
  %v5997 = vunpack.c.l.b16 %v5801
  %v5998 = vunpack.c.h.b16 %v5801
  %v5999 = vunpack.c.l.b16 %v5802
  %v6000 = vunpack.c.h.b16 %v5802
  %v6001 = vunpack.c.l.b16 %v5803
  %v6002 = vunpack.c.h.b16 %v5803
  %v6003 = vunpack.c.l.b16 %v5804
  %v6004 = vunpack.c.h.b16 %v5804
  %v6005 = vunpack.c.l.b16 %v5805
  %v6006 = vunpack.c.h.b16 %v5805
  %v6007 = vunpack.c.l.b16 %v5806
  %v6008 = vunpack.c.h.b16 %v5806
  %v6009 = vunpack.c.l.b16 %v5807
  %v6010 = vunpack.c.h.b16 %v5807
  %v6011 = vunpack.c.l.b16 %v5808
  %v6012 = vunpack.c.h.b16 %v5808
  %v6013 = vpack.c.b16 %v5887, %v5885
  %v6014 = vpack.c.b16 %v5888, %v5886
  %v6015 = vpack.c.b16 %v5891, %v5889
  %v6016 = vpack.c.b16 %v5892, %v5890
  %v6017 = vpack.c.b16 %v5895, %v5893
  %v6018 = vpack.c.b16 %v5896, %v5894
  %v6019 = vpack.c.b16 %v5899, %v5897
  %v6020 = vpack.c.b16 %v5900, %v5898
  %v6021 = vpack.c.b16 %v5903, %v5901
  %v6022 = vpack.c.b16 %v5904, %v5902
  %v6023 = vpack.c.b16 %v5907, %v5905
  %v6024 = vpack.c.b16 %v5908, %v5906
  %v6025 = vpack.c.b16 %v5911, %v5909
  %v6026 = vpack.c.b16 %v5912, %v5910
  %v6027 = vpack.c.b16 %v5915, %v5913
  %v6028 = vpack.c.b16 %v5916, %v5914
  %v6029 = vpack.c.b16 %v5919, %v5917
  %v6030 = vpack.c.b16 %v5920, %v5918
  %v6031 = vpack.c.b16 %v5923, %v5921
  %v6032 = vpack.c.b16 %v5924, %v5922
  %v6033 = vpack.c.b16 %v5927, %v5925
  %v6034 = vpack.c.b16 %v5928, %v5926
  %v6035 = vpack.c.b16 %v5931, %v5929
  %v6036 = vpack.c.b16 %v5932, %v5930
  %v6037 = vpack.c.b16 %v5935, %v5933
  %v6038 = vpack.c.b16 %v5936, %v5934
  %v6039 = vpack.c.b16 %v5939, %v5937
  %v6040 = vpack.c.b16 %v5940, %v5938
  %v6041 = vpack.c.b16 %v5943, %v5941
  %v6042 = vpack.c.b16 %v5944, %v5942
  %v6043 = vpack.c.b16 %v5947, %v5945
  %v6044 = vpack.c.b16 %v5948, %v5946
  %v6045 = vpack.c.b16 %v5951, %v5949
  %v6046 = vpack.c.b16 %v5952, %v5950
  %v6047 = vpack.c.b16 %v5955, %v5953
  %v6048 = vpack.c.b16 %v5956, %v5954
  %v6049 = vpack.c.b16 %v5959, %v5957
  %v6050 = vpack.c.b16 %v5960, %v5958
  %v6051 = vpack.c.b16 %v5963, %v5961
  %v6052 = vpack.c.b16 %v5964, %v5962
  %v6053 = vpack.c.b16 %v5967, %v5965
  %v6054 = vpack.c.b16 %v5968, %v5966
  %v6055 = vpack.c.b16 %v5971, %v5969
  %v6056 = vpack.c.b16 %v5972, %v5970
  %v6057 = vpack.c.b16 %v5975, %v5973
  %v6058 = vpack.c.b16 %v5976, %v5974
  %v6059 = vpack.c.b16 %v5979, %v5977
  %v6060 = vpack.c.b16 %v5980, %v5978
  %v6061 = vpack.c.b16 %v5983, %v5981
  %v6062 = vpack.c.b16 %v5984, %v5982
  %v6063 = vpack.c.b16 %v5987, %v5985
  %v6064 = vpack.c.b16 %v5988, %v5986
  %v6065 = vpack.c.b16 %v5991, %v5989
  %v6066 = vpack.c.b16 %v5992, %v5990
  %v6067 = vpack.c.b16 %v5995, %v5993
  %v6068 = vpack.c.b16 %v5996, %v5994
  %v6069 = vpack.c.b16 %v5999, %v5997
  %v6070 = vpack.c.b16 %v6000, %v5998
  %v6071 = vpack.c.b16 %v6003, %v6001
  %v6072 = vpack.c.b16 %v6004, %v6002
  %v6073 = vpack.c.b16 %v6007, %v6005
  %v6074 = vpack.c.b16 %v6008, %v6006
  %v6075 = vpack.c.b16 %v6011, %v6009
  %v6076 = vpack.c.b16 %v6012, %v6010
  %6141 = vmatprep.subr.bf16.mxu0 %v6028
  %6142 = vmatpush1.bf16.msra.mxu0 %v6027
  %6143 = vmatprep.subr.bf16.mxu0 %v6026
  %6144 = vmatpush1.bf16.msra.mxu0 %v6025
  %6145 = vmatprep.subr.bf16.mxu0 %v6024
  %6146 = vmatpush1.bf16.msra.mxu0 %v6023
  %6147 = vmatprep.subr.bf16.mxu0 %v6022
  %6148 = vmatpush1.bf16.msra.mxu0 %v6021
  %6149 = vmatprep.subr.bf16.mxu0 %v6020
  %6150 = vmatpush1.bf16.msra.mxu0 %v6019
  %6151 = vmatprep.subr.bf16.mxu0 %v6018
  %6152 = vmatpush1.bf16.msra.mxu0 %v6017
  %6153 = vmatprep.subr.bf16.mxu0 %v6016
  %6154 = vmatpush1.bf16.msra.mxu0 %v6015
  %6155 = vmatprep.subr.bf16.mxu0 %v6014
  %6156 = vmatpush1.bf16.msra.mxu0 %v6013
  %6157 = vmatprep.subr.bf16.mxu0 %v6044
  %6158 = vmatpush2.bf16.msra.mxu0 %v6043
  %6159 = vmatprep.subr.bf16.mxu0 %v6042
  %6160 = vmatpush2.bf16.msra.mxu0 %v6041
  %6161 = vmatprep.subr.bf16.mxu0 %v6040
  %6162 = vmatpush2.bf16.msra.mxu0 %v6039
  %6163 = vmatprep.subr.bf16.mxu0 %v6038
  %6164 = vmatpush2.bf16.msra.mxu0 %v6037
  %6165 = vmatprep.subr.bf16.mxu0 %v6036
  %6166 = vmatpush2.bf16.msra.mxu0 %v6035
  %6167 = vmatprep.subr.bf16.mxu0 %v6034
  %6168 = vmatpush2.bf16.msra.mxu0 %v6033
  %6169 = vmatprep.subr.bf16.mxu0 %v6032
  %6170 = vmatpush2.bf16.msra.mxu0 %v6031
  %6171 = vmatprep.subr.bf16.mxu0 %v6030
  %6172 = vmatpush2.bf16.msra.mxu0 %v6029
  %6173 = vmatprep.mubr.bf16.mxu0 %v5742
  %6174 = vmatmul.mubr.bf16.gmra.mxu0 %v5741
  %v6175 = vpop.f32.mrf.mxu0
  %v6176 = vadd.f32 %v5814, %v6175
  %v6177 = vpop.f32.mrf.mxu0
  %v6178 = vadd.f32 %v5818, %v6177
  %v6179 = vpop.f32.mrf.mxu0
  %v6180 = vpop.f32.mrf.mxu0
  %6181 = vdwg.mxu0
  %6182 = vmatprep.subr.bf16.mxu0 %v6060
  %6183 = vmatpush1.bf16.msra.mxu0 %v6059
  %6184 = vmatprep.subr.bf16.mxu0 %v6058
  %6185 = vmatpush1.bf16.msra.mxu0 %v6057
  %6186 = vmatprep.subr.bf16.mxu0 %v6056
  %6187 = vmatpush1.bf16.msra.mxu0 %v6055
  %6188 = vmatprep.subr.bf16.mxu0 %v6054
  %6189 = vmatpush1.bf16.msra.mxu0 %v6053
  %6190 = vmatprep.subr.bf16.mxu0 %v6052
  %6191 = vmatpush1.bf16.msra.mxu0 %v6051
  %6192 = vmatprep.subr.bf16.mxu0 %v6050
  %6193 = vmatpush1.bf16.msra.mxu0 %v6049
  %6194 = vmatprep.subr.bf16.mxu0 %v6048
  %6195 = vmatpush1.bf16.msra.mxu0 %v6047
  %6196 = vmatprep.subr.bf16.mxu0 %v6046
  %6197 = vmatpush1.bf16.msra.mxu0 %v6045
  %6198 = vmatprep.subr.bf16.mxu0 %v6076
  %6199 = vmatpush2.bf16.msra.mxu0 %v6075
  %6200 = vmatprep.subr.bf16.mxu0 %v6074
  %6201 = vmatpush2.bf16.msra.mxu0 %v6073
  %6202 = vmatprep.subr.bf16.mxu0 %v6072
  %6203 = vmatpush2.bf16.msra.mxu0 %v6071
  %6204 = vmatprep.subr.bf16.mxu0 %v6070
  %6205 = vmatpush2.bf16.msra.mxu0 %v6069
  %6206 = vmatprep.subr.bf16.mxu0 %v6068
  %6207 = vmatpush2.bf16.msra.mxu0 %v6067
  %6208 = vmatprep.subr.bf16.mxu0 %v6066
  %6209 = vmatpush2.bf16.msra.mxu0 %v6065
  %6210 = vmatprep.subr.bf16.mxu0 %v6064
  %6211 = vmatpush2.bf16.msra.mxu0 %v6063
  %6212 = vmatprep.subr.bf16.mxu0 %v6062
  %6213 = vmatpush2.bf16.msra.mxu0 %v6061
  %6214 = vmatprep.mubr.bf16.mxu0 %v5744
  %6215 = vmatmul.mubr.bf16.gmra.mxu0 %v5743
  %v6216 = vpop.f32.mrf.mxu0
  %v6217 = vadd.f32 %v6176, %v6216
  %v6218 = vpop.f32.mrf.mxu0
  %v6219 = vadd.f32 %v6178, %v6218
  %v6220 = vpop.f32.mrf.mxu0
  %v6221 = vpop.f32.mrf.mxu0
  %6222 = vdwg.mxu0
  %v6223 = vmax.f32 %v6217, 0.0
  %v6224 = vmax.f32 %v6219, 0.0
  %v6225 = vpack.c.bf16 %v6223, %v6223
  %v6226 = vpack.c.bf16 %v6224, %v6224
  %v6227 = vld [vmem:[%s5] sm:$0xf]
  %v6228 = vld [vmem:[%s5 + $0x4] sm:$0xf]
  %v6229 = vld [vmem:[%s5 + $0x8] sm:$0xf]
  %v6230 = vld [vmem:[%s5 + $0xc] sm:$0xf]
  %v6231 = vld [vmem:[%s5 + $0x10] sm:$0xf]
  %v6232 = vld [vmem:[%s5 + $0x14] sm:$0xf]
  %v6233 = vld [vmem:[%s5 + $0x18] sm:$0xf]
  %v6234 = vld [vmem:[%s5 + $0x1c] sm:$0xf]
  %v6235 = vld [vmem:[%s5 + $0x20] sm:$0xf]
  %v6236 = vld [vmem:[%s5 + $0x24] sm:$0xf]
  %v6237 = vld [vmem:[%s5 + $0x28] sm:$0xf]
  %v6238 = vld [vmem:[%s5 + $0x2c] sm:$0xf]
  %v6239 = vld [vmem:[%s5 + $0x30] sm:$0xf]
  %v6240 = vld [vmem:[%s5 + $0x34] sm:$0xf]
  %v6241 = vld [vmem:[%s5 + $0x38] sm:$0xf]
  %v6242 = vld [vmem:[%s5 + $0x3c] sm:$0xf]
  %v6243 = vld [vmem:[%s5 + $0x40] sm:$0xf]
  %v6244 = vld [vmem:[%s5 + $0x44] sm:$0xf]
  %v6245 = vld [vmem:[%s5 + $0x48] sm:$0xf]
  %v6246 = vld [vmem:[%s5 + $0x4c] sm:$0xf]
  %v6247 = vld [vmem:[%s5 + $0x50] sm:$0xf]
  %v6248 = vld [vmem:[%s5 + $0x54] sm:$0xf]
  %v6249 = vld [vmem:[%s5 + $0x58] sm:$0xf]
  %v6250 = vld [vmem:[%s5 + $0x5c] sm:$0xf]
  %v6251 = vld [vmem:[%s5 + $0x60] sm:$0xf]
  %v6252 = vld [vmem:[%s5 + $0x64] sm:$0xf]
  %v6253 = vld [vmem:[%s5 + $0x68] sm:$0xf]
  %v6254 = vld [vmem:[%s5 + $0x6c] sm:$0xf]
  %v6255 = vld [vmem:[%s5 + $0x70] sm:$0xf]
  %v6256 = vld [vmem:[%s5 + $0x74] sm:$0xf]
  %v6257 = vld [vmem:[%s5 + $0x78] sm:$0xf]
  %v6258 = vld [vmem:[%s5 + $0x7c] sm:$0xf]
  %v6259 = vld [vmem:[%s6] sm:$0x1]
  %v6261 = vlaneseq
  %v6262 = vshrl.u32 %v6261, 7
  %v6263 = vsub.s32 0, %v6262
  %v6264 = vrot.slane %v6259, %v6263
  %v6298 = vunpack.c.l.b16 %v6227
  %v6299 = vunpack.c.l.b16 %v6228
  %v6300 = vunpack.c.l.b16 %v6229
  %v6301 = vunpack.c.l.b16 %v6230
  %v6302 = vunpack.c.l.b16 %v6231
  %v6303 = vunpack.c.l.b16 %v6232
  %v6304 = vunpack.c.l.b16 %v6233
  %v6305 = vunpack.c.l.b16 %v6234
  %v6306 = vunpack.c.l.b16 %v6235
  %v6307 = vunpack.c.l.b16 %v6236
  %v6308 = vunpack.c.l.b16 %v6237
  %v6309 = vunpack.c.l.b16 %v6238
  %v6310 = vunpack.c.l.b16 %v6239
  %v6311 = vunpack.c.l.b16 %v6240
  %v6312 = vunpack.c.l.b16 %v6241
  %v6313 = vunpack.c.l.b16 %v6242
  %v6314 = vunpack.c.l.b16 %v6243
  %v6315 = vunpack.c.l.b16 %v6244
  %v6316 = vunpack.c.l.b16 %v6245
  %v6317 = vunpack.c.l.b16 %v6246
  %v6318 = vunpack.c.l.b16 %v6247
  %v6319 = vunpack.c.l.b16 %v6248
  %v6320 = vunpack.c.l.b16 %v6249
  %v6321 = vunpack.c.l.b16 %v6250
  %v6322 = vunpack.c.l.b16 %v6251
  %v6323 = vunpack.c.l.b16 %v6252
  %v6324 = vunpack.c.l.b16 %v6253
  %v6325 = vunpack.c.l.b16 %v6254
  %v6326 = vunpack.c.l.b16 %v6255
  %v6327 = vunpack.c.l.b16 %v6256
  %v6328 = vunpack.c.l.b16 %v6257
  %v6329 = vunpack.c.l.b16 %v6258
  %v6330 = vpack.c.b16 %v6299, %v6298
  %v6331 = vpack.c.b16 %v6301, %v6300
  %v6332 = vpack.c.b16 %v6303, %v6302
  %v6333 = vpack.c.b16 %v6305, %v6304
  %v6334 = vpack.c.b16 %v6307, %v6306
  %v6335 = vpack.c.b16 %v6309, %v6308
  %v6336 = vpack.c.b16 %v6311, %v6310
  %v6337 = vpack.c.b16 %v6313, %v6312
  %v6338 = vpack.c.b16 %v6315, %v6314
  %v6339 = vpack.c.b16 %v6317, %v6316
  %v6340 = vpack.c.b16 %v6319, %v6318
  %v6341 = vpack.c.b16 %v6321, %v6320
  %v6342 = vpack.c.b16 %v6323, %v6322
  %v6343 = vpack.c.b16 %v6325, %v6324
  %v6344 = vpack.c.b16 %v6327, %v6326
  %v6345 = vpack.c.b16 %v6329, %v6328
  %6362 = vmatprep.subr.bf16.mxu0 0
  %6363 = vmatpush1.bf16.msra.mxu0 %v6337
  %6364 = vmatprep.subr.bf16.mxu0 0
  %6365 = vmatpush1.bf16.msra.mxu0 %v6336
  %6366 = vmatprep.subr.bf16.mxu0 0
  %6367 = vmatpush1.bf16.msra.mxu0 %v6335
  %6368 = vmatprep.subr.bf16.mxu0 0
  %6369 = vmatpush1.bf16.msra.mxu0 %v6334
  %6370 = vmatprep.subr.bf16.mxu0 0
  %6371 = vmatpush1.bf16.msra.mxu0 %v6333
  %6372 = vmatprep.subr.bf16.mxu0 0
  %6373 = vmatpush1.bf16.msra.mxu0 %v6332
  %6374 = vmatprep.subr.bf16.mxu0 0
  %6375 = vmatpush1.bf16.msra.mxu0 %v6331
  %6376 = vmatprep.subr.bf16.mxu0 0
  %6377 = vmatpush1.bf16.msra.mxu0 %v6330
  %6378 = vmatprep.subr.bf16.mxu0 0
  %6379 = vmatpush2.bf16.msra.mxu0 %v6345
  %6380 = vmatprep.subr.bf16.mxu0 0
  %6381 = vmatpush2.bf16.msra.mxu0 %v6344
  %6382 = vmatprep.subr.bf16.mxu0 0
  %6383 = vmatpush2.bf16.msra.mxu0 %v6343
  %6384 = vmatprep.subr.bf16.mxu0 0
  %6385 = vmatpush2.bf16.msra.mxu0 %v6342
  %6386 = vmatprep.subr.bf16.mxu0 0
  %6387 = vmatpush2.bf16.msra.mxu0 %v6341
  %6388 = vmatprep.subr.bf16.mxu0 0
  %6389 = vmatpush2.bf16.msra.mxu0 %v6340
  %6390 = vmatprep.subr.bf16.mxu0 0
  %6391 = vmatpush2.bf16.msra.mxu0 %v6339
  %6392 = vmatprep.subr.bf16.mxu0 0
  %6393 = vmatpush2.bf16.msra.mxu0 %v6338
  %6394 = vmatprep.mubr.bf16.mxu0 %v6226
  %6395 = vmatmul.mubr.bf16.gmra.mxu0 %v6225
  %v6396 = vpop.f32.mrf.mxu0
  %v6397 = vadd.f32 %v6264, %v6396
  %v6398 = vpop.f32.mrf.mxu0
  %v6399 = vpop.f32.mrf.mxu0
  %v6400 = vpop.f32.mrf.mxu0
  %6401 = vdwg.mxu0
  %6402 = vst [vmem:[%s7] sm:$0xff] %v6397
  // Predicated region
  $region30: #{mlp_forward.1} parent=0 // pred_check
    _
  $region31: #{mlp_forward.1} parent=0 // pred_check_branch
    %6404 = sbr.rel (0) target = $region33
  $region32: #{mlp_forward.1} parent=0 // pred_region
    _
  $region33: #{mlp_forward.1} parent=0 // pred_fallthru
    _
  // Predicated region
  $region34: #{mlp_forward.1} parent=0 // pred_check
    _
  $region35: #{mlp_forward.1} parent=0 // pred_check_branch
    %6406 = sbr.rel (0) target = $region37
  $region36: #{mlp_forward.1} parent=0 // pred_region
    _
  $region37: #{mlp_forward.1} parent=0 // pred_fallthru
    _

</llo_original>
